<compile_context>
chip_gen: v7x
topology: tpu7x:2x2x1
jax: 0.10.0
libtpu: 0.0.40
codegen_flags: <defaults>
</compile_context>

<pallas_src>
import math

import jax
import jax.numpy as jnp
from jax import lax
from jax.experimental import pallas as pl
from jax.experimental.pallas import tpu as pltpu


# ----------------------------------------------------------------------------
# generation-aware VMEM budgeting
# ----------------------------------------------------------------------------
def _pad8(v):
    return -(-v // 8) * 8


def _pad128(v):
    return -(-v // 128) * 128


def _tpu_vmem_caps():
    """Returns (per-step block budget, scoped-VMEM limit) for the running chip."""
    cap = 64 << 20                       # conservative fallback (v7x-sized VMEM)
    try:
        info = pltpu.get_tpu_info()
        cap = int(getattr(info, "vmem_capacity_bytes", cap))
    except Exception:
        pass
    budget = max(8 << 20, min(cap // 4, 24 << 20))   # ~16 MiB v7x, ~24 MiB v5e/v6e
    limit = int(min(cap * 3 // 4, 96 << 20))         # scoped-VMEM limit for Mosaic
    return budget, limit


def _pick_tile_h(N, H, est_fn, budget):
    """Largest divisor of H whose VMEM estimate fits the budget, preferring enough
    total grid steps for pipelining and two-TensorCore (v7x) occupancy."""
    target_steps = 4 if N == 1 else 2
    divs = [d for d in range(1, H + 1) if H % d == 0]
    fit = [d for d in divs if est_fn(d) <= budget] or [1]
    for ok in (lambda d: N * (H // d) >= target_steps,
               lambda d: (H // d) >= 2,
               lambda d: True):
        cands = [d for d in fit if ok(d)]
        if cands:
            return max(cands)
    return 1


# ----------------------------------------------------------------------------
# Kernel 1 (use_conv=False): nearest-neighbor 2x upsample, lane-dense stores
#   output declared as (N, H, 2, W, 2*C); contiguous reshape outside is free.
# ----------------------------------------------------------------------------
def _upsample2x_kernel(x_ref, o_ref):
    # x_ref: (1, TH, W, C)   o_ref: (1, TH, 2, W, 2*C)
    _, TH, W, C = x_ref.shape
    v = x_ref[...]
    vv = jnp.concatenate([v, v], axis=-1).reshape(1, TH, 1, W, 2 * C)
    o_ref[:, :, 0:1, :, :] = vv
    o_ref[:, :, 1:2, :, :] = vv


def upsample_nearest_2x(x_nhwc):
    N, H, W, C = x_nhwc.shape
    isz = jnp.dtype(x_nhwc.dtype).itemsize
    budget, vmem_limit = _tpu_vmem_caps()

    def est(th):
        return (2 * th * W * C * isz                               # input (x2 bufs)
                + 2 * th * 2 * _pad8(W) * _pad128(2 * C) * isz     # output (x2, padded)
                + 2 * th * W * 2 * C * isz)                        # concat temp

    TH = _pick_tile_h(N, H, est, budget)
    nt = H // TH

    out5 = pl.pallas_call(
        _upsample2x_kernel,
        out_shape=jax.ShapeDtypeStruct((N, H, 2, W, 2 * C), x_nhwc.dtype),
        grid_spec=pltpu.PrefetchScalarGridSpec(
            num_scalar_prefetch=0,
            grid=(N, nt),
            in_specs=[pl.BlockSpec((1, TH, W, C), lambda n, i: (n, i, 0, 0))],
            out_specs=pl.BlockSpec((1, TH, 2, W, 2 * C),
                                   lambda n, i: (n, i, 0, 0, 0)),
        ),
        compiler_params=pltpu.CompilerParams(
            dimension_semantics=("parallel", "parallel"),
            vmem_limit_bytes=vmem_limit),
    )(x_nhwc)
    return out5.reshape(N, 2 * H, 2 * W, C)   # contiguous reshape: free


# ----------------------------------------------------------------------------
# Kernel 2 (use_conv=True): fused nearest-2x upsample + zero-pad + 3x3 conv via the
# sub-pixel decomposition:
#   out[2y+a, 2x+b] = bias + sum_{r,c in {0,1}} xp[y+a+r, x+b+c] @ W_eff[a,b,r,c]
# with the four (r,c) taps K-packed into a single (4*Cin, Cout) matmul per (a,b).
# ----------------------------------------------------------------------------
def _fused_up_conv_kernel(x_ref, xt_ref, xb_ref, w_ref, b_ref, o_ref, xp_ref):
    # x_ref : (1, TH, W, Cin)        main input tile
    # xt_ref: (1, 1, W, Cin)         row above the tile (halo; used when i > 0)
    # xb_ref: (1, 1, W, Cin)         row below the tile (halo; used when i < nt-1)
    # w_ref : (4, 4*Cin, Cout)       K-packed sub-pixel taps, index a*2+b, K=(r,c,ci)
    # b_ref : (1, Cout)              f32 bias
    # o_ref : (1, TH, 2, W, 2*Cout)  lane-dense sub-pixel output slab
    # xp_ref: (TH+2, W+2, Cin)       zero-padded staging tile (dtype follows x)
    i = pl.program_id(1)
    nt = pl.num_programs(1)
    _, TH, W, Cin = x_ref.shape
    Cout = b_ref.shape[1]
    dt = xp_ref.dtype

    # ---- assemble the zero-padded tile in VMEM (no jnp.pad / extra HBM pass) ----
    zcol = jnp.zeros((TH + 2, 1, Cin), dt)
    xp_ref[:, 0:1, :] = zcol                     # left/right pad (covers corners)
    xp_ref[:, W + 1:W + 2, :] = zcol
    xp_ref[1:TH + 1, 1:W + 1, :] = x_ref[0]      # interior

    @pl.when(i == 0)                             # top boundary tile: zero pad
    def _():
        xp_ref[0:1, 1:W + 1, :] = jnp.zeros((1, W, Cin), dt)

    @pl.when(i > 0)                              # interior tile: top halo row
    def _():
        xp_ref[0:1, 1:W + 1, :] = xt_ref[0]

    @pl.when(i == nt - 1)                        # bottom boundary tile: zero pad
    def _():
        xp_ref[TH + 1:TH + 2, 1:W + 1, :] = jnp.zeros((1, W, Cin), dt)

    @pl.when(i < nt - 1)                         # interior tile: bottom halo row
    def _():
        xp_ref[TH + 1:TH + 2, 1:W + 1, :] = xb_ref[0]

    # ---- 4 sub-pixel outputs, each a single K=4*Cin matmul (f32 accumulation) ----
    bias = jnp.broadcast_to(b_ref[0:1, :].astype(jnp.float32), (TH * W, Cout))
    for a in range(2):
        for b in range(2):
            # K-pack the four shifted taps right before use (liveness ~1 temp).
            cat = jnp.concatenate(
                [xp_ref[a + r:a + r + TH, b + c:b + c + W, :]
                 for r in range(2) for c in range(2)], axis=-1)
            acc = bias + jnp.dot(cat.reshape(TH * W, 4 * Cin), w_ref[a * 2 + b],
                                 preferred_element_type=jnp.float32)
            o_ref[:, :, a:a + 1, :, b * Cout:(b + 1) * Cout] = (
                acc.reshape(1, TH, 1, W, Cout).astype(o_ref.dtype))


def upsample2x_conv3x3(x_nhwc, w_hwio, bias):
    N, H, W, Cin = x_nhwc.shape
    Cout = w_hwio.shape[-1]
    cdt = x_nhwc.dtype                     # MXU input dtype follows the activations
    isz = jnp.dtype(cdt).itemsize
    budget, vmem_limit = _tpu_vmem_caps()

    def est(th):
        return (2 * th * W * Cin * isz                              # input tile x2
                + 2 * 2 * W * Cin * isz                             # halo rows x2
                + 2 * 16 * Cin * Cout * isz                         # packed taps x2
                + 2 * _pad128(Cout) * 4                             # bias x2
                + 2 * th * 2 * _pad8(W) * _pad128(2 * Cout) * isz   # output block x2
                + (th + 2) * (W + 2) * Cin * isz                    # xp staging
                + 2 * th * W * 4 * Cin * isz                        # live K-pack temps
                + 2 * th * W * Cout * 4)                            # live f32 accums

    TH = _pick_tile_h(N, H, est, budget)
    nt = H // TH

    # Pre-combine the 3x3 taps into the 4 effective 2x2-conv weight sets.
    # sel[a, r, ky] = 1 iff kernel row ky collapses onto input-row offset r for
    # output sub-row a under nearest-neighbor replication; same matrix for columns.
    sel = jnp.array([[[1.0, 0.0, 0.0], [0.0, 1.0, 1.0]],
                     [[1.0, 1.0, 0.0], [0.0, 0.0, 1.0]]], jnp.float32)
    w_eff = jnp.einsum('arp,bcq,pqio->abrcio', sel, sel,
                       w_hwio.astype(jnp.float32))          # (2,2,2,2,Cin,Cout)
    # K-pack: dim0 = a*2+b, dim1 = (r,c,cin) — matches the in-kernel concat order.
    w_pack = w_eff.reshape(4, 4 * Cin, Cout).astype(cdt)
    b2 = bias.reshape(1, Cout).astype(jnp.float32)

    out5 = pl.pallas_call(
        _fused_up_conv_kernel,
        out_shape=jax.ShapeDtypeStruct((N, H, 2, W, 2 * Cout), cdt),
        grid_spec=pltpu.PrefetchScalarGridSpec(
            num_scalar_prefetch=0,
            grid=(N, nt),
            in_specs=[
                pl.BlockSpec((1, TH, W, Cin), lambda n, i: (n, i, 0, 0)),
                pl.BlockSpec((1, 1, W, Cin),
                             lambda n, i: (n, jnp.maximum(i * TH - 1, 0), 0, 0)),
                pl.BlockSpec((1, 1, W, Cin),
                             lambda n, i: (n, jnp.minimum((i + 1) * TH, H - 1), 0, 0)),
                pl.BlockSpec((4, 4 * Cin, Cout), lambda n, i: (0, 0, 0)),
                pl.BlockSpec((1, Cout), lambda n, i: (0, 0)),
            ],
            out_specs=pl.BlockSpec((1, TH, 2, W, 2 * Cout),
                                   lambda n, i: (n, i, 0, 0, 0)),
            scratch_shapes=[pltpu.VMEM((TH + 2, W + 2, Cin), cdt)],
        ),
        compiler_params=pltpu.CompilerParams(
            dimension_semantics=("parallel", "parallel"),
            vmem_limit_bytes=vmem_limit),
    )(x_nhwc, x_nhwc, x_nhwc, w_pack, b2)
    return out5.reshape(N, 2 * H, 2 * W, Cout)   # contiguous reshape: free


# ----------------------------------------------------------------------------
# Module-equivalent wrapper (NCHW in / NCHW out, like nn.Conv2d)
# ----------------------------------------------------------------------------
class Upsample:
    """JAX/Pallas equivalent of ddp2.utils.Upsample."""

    def __init__(self, channels, use_conv, key=None):
        self.use_conv = use_conv
        if use_conv:
            if key is None:
                key = jax.random.PRNGKey(0)
            kw, kb = jax.random.split(key)
            fan_in = channels * 3 * 3
            bound = 1.0 / math.sqrt(fan_in)
            w_oihw = jax.random.uniform(
                kw, (channels, channels, 3, 3), jnp.float32, -bound, bound)
            self.w_hwio = jnp.transpose(w_oihw, (2, 3, 1, 0))   # (3,3,Cin,Cout)
            self.b = jax.random.uniform(
                kb, (channels,), jnp.float32, -bound, bound)

    def __call__(self, x_nchw):
        # TODO(synk): keep the surrounding model NHWC to drop these two transposes.
        x = jnp.transpose(x_nchw, (0, 2, 3, 1))          # NCHW -> NHWC (glue)
        if self.use_conv:
            y = upsample2x_conv3x3(x, self.w_hwio, self.b)
        else:
            y = upsample_nearest_2x(x)
        return jnp.transpose(y, (0, 3, 1, 2))            # NHWC -> NCHW (glue)


# ----------------------------------------------------------------------------
# Pure-JAX reference (for correctness check)
# ----------------------------------------------------------------------------
def _reference(x_nchw, module):
    x = jnp.repeat(jnp.repeat(x_nchw, 2, axis=2), 2, axis=3)   # nearest 2x
    if module.use_conv:
        x_nhwc = jnp.transpose(x, (0, 2, 3, 1))
        y = lax.conv_general_dilated(
            x_nhwc, module.w_hwio, window_strides=(1, 1), padding="SAME",
            dimension_numbers=("NHWC", "HWIO", "NHWC"))
        y = y + module.b[None, None, None, :]
        x = jnp.transpose(y, (0, 3, 1, 2))
    return x


if __name__ == "__main__":
    key = jax.random.PRNGKey(0)
    kx, kp, kx2 = jax.random.split(key, 3)

    # conv path
    N, C, H, W = 2, 4, 16, 16
    x = jax.random.normal(kx, (N, C, H, W), jnp.float32)
    mod = Upsample(channels=C, use_conv=True, key=kp)
    out = jax.block_until_ready(mod(x))
    ref = _reference(x, mod)
    assert out.shape == (N, C, 2 * H, 2 * W), out.shape
    assert jnp.allclose(out, ref, atol=1e-4, rtol=1e-4), \
        float(jnp.max(jnp.abs(out - ref)))

    # conv path with N=1 and a different spatial shape (multi-tile grid: exercises
    # the halo rows and the boundary zero-pad gating)
    x2 = jax.random.normal(kx2, (1, C, 8, 16), jnp.float32)
    out2 = jax.block_until_ready(mod(x2))
    ref2 = _reference(x2, mod)
    assert jnp.allclose(out2, ref2, atol=1e-4, rtol=1e-4), \
        float(jnp.max(jnp.abs(out2 - ref2)))

    # use_conv=False path
    mod_nc = Upsample(channels=C, use_conv=False)
    out_nc = jax.block_until_ready(mod_nc(x))
    assert jnp.allclose(out_nc, _reference(x, mod_nc))

    print("KERNEL_OK")
</pallas_src>

<mosaic_0001>
module attributes {stable_mosaic.version = 11 : i64} {
  func.func @_fused_up_conv_kernel(%arg0: i32, %arg1: i32, %arg2: memref<1x16x16x4xf32, #tpu.memory_space<vmem>>, %arg3: memref<1x1x16x4xf32, #tpu.memory_space<vmem>>, %arg4: memref<1x1x16x4xf32, #tpu.memory_space<vmem>>, %arg5: memref<4x16x4xf32, #tpu.memory_space<vmem>>, %arg6: memref<1x4xf32, #tpu.memory_space<vmem>>, %arg7: memref<1x16x2x16x8xf32, #tpu.memory_space<vmem>>, %arg8: memref<18x18x4xf32, #tpu.memory_space<vmem>>) attributes {dimension_semantics = [#tpu.dimension_semantics<parallel>, #tpu.dimension_semantics<parallel>], iteration_bounds = array<i64: 2, 1>, scalar_prefetch = 0 : i64, scratch_operands = 1 : i64, tpu.core_type = #tpu.core_type<tc>, window_params = [{transform_indices = @transform_0, window_bounds = array<i64: 1, 16, 16, 4>}, {transform_indices = @transform_1, window_bounds = array<i64: 1, 1, 16, 4>}, {transform_indices = @transform_2, window_bounds = array<i64: 1, 1, 16, 4>}, {pipeline_mode = #tpu.pipeline_mode<synchronous>, transform_indices = @transform_3, window_bounds = array<i64: 4, 16, 4>}, {pipeline_mode = #tpu.pipeline_mode<synchronous>, transform_indices = @transform_4, window_bounds = array<i64: 1, 4>}, {transform_indices = @transform_5, window_bounds = array<i64: 1, 16, 2, 16, 8>}]} {
    %cst = arith.constant 0.000000e+00 : f32
    %0 = vector.broadcast %cst : f32 to vector<18x1x4xf32>
    %c0 = arith.constant 0 : index
    %c0_0 = arith.constant 0 : index
    %c0_1 = arith.constant 0 : index
    %1 = vector.load %arg8[%c0, %c0_0, %c0_1] : memref<18x18x4xf32, #tpu.memory_space<vmem>>, vector<18x1x4xf32>
    tpu.vector_store %arg8[%c0, %c0_0, %c0_1], %0 {strides = array<i32>} : memref<18x18x4xf32, #tpu.memory_space<vmem>>, vector<18x1x4xf32>,
    %c0_2 = arith.constant 0 : index
    %c17 = arith.constant 17 : index
    %c0_3 = arith.constant 0 : index
    %2 = vector.load %arg8[%c0_2, %c17, %c0_3] : memref<18x18x4xf32, #tpu.memory_space<vmem>>, vector<18x1x4xf32>
    tpu.vector_store %arg8[%c0_2, %c17, %c0_3], %0 {strides = array<i32>} : memref<18x18x4xf32, #tpu.memory_space<vmem>>, vector<18x1x4xf32>,
    %c0_4 = arith.constant 0 : index
    %c0_5 = arith.constant 0 : index
    %c0_6 = arith.constant 0 : index
    %c0_7 = arith.constant 0 : index
    %3 = vector.load %arg2[%c0_4, %c0_5, %c0_6, %c0_7] : memref<1x16x16x4xf32, #tpu.memory_space<vmem>>, vector<1x16x16x4xf32>
    %4 = vector.shape_cast %3 : vector<1x16x16x4xf32> to vector<16x16x4xf32>
    %c1 = arith.constant 1 : index
    %c1_8 = arith.constant 1 : index
    %c0_9 = arith.constant 0 : index
    %5 = vector.load %arg8[%c1, %c1_8, %c0_9] : memref<18x18x4xf32, #tpu.memory_space<vmem>>, vector<16x16x4xf32>
    tpu.vector_store %arg8[%c1, %c1_8, %c0_9], %4 {strides = array<i32>} : memref<18x18x4xf32, #tpu.memory_space<vmem>>, vector<16x16x4xf32>,
    %c0_i32 = arith.constant 0 : i32
    %6 = arith.cmpi eq, %arg1, %c0_i32 : i32
    %7 = arith.extui %6 : i1 to i32
    %c0_i32_10 = arith.constant 0 : i32
    %8 = arith.cmpi ne, %7, %c0_i32_10 : i32
    scf.if %8 {
      %cst_100 = arith.constant 0.000000e+00 : f32
      %69 = vector.broadcast %cst_100 : f32 to vector<1x16x4xf32>
      %c0_101 = arith.constant 0 : index
      %c1_102 = arith.constant 1 : index
      %c0_103 = arith.constant 0 : index
      %70 = vector.load %arg8[%c0_101, %c1_102, %c0_103] : memref<18x18x4xf32, #tpu.memory_space<vmem>>, vector<1x16x4xf32>
      tpu.vector_store %arg8[%c0_101, %c1_102, %c0_103], %69 {strides = array<i32>} : memref<18x18x4xf32, #tpu.memory_space<vmem>>, vector<1x16x4xf32>,
    } else {
    }
    %c0_i32_11 = arith.constant 0 : i32
    %9 = arith.cmpi sgt, %arg1, %c0_i32_11 : i32
    %10 = arith.extui %9 : i1 to i32
    %c0_i32_12 = arith.constant 0 : i32
    %11 = arith.cmpi ne, %10, %c0_i32_12 : i32
    scf.if %11 {
      %c0_100 = arith.constant 0 : index
      %c0_101 = arith.constant 0 : index
      %c0_102 = arith.constant 0 : index
      %c0_103 = arith.constant 0 : index
      %69 = vector.load %arg3[%c0_100, %c0_101, %c0_102, %c0_103] : memref<1x1x16x4xf32, #tpu.memory_space<vmem>>, vector<1x1x16x4xf32>
      %70 = vector.shape_cast %69 : vector<1x1x16x4xf32> to vector<1x16x4xf32>
      %c0_104 = arith.constant 0 : index
      %c1_105 = arith.constant 1 : index
      %c0_106 = arith.constant 0 : index
      %71 = vector.load %arg8[%c0_104, %c1_105, %c0_106] : memref<18x18x4xf32, #tpu.memory_space<vmem>>, vector<1x16x4xf32>
      tpu.vector_store %arg8[%c0_104, %c1_105, %c0_106], %70 {strides = array<i32>} : memref<18x18x4xf32, #tpu.memory_space<vmem>>, vector<1x16x4xf32>,
    } else {
    }
    %c0_i32_13 = arith.constant 0 : i32
    %12 = arith.cmpi eq, %arg1, %c0_i32_13 : i32
    %13 = arith.extui %12 : i1 to i32
    %c0_i32_14 = arith.constant 0 : i32
    %14 = arith.cmpi ne, %13, %c0_i32_14 : i32
    scf.if %14 {
      %cst_100 = arith.constant 0.000000e+00 : f32
      %69 = vector.broadcast %cst_100 : f32 to vector<1x16x4xf32>
      %c17_101 = arith.constant 17 : index
      %c1_102 = arith.constant 1 : index
      %c0_103 = arith.constant 0 : index
      %70 = vector.load %arg8[%c17_101, %c1_102, %c0_103] : memref<18x18x4xf32, #tpu.memory_space<vmem>>, vector<1x16x4xf32>
      tpu.vector_store %arg8[%c17_101, %c1_102, %c0_103], %69 {strides = array<i32>} : memref<18x18x4xf32, #tpu.memory_space<vmem>>, vector<1x16x4xf32>,
    } else {
    }
    %c0_i32_15 = arith.constant 0 : i32
    %15 = arith.cmpi slt, %arg1, %c0_i32_15 : i32
    %16 = arith.extui %15 : i1 to i32
    %c0_i32_16 = arith.constant 0 : i32
    %17 = arith.cmpi ne, %16, %c0_i32_16 : i32
    scf.if %17 {
      %c0_100 = arith.constant 0 : index
      %c0_101 = arith.constant 0 : index
      %c0_102 = arith.constant 0 : index
      %c0_103 = arith.constant 0 : index
      %69 = vector.load %arg4[%c0_100, %c0_101, %c0_102, %c0_103] : memref<1x1x16x4xf32, #tpu.memory_space<vmem>>, vector<1x1x16x4xf32>
      %70 = vector.shape_cast %69 : vector<1x1x16x4xf32> to vector<1x16x4xf32>
      %c17_104 = arith.constant 17 : index
      %c1_105 = arith.constant 1 : index
      %c0_106 = arith.constant 0 : index
      %71 = vector.load %arg8[%c17_104, %c1_105, %c0_106] : memref<18x18x4xf32, #tpu.memory_space<vmem>>, vector<1x16x4xf32>
      tpu.vector_store %arg8[%c17_104, %c1_105, %c0_106], %70 {strides = array<i32>} : memref<18x18x4xf32, #tpu.memory_space<vmem>>, vector<1x16x4xf32>,
    } else {
    }
    %c0_17 = arith.constant 0 : index
    %c0_18 = arith.constant 0 : index
    %18 = vector.load %arg6[%c0_17, %c0_18] : memref<1x4xf32, #tpu.memory_space<vmem>>, vector<1x4xf32>
    %19 = vector.shape_cast %18 : vector<1x4xf32> to vector<1x4xf32>
    %20 = vector.broadcast %19 : vector<1x4xf32> to vector<256x4xf32>
    %c0_19 = arith.constant 0 : index
    %c0_20 = arith.constant 0 : index
    %c0_21 = arith.constant 0 : index
    %21 = vector.load %arg8[%c0_19, %c0_20, %c0_21] : memref<18x18x4xf32, #tpu.memory_space<vmem>>, vector<16x16x4xf32>
    %c0_22 = arith.constant 0 : index
    %c1_23 = arith.constant 1 : index
    %c0_24 = arith.constant 0 : index
    %22 = vector.load %arg8[%c0_22, %c1_23, %c0_24] : memref<18x18x4xf32, #tpu.memory_space<vmem>>, vector<16x16x4xf32>
    %c1_25 = arith.constant 1 : index
    %c0_26 = arith.constant 0 : index
    %c0_27 = arith.constant 0 : index
    %23 = vector.load %arg8[%c1_25, %c0_26, %c0_27] : memref<18x18x4xf32, #tpu.memory_space<vmem>>, vector<16x16x4xf32>
    %c1_28 = arith.constant 1 : index
    %c1_29 = arith.constant 1 : index
    %c0_30 = arith.constant 0 : index
    %24 = vector.load %arg8[%c1_28, %c1_29, %c0_30] : memref<18x18x4xf32, #tpu.memory_space<vmem>>, vector<16x16x4xf32>
    %25 = tpu.concatenate %21, %22, %23, %24 in 2 : vector<16x16x4xf32>, vector<16x16x4xf32>, vector<16x16x4xf32>, vector<16x16x4xf32> -> vector<16x16x16xf32>
    %26 = vector.shape_cast %25 : vector<16x16x16xf32> to vector<256x16xf32>
    %c0_31 = arith.constant 0 : index
    %c0_32 = arith.constant 0 : index
    %c0_33 = arith.constant 0 : index
    %27 = vector.load %arg5[%c0_31, %c0_32, %c0_33] : memref<4x16x4xf32, #tpu.memory_space<vmem>>, vector<1x16x4xf32>
    %28 = vector.shape_cast %27 : vector<1x16x4xf32> to vector<16x4xf32>
    %cst_34 = arith.constant dense<0.000000e+00> : vector<256x4xf32>
    %29 = tpu.matmul %26, %28, %cst_34 {dimension_numbers = #tpu.dot_dimension_numbers<[1], [0], [0], [1], [0, 0, 1, 1], [], []>} : vector<256x16xf32>, vector<16x4xf32>, vector<256x4xf32> -> vector<256x4xf32>
    %30 = arith.addf %20, %29 : vector<256x4xf32>
    %31 = vector.shape_cast %30 : vector<256x4xf32> to vector<1x16x1x16x4xf32>
    %c0_35 = arith.constant 0 : index
    %c0_36 = arith.constant 0 : index
    %c0_37 = arith.constant 0 : index
    %c0_38 = arith.constant 0 : index
    %c0_39 = arith.constant 0 : index
    %32 = vector.load %arg7[%c0_35, %c0_36, %c0_37, %c0_38, %c0_39] : memref<1x16x2x16x8xf32, #tpu.memory_space<vmem>>, vector<1x16x1x16x4xf32>
    tpu.vector_store %arg7[%c0_35, %c0_36, %c0_37, %c0_38, %c0_39], %31 {strides = array<i32>} : memref<1x16x2x16x8xf32, #tpu.memory_space<vmem>>, vector<1x16x1x16x4xf32>,
    %c0_40 = arith.constant 0 : index
    %c1_41 = arith.constant 1 : index
    %c0_42 = arith.constant 0 : index
    %33 = vector.load %arg8[%c0_40, %c1_41, %c0_42] : memref<18x18x4xf32, #tpu.memory_space<vmem>>, vector<16x16x4xf32>
    %c0_43 = arith.constant 0 : index
    %c2 = arith.constant 2 : index
    %c0_44 = arith.constant 0 : index
    %34 = vector.load %arg8[%c0_43, %c2, %c0_44] : memref<18x18x4xf32, #tpu.memory_space<vmem>>, vector<16x16x4xf32>
    %c1_45 = arith.constant 1 : index
    %c1_46 = arith.constant 1 : index
    %c0_47 = arith.constant 0 : index
    %35 = vector.load %arg8[%c1_45, %c1_46, %c0_47] : memref<18x18x4xf32, #tpu.memory_space<vmem>>, vector<16x16x4xf32>
    %c1_48 = arith.constant 1 : index
    %c2_49 = arith.constant 2 : index
    %c0_50 = arith.constant 0 : index
    %36 = vector.load %arg8[%c1_48, %c2_49, %c0_50] : memref<18x18x4xf32, #tpu.memory_space<vmem>>, vector<16x16x4xf32>
    %37 = tpu.concatenate %33, %34, %35, %36 in 2 : vector<16x16x4xf32>, vector<16x16x4xf32>, vector<16x16x4xf32>, vector<16x16x4xf32> -> vector<16x16x16xf32>
    %38 = vector.shape_cast %37 : vector<16x16x16xf32> to vector<256x16xf32>
    %c1_51 = arith.constant 1 : index
    %c0_52 = arith.constant 0 : index
    %c0_53 = arith.constant 0 : index
    %39 = vector.load %arg5[%c1_51, %c0_52, %c0_53] : memref<4x16x4xf32, #tpu.memory_space<vmem>>, vector<1x16x4xf32>
    %40 = vector.shape_cast %39 : vector<1x16x4xf32> to vector<16x4xf32>
    %cst_54 = arith.constant dense<0.000000e+00> : vector<256x4xf32>
    %41 = tpu.matmul %38, %40, %cst_54 {dimension_numbers = #tpu.dot_dimension_numbers<[1], [0], [0], [1], [0, 0, 1, 1], [], []>} : vector<256x16xf32>, vector<16x4xf32>, vector<256x4xf32> -> vector<256x4xf32>
    %42 = arith.addf %20, %41 : vector<256x4xf32>
    %43 = vector.shape_cast %42 : vector<256x4xf32> to vector<1x16x1x16x4xf32>
    %c0_55 = arith.constant 0 : index
    %c0_56 = arith.constant 0 : index
    %c0_57 = arith.constant 0 : index
    %c0_58 = arith.constant 0 : index
    %c4 = arith.constant 4 : index
    %44 = vector.load %arg7[%c0_55, %c0_56, %c0_57, %c0_58, %c4] : memref<1x16x2x16x8xf32, #tpu.memory_space<vmem>>, vector<1x16x1x16x4xf32>
    tpu.vector_store %arg7[%c0_55, %c0_56, %c0_57, %c0_58, %c4], %43 {strides = array<i32>} : memref<1x16x2x16x8xf32, #tpu.memory_space<vmem>>, vector<1x16x1x16x4xf32>,
    %c1_59 = arith.constant 1 : index
    %c0_60 = arith.constant 0 : index
    %c0_61 = arith.constant 0 : index
    %45 = vector.load %arg8[%c1_59, %c0_60, %c0_61] : memref<18x18x4xf32, #tpu.memory_space<vmem>>, vector<16x16x4xf32>
    %c1_62 = arith.constant 1 : index
    %c1_63 = arith.constant 1 : index
    %c0_64 = arith.constant 0 : index
    %46 = vector.load %arg8[%c1_62, %c1_63, %c0_64] : memref<18x18x4xf32, #tpu.memory_space<vmem>>, vector<16x16x4xf32>
    %c2_65 = arith.constant 2 : index
    %c0_66 = arith.constant 0 : index
    %c0_67 = arith.constant 0 : index
    %47 = vector.load %arg8[%c2_65, %c0_66, %c0_67] : memref<18x18x4xf32, #tpu.memory_space<vmem>>, vector<16x16x4xf32>
    %c2_68 = arith.constant 2 : index
    %c1_69 = arith.constant 1 : index
    %c0_70 = arith.constant 0 : index
    %48 = vector.load %arg8[%c2_68, %c1_69, %c0_70] : memref<18x18x4xf32, #tpu.memory_space<vmem>>, vector<16x16x4xf32>
    %49 = tpu.concatenate %45, %46, %47, %48 in 2 : vector<16x16x4xf32>, vector<16x16x4xf32>, vector<16x16x4xf32>, vector<16x16x4xf32> -> vector<16x16x16xf32>
    %50 = vector.shape_cast %49 : vector<16x16x16xf32> to vector<256x16xf32>
    %c2_71 = arith.constant 2 : index
    %c0_72 = arith.constant 0 : index
    %c0_73 = arith.constant 0 : index
    %51 = vector.load %arg5[%c2_71, %c0_72, %c0_73] : memref<4x16x4xf32, #tpu.memory_space<vmem>>, vector<1x16x4xf32>
    %52 = vector.shape_cast %51 : vector<1x16x4xf32> to vector<16x4xf32>
    %cst_74 = arith.constant dense<0.000000e+00> : vector<256x4xf32>
    %53 = tpu.matmul %50, %52, %cst_74 {dimension_numbers = #tpu.dot_dimension_numbers<[1], [0], [0], [1], [0, 0, 1, 1], [], []>} : vector<256x16xf32>, vector<16x4xf32>, vector<256x4xf32> -> vector<256x4xf32>
    %54 = arith.addf %20, %53 : vector<256x4xf32>
    %55 = vector.shape_cast %54 : vector<256x4xf32> to vector<1x16x1x16x4xf32>
    %c0_75 = arith.constant 0 : index
    %c0_76 = arith.constant 0 : index
    %c1_77 = arith.constant 1 : index
    %c0_78 = arith.constant 0 : index
    %c0_79 = arith.constant 0 : index
    %56 = vector.load %arg7[%c0_75, %c0_76, %c1_77, %c0_78, %c0_79] : memref<1x16x2x16x8xf32, #tpu.memory_space<vmem>>, vector<1x16x1x16x4xf32>
    tpu.vector_store %arg7[%c0_75, %c0_76, %c1_77, %c0_78, %c0_79], %55 {strides = array<i32>} : memref<1x16x2x16x8xf32, #tpu.memory_space<vmem>>, vector<1x16x1x16x4xf32>,
    %c1_80 = arith.constant 1 : index
    %c1_81 = arith.constant 1 : index
    %c0_82 = arith.constant 0 : index
    %57 = vector.load %arg8[%c1_80, %c1_81, %c0_82] : memref<18x18x4xf32, #tpu.memory_space<vmem>>, vector<16x16x4xf32>
    %c1_83 = arith.constant 1 : index
    %c2_84 = arith.constant 2 : index
    %c0_85 = arith.constant 0 : index
    %58 = vector.load %arg8[%c1_83, %c2_84, %c0_85] : memref<18x18x4xf32, #tpu.memory_space<vmem>>, vector<16x16x4xf32>
    %c2_86 = arith.constant 2 : index
    %c1_87 = arith.constant 1 : index
    %c0_88 = arith.constant 0 : index
    %59 = vector.load %arg8[%c2_86, %c1_87, %c0_88] : memref<18x18x4xf32, #tpu.memory_space<vmem>>, vector<16x16x4xf32>
    %c2_89 = arith.constant 2 : index
    %c2_90 = arith.constant 2 : index
    %c0_91 = arith.constant 0 : index
    %60 = vector.load %arg8[%c2_89, %c2_90, %c0_91] : memref<18x18x4xf32, #tpu.memory_space<vmem>>, vector<16x16x4xf32>
    %61 = tpu.concatenate %57, %58, %59, %60 in 2 : vector<16x16x4xf32>, vector<16x16x4xf32>, vector<16x16x4xf32>, vector<16x16x4xf32> -> vector<16x16x16xf32>
    %62 = vector.shape_cast %61 : vector<16x16x16xf32> to vector<256x16xf32>
    %c3 = arith.constant 3 : index
    %c0_92 = arith.constant 0 : index
    %c0_93 = arith.constant 0 : index
    %63 = vector.load %arg5[%c3, %c0_92, %c0_93] : memref<4x16x4xf32, #tpu.memory_space<vmem>>, vector<1x16x4xf32>
    %64 = vector.shape_cast %63 : vector<1x16x4xf32> to vector<16x4xf32>
    %cst_94 = arith.constant dense<0.000000e+00> : vector<256x4xf32>
    %65 = tpu.matmul %62, %64, %cst_94 {dimension_numbers = #tpu.dot_dimension_numbers<[1], [0], [0], [1], [0, 0, 1, 1], [], []>} : vector<256x16xf32>, vector<16x4xf32>, vector<256x4xf32> -> vector<256x4xf32>
    %66 = arith.addf %20, %65 : vector<256x4xf32>
    %67 = vector.shape_cast %66 : vector<256x4xf32> to vector<1x16x1x16x4xf32>
    %c0_95 = arith.constant 0 : index
    %c0_96 = arith.constant 0 : index
    %c1_97 = arith.constant 1 : index
    %c0_98 = arith.constant 0 : index
    %c4_99 = arith.constant 4 : index
    %68 = vector.load %arg7[%c0_95, %c0_96, %c1_97, %c0_98, %c4_99] : memref<1x16x2x16x8xf32, #tpu.memory_space<vmem>>, vector<1x16x1x16x4xf32>
    tpu.vector_store %arg7[%c0_95, %c0_96, %c1_97, %c0_98, %c4_99], %67 {strides = array<i32>} : memref<1x16x2x16x8xf32, #tpu.memory_space<vmem>>, vector<1x16x1x16x4xf32>,
    return
  }
  func.func @transform_0(%arg0: i32, %arg1: i32) -> (i32, i32, i32, i32) {
    %c0_i32 = arith.constant 0 : i32
    %c0_i32_0 = arith.constant 0 : i32
    %c0_i32_1 = arith.constant 0 : i32
    return %arg0, %arg1, %c0_i32, %c0_i32_0 : i32, i32, i32, i32
  }
  func.func @transform_1(%arg0: i32, %arg1: i32) -> (i32, i32, i32, i32) {
    %c16_i32 = arith.constant 16 : i32
    %0 = arith.muli %arg1, %c16_i32 : i32
    %c1_i32 = arith.constant 1 : i32
    %1 = arith.subi %0, %c1_i32 : i32
    %c0_i32 = arith.constant 0 : i32
    %2 = arith.maxsi %1, %c0_i32 : i32
    %c0_i32_0 = arith.constant 0 : i32
    %c0_i32_1 = arith.constant 0 : i32
    %c0_i32_2 = arith.constant 0 : i32
    return %arg0, %2, %c0_i32_0, %c0_i32_1 : i32, i32, i32, i32
  }
  func.func @transform_2(%arg0: i32, %arg1: i32) -> (i32, i32, i32, i32) {
    %c1_i32 = arith.constant 1 : i32
    %0 = arith.addi %arg1, %c1_i32 : i32
    %c16_i32 = arith.constant 16 : i32
    %1 = arith.muli %0, %c16_i32 : i32
    %c15_i32 = arith.constant 15 : i32
    %2 = arith.minsi %1, %c15_i32 : i32
    %c0_i32 = arith.constant 0 : i32
    %c0_i32_0 = arith.constant 0 : i32
    %c0_i32_1 = arith.constant 0 : i32
    return %arg0, %2, %c0_i32, %c0_i32_0 : i32, i32, i32, i32
  }
  func.func @transform_3(%arg0: i32, %arg1: i32) -> (i32, i32, i32) {
    %c0_i32 = arith.constant 0 : i32
    %c0_i32_0 = arith.constant 0 : i32
    %c0_i32_1 = arith.constant 0 : i32
    %c0_i32_2 = arith.constant 0 : i32
    return %c0_i32, %c0_i32_0, %c0_i32_1 : i32, i32, i32
  }
  func.func @transform_4(%arg0: i32, %arg1: i32) -> (i32, i32) {
    %c0_i32 = arith.constant 0 : i32
    %c0_i32_0 = arith.constant 0 : i32
    %c0_i32_1 = arith.constant 0 : i32
    return %c0_i32, %c0_i32_0 : i32, i32
  }
  func.func @transform_5(%arg0: i32, %arg1: i32) -> (i32, i32, i32, i32, i32) {
    %c0_i32 = arith.constant 0 : i32
    %c0_i32_0 = arith.constant 0 : i32
    %c0_i32_1 = arith.constant 0 : i32
    %c0_i32_2 = arith.constant 0 : i32
    return %arg0, %arg1, %c0_i32, %c0_i32_0, %c0_i32_1 : i32, i32, i32, i32, i32
  }
}

</mosaic_0001>

<llo_original>
// kernel: tpu_custom_call.1
$region0: #{tpu_custom_call.1}
  #allocation0 [shape = 'u32[]', space=smem, size = 0x4, offset = 0x4, fixed_abs, tag = 'smem constant byte address 0x4 - core index']
  #allocation1 [shape = 'u32[144,128]{1,0:T(1,128)}', space=vmem, size = 0x12000, scoped, tag = 'internal scratch']
  #allocation2 [shape = 'f32[18,18,4]{2,1,0:T(8,128)}', space=vmem, size = 0x36000, scoped, tag = 'scratch operand']
  %s0 = inlined_call_operand.vmem [shape: f32[2,16,16,4], index: 0, kind: input, shape index: {}]
  %s1 = inlined_call_operand.vmem [shape: f32[2,16,16,4], index: 1, kind: input, shape index: {}]
  %s2 = inlined_call_operand.vmem [shape: f32[2,16,16,4], index: 2, kind: input, shape index: {}]
  %s3 = inlined_call_operand.vmem [shape: f32[4,16,4], index: 3, kind: input, shape index: {}]
  %s4 = inlined_call_operand.vmem [shape: f32[1,4], index: 4, kind: input, shape index: {}]
  %s5 = inlined_call_operand.vmem [shape: f32[2,16,2,16,8], index: 5, kind: output, shape index: {}]
  %s6 = sld [smem:[#allocation0]]
  $region69: #{tpu_custom_call.1} parent=0
    _
  %s8 = ssub.s32 1, %s6
  %s9 = scalar_select 0, %s8, %s6
  loop: start=0, step=1, limit=4
  $region2: #{tpu_custom_call.1} parent=0 // loop_pre_header
    _
  $region3: #{tpu_custom_call.1} parent=0 // loop_header
    %s11 = sphi 0, %s15
    %p12 = scmp.ge.s32.totalorder %s11, 4
    %s18 = sphi 0, %s30
    %s19 = sphi 0, %s26
    %s20 = sphi 0, %s18
    %s21 = sphi 0, %s19
    %s22 = sphi 0, %s20
    %s23 = sphi 0, %s21
    %s35 = sphi 0, %s37
    %s38 = sphi 0, %s35
    %s39 = sphi 0, %s38
    %s55 = sphi 0, %s39
    %s71 = sphi 0, %s73
    %s74 = sphi 0, %s71
    %s75 = sphi 0, %s74
    %s91 = sphi 0, %s75
    %s107 = sphi 0, %s109
    %s110 = sphi 0, %s107
    %s111 = sphi 0, %s110
    %s127 = sphi 0, %s111
    %s131 = sphi 0, %s131
    %s133 = sphi 0, %s131
    %s134 = sphi 0, %s133
    %s148 = sphi 0, %s134
    %s152 = sphi 0, %s152
    %s154 = sphi 0, %s152
    %s155 = sphi 0, %s154
    %s169 = sphi 0, %s155
    %s177 = sphi 0, %s179
    %s180 = sphi 0, %s177
    %s181 = sphi 0, %s180
    %s197 = sphi 0, %s181
  $region4: #{tpu_custom_call.1} parent=0 // loop_header_branch
    %14 = sbr.rel (%p12) target = $region8
  $region5: #{tpu_custom_call.1} parent=0 // loop_body
    %s16 = ssub.s32 %s11, 1
    %s17 = ssub.s32 %s11, 2
    %s24 = sadd.s32 1, %s19
    %p25 = scmp.ge.s32.totalorder %s24, 1
    %s26 = scalar_select %p25, 0, %s24
    %s27 = sadd.s32 1, %s18
    %s28 = scalar_select %p25, %s27, %s18
    %p29 = scmp.ge.s32.totalorder %s28, 2
    %s30 = scalar_select %p29, 0, %s28
    %s31 = ssub.s32 %s18, %s30
    %s32 = ssub.s32 %s19, %s26
    %s33 = sor.u32 %s31, %s32
    %p34 = scmp.eq.s32.totalorder %s33, 0
    %s36 = sadd.s32 %s35, 1
    %s37 = scalar_select %p34, %s35, %s36
    %p40 = pneg %p34
    %p41 = scmp.eq.s32.totalorder %s11, 1
    %p42 = por %p40, %p41
    %p43 = scmp.ne.s32.totalorder %s35, %s38
    %p44 = scmp.eq.s32.totalorder %s11, 0
    %p45 = por %p43, %p44
    %p46 = scmp.ne.s32.totalorder %s35, %s38
    %p47 = scmp.eq.s32.totalorder %s16, 1
    %p48 = por %p46, %p47
    %p49 = scmp.ne.s32.totalorder %s38, %s39
    %p50 = scmp.eq.s32.totalorder %s16, 0
    %p51 = por %p49, %p50
    %p52 = scmp.ne.s32.totalorder %s38, %s39
    %p53 = scmp.eq.s32.totalorder %s17, 1
    %p54 = por %p52, %p53
    %p56 = scmp.ne.s32.totalorder %s39, %s55
    %p57 = scmp.eq.s32.totalorder %s17, 0
    %p58 = por %p56, %p57
    %s59 = smul.u32 %s19, 16
    %s60 = ssub.s32 %s59, 1
    %p61 = scmp.gt.s32.totalorder %s60, 0
    %s62 = scalar_select %p61, %s60, 0
    %s63 = smul.u32 %s26, 16
    %s64 = ssub.s32 %s63, 1
    %p65 = scmp.gt.s32.totalorder %s64, 0
    %s66 = scalar_select %p65, %s64, 0
    %s67 = ssub.s32 %s18, %s30
    %s68 = ssub.s32 %s62, %s66
    %s69 = sor.u32 %s67, %s68
    %p70 = scmp.eq.s32.totalorder %s69, 0
    %s72 = sadd.s32 %s71, 1
    %s73 = scalar_select %p70, %s71, %s72
    %p76 = pneg %p70
    %p77 = scmp.eq.s32.totalorder %s11, 1
    %p78 = por %p76, %p77
    %p79 = scmp.ne.s32.totalorder %s71, %s74
    %p80 = scmp.eq.s32.totalorder %s11, 0
    %p81 = por %p79, %p80
    %p82 = scmp.ne.s32.totalorder %s71, %s74
    %p83 = scmp.eq.s32.totalorder %s16, 1
    %p84 = por %p82, %p83
    %p85 = scmp.ne.s32.totalorder %s74, %s75
    %p86 = scmp.eq.s32.totalorder %s16, 0
    %p87 = por %p85, %p86
    %p88 = scmp.ne.s32.totalorder %s74, %s75
    %p89 = scmp.eq.s32.totalorder %s17, 1
    %p90 = por %p88, %p89
    %p92 = scmp.ne.s32.totalorder %s75, %s91
    %p93 = scmp.eq.s32.totalorder %s17, 0
    %p94 = por %p92, %p93
    %s95 = sadd.s32 %s19, 1
    %s96 = smul.u32 %s95, 16
    %p97 = scmp.lt.s32.totalorder %s96, 15
    %s98 = scalar_select %p97, %s96, 15
    %s99 = sadd.s32 %s26, 1
    %s100 = smul.u32 %s99, 16
    %p101 = scmp.lt.s32.totalorder %s100, 15
    %s102 = scalar_select %p101, %s100, 15
    %s103 = ssub.s32 %s18, %s30
    %s104 = ssub.s32 %s98, %s102
    %s105 = sor.u32 %s103, %s104
    %p106 = scmp.eq.s32.totalorder %s105, 0
    %s108 = sadd.s32 %s107, 1
    %s109 = scalar_select %p106, %s107, %s108
    %p112 = pneg %p106
    %p113 = scmp.eq.s32.totalorder %s11, 1
    %p114 = por %p112, %p113
    %p115 = scmp.ne.s32.totalorder %s107, %s110
    %p116 = scmp.eq.s32.totalorder %s11, 0
    %p117 = por %p115, %p116
    %p118 = scmp.ne.s32.totalorder %s107, %s110
    %p119 = scmp.eq.s32.totalorder %s16, 1
    %p120 = por %p118, %p119
    %p121 = scmp.ne.s32.totalorder %s110, %s111
    %p122 = scmp.eq.s32.totalorder %s16, 0
    %p123 = por %p121, %p122
    %p124 = scmp.ne.s32.totalorder %s110, %s111
    %p125 = scmp.eq.s32.totalorder %s17, 1
    %p126 = por %p124, %p125
    %p128 = scmp.ne.s32.totalorder %s111, %s127
    %p129 = scmp.eq.s32.totalorder %s17, 0
    %p130 = por %p128, %p129
    %s132 = sadd.s32 %s131, 1
    %p135 = scmp.eq.s32.totalorder %s11, 1
    %p136 = scmp.ne.s32.totalorder %s131, %s133
    %p137 = scmp.eq.s32.totalorder %s11, 0
    %p138 = por %p136, %p137
    %p139 = scmp.ne.s32.totalorder %s131, %s133
    %p140 = scmp.eq.s32.totalorder %s16, 1
    %p141 = por %p139, %p140
    %p142 = scmp.ne.s32.totalorder %s133, %s134
    %p143 = scmp.eq.s32.totalorder %s16, 0
    %p144 = por %p142, %p143
    %p145 = scmp.ne.s32.totalorder %s133, %s134
    %p146 = scmp.eq.s32.totalorder %s17, 1
    %p147 = por %p145, %p146
    %p149 = scmp.ne.s32.totalorder %s134, %s148
    %p150 = scmp.eq.s32.totalorder %s17, 0
    %p151 = por %p149, %p150
    %s153 = sadd.s32 %s152, 1
    %p156 = scmp.eq.s32.totalorder %s11, 1
    %p157 = scmp.ne.s32.totalorder %s152, %s154
    %p158 = scmp.eq.s32.totalorder %s11, 0
    %p159 = por %p157, %p158
    %p160 = scmp.ne.s32.totalorder %s152, %s154
    %p161 = scmp.eq.s32.totalorder %s16, 1
    %p162 = por %p160, %p161
    %p163 = scmp.ne.s32.totalorder %s154, %s155
    %p164 = scmp.eq.s32.totalorder %s16, 0
    %p165 = por %p163, %p164
    %p166 = scmp.ne.s32.totalorder %s154, %s155
    %p167 = scmp.eq.s32.totalorder %s17, 1
    %p168 = por %p166, %p167
    %p170 = scmp.ne.s32.totalorder %s155, %s169
    %p171 = scmp.eq.s32.totalorder %s17, 0
    %p172 = por %p170, %p171
    %s173 = ssub.s32 %s18, %s30
    %s174 = ssub.s32 %s19, %s26
    %s175 = sor.u32 %s173, %s174
    %p176 = scmp.eq.s32.totalorder %s175, 0
    %s178 = sadd.s32 %s177, 1
    %s179 = scalar_select %p176, %s177, %s178
    %p182 = pneg %p176
    %p183 = scmp.eq.s32.totalorder %s11, 1
    %p184 = por %p182, %p183
    %p185 = scmp.ne.s32.totalorder %s177, %s180
    %p186 = scmp.eq.s32.totalorder %s11, 0
    %p187 = por %p185, %p186
    %p188 = scmp.ne.s32.totalorder %s177, %s180
    %p189 = scmp.eq.s32.totalorder %s16, 1
    %p190 = por %p188, %p189
    %p191 = scmp.ne.s32.totalorder %s180, %s181
    %p192 = scmp.eq.s32.totalorder %s16, 0
    %p193 = por %p191, %p192
    %p194 = scmp.ne.s32.totalorder %s180, %s181
    %p195 = scmp.eq.s32.totalorder %s17, 1
    %p196 = por %p194, %p195
    %p198 = scmp.ne.s32.totalorder %s181, %s197
    %p199 = scmp.eq.s32.totalorder %s17, 0
    %p200 = por %p198, %p199
    %p201 = scmp.le.s32.totalorder 1, %s11
    %p202 = scmp.lt.s32.totalorder %s11, 3
    %p203 = pnand %p201, %p202
    %p204 = pneg %p203
    // Predicated region
    $region9: #{tpu_custom_call.1} parent=5 // pred_check
      _
    $region10: #{tpu_custom_call.1} parent=5 // pred_check_branch
      %206 = sbr.rel (%p203) target = $region12
    $region11: #{tpu_custom_call.1} parent=5 // pred_region
      %s207 = ssub.s32 %s11, 1
      // Predicated region
      $region13: #{tpu_custom_call.1} parent=11 // pred_check
        %p208 = pneg %p144
      $region14: #{tpu_custom_call.1} parent=11 // pred_check_branch
        %210 = sbr.rel (%p208) target = $region16
      $region15: #{tpu_custom_call.1} parent=11 // pred_region
        _
      $region16: #{tpu_custom_call.1} parent=11 // pred_fallthru
        _
      // Predicated region
      $region17: #{tpu_custom_call.1} parent=11 // pred_check
        %p211 = pneg %p165
      $region18: #{tpu_custom_call.1} parent=11 // pred_check_branch
        %213 = sbr.rel (%p211) target = $region20
      $region19: #{tpu_custom_call.1} parent=11 // pred_region
        _
      $region20: #{tpu_custom_call.1} parent=11 // pred_fallthru
        _
    $region12: #{tpu_custom_call.1} parent=5 // pred_fallthru
      _
    %p214 = scmp.lt.s32.totalorder %s11, 2
    // Predicated region
    $region21: #{tpu_custom_call.1} parent=5 // pred_check
      %p215 = pneg %p214
    $region22: #{tpu_custom_call.1} parent=5 // pred_check_branch
      %217 = sbr.rel (%p215) target = $region24
    $region23: #{tpu_custom_call.1} parent=5 // pred_region
      // Predicated region
      $region25: #{tpu_custom_call.1} parent=23 // pred_check
        %p218 = pneg %p45
      $region26: #{tpu_custom_call.1} parent=23 // pred_check_branch
        %220 = sbr.rel (%p218) target = $region28
      $region27: #{tpu_custom_call.1} parent=23 // pred_region
        %s221 = smul.u32 16, %s19
        %p222 = scmp.lt.s32.totalorder %s18, 1
        %s223 = scalar_select %p222, %s18, 1
        %p224 = scmp.lt.s32.totalorder %s221, 15
        %s225 = scalar_select %p224, %s221, 15
        %s226 = smul.addr %s225, 2
        %s227 = smul.addr %s223, 32
        %s228 = sadd.s32 %s226, %s227
        %s229 = smul.addr %s228, 8
        %s230 = scalar_lea.vmem %s0, %s229
        %s231 = smul.u32 16, %s19
      $region28: #{tpu_custom_call.1} parent=23 // pred_fallthru
        _
      // Predicated region
      $region29: #{tpu_custom_call.1} parent=23 // pred_check
        %p232 = pneg %p81
      $region30: #{tpu_custom_call.1} parent=23 // pred_check_branch
        %234 = sbr.rel (%p232) target = $region32
      $region31: #{tpu_custom_call.1} parent=23 // pred_region
        %s235 = smul.u32 %s19, 16
        %s236 = ssub.s32 %s235, 1
        %p237 = scmp.gt.s32.totalorder %s236, 0
        %s238 = scalar_select %p237, %s236, 0
        %p239 = scmp.lt.s32.totalorder %s18, 1
        %s240 = scalar_select %p239, %s18, 1
        %p241 = scmp.lt.s32.totalorder %s238, 15
        %s242 = scalar_select %p241, %s238, 15
        %s243 = smul.addr %s242, 2
        %s244 = smul.addr %s240, 32
        %s245 = sadd.s32 %s243, %s244
        %s246 = smul.addr %s245, 8
        %s247 = scalar_lea.vmem %s1, %s246
        %s248 = smul.u32 %s19, 16
        %s249 = ssub.s32 %s248, 1
        %p250 = scmp.gt.s32.totalorder %s249, 0
        %s251 = scalar_select %p250, %s249, 0
      $region32: #{tpu_custom_call.1} parent=23 // pred_fallthru
        _
      // Predicated region
      $region33: #{tpu_custom_call.1} parent=23 // pred_check
        %p252 = pneg %p117
      $region34: #{tpu_custom_call.1} parent=23 // pred_check_branch
        %254 = sbr.rel (%p252) target = $region36
      $region35: #{tpu_custom_call.1} parent=23 // pred_region
        %s255 = sadd.s32 %s19, 1
        %s256 = smul.u32 %s255, 16
        %p257 = scmp.lt.s32.totalorder %s256, 15
        %s258 = scalar_select %p257, %s256, 15
        %p259 = scmp.lt.s32.totalorder %s18, 1
        %s260 = scalar_select %p259, %s18, 1
        %p261 = scmp.lt.s32.totalorder %s258, 15
        %s262 = scalar_select %p261, %s258, 15
        %s263 = smul.addr %s262, 2
        %s264 = smul.addr %s260, 32
        %s265 = sadd.s32 %s263, %s264
        %s266 = smul.addr %s265, 8
        %s267 = scalar_lea.vmem %s2, %s266
        %s268 = sadd.s32 %s19, 1
        %s269 = smul.u32 %s268, 16
        %p270 = scmp.lt.s32.totalorder %s269, 15
        %s271 = scalar_select %p270, %s269, 15
      $region36: #{tpu_custom_call.1} parent=23 // pred_fallthru
        _
    $region24: #{tpu_custom_call.1} parent=5 // pred_fallthru
      _
    %p272 = scmp.le.s32.totalorder 1, %s11
    %p273 = scmp.lt.s32.totalorder %s11, 3
    %p274 = pnand %p272, %p273
    %p275 = pneg %p274
    // Predicated region
    $region37: #{tpu_custom_call.1} parent=5 // pred_check
      _
    $region38: #{tpu_custom_call.1} parent=5 // pred_check_branch
      %277 = sbr.rel (%p274) target = $region40
    $region39: #{tpu_custom_call.1} parent=5 // pred_region
      %s278 = ssub.s32 %s11, 1
      %s279 = smul.u32 16, %s21
      %p280 = scmp.lt.s32.totalorder %s20, 1
      %s281 = scalar_select %p280, %s20, 1
      %p282 = scmp.lt.s32.totalorder %s279, 15
      %s283 = scalar_select %p282, %s279, 15
      %s284 = smul.addr %s283, 2
      %s285 = smul.addr %s281, 32
      %s286 = sadd.s32 %s284, %s285
      %s287 = smul.addr %s286, 8
      %s288 = scalar_lea.vmem %s0, %s287
      %p289 = pneg %p51
      %p290 = pneg %p48
      %s291 = smul.u32 %s21, 16
      %s292 = ssub.s32 %s291, 1
      %p293 = scmp.gt.s32.totalorder %s292, 0
      %s294 = scalar_select %p293, %s292, 0
      %p295 = scmp.lt.s32.totalorder %s20, 1
      %s296 = scalar_select %p295, %s20, 1
      %p297 = scmp.lt.s32.totalorder %s294, 15
      %s298 = scalar_select %p297, %s294, 15
      %s299 = smul.addr %s298, 2
      %s300 = smul.addr %s296, 32
      %s301 = sadd.s32 %s299, %s300
      %s302 = smul.addr %s301, 8
      %s303 = scalar_lea.vmem %s1, %s302
      %p304 = pneg %p87
      %p305 = pneg %p84
      %s306 = sadd.s32 %s21, 1
      %s307 = smul.u32 %s306, 16
      %p308 = scmp.lt.s32.totalorder %s307, 15
      %s309 = scalar_select %p308, %s307, 15
      %p310 = scmp.lt.s32.totalorder %s20, 1
      %s311 = scalar_select %p310, %s20, 1
      %p312 = scmp.lt.s32.totalorder %s309, 15
      %s313 = scalar_select %p312, %s309, 15
      %s314 = smul.addr %s313, 2
      %s315 = smul.addr %s311, 32
      %s316 = sadd.s32 %s314, %s315
      %s317 = smul.addr %s316, 8
      %s318 = scalar_lea.vmem %s2, %s317
      %p319 = pneg %p123
      %p320 = pneg %p120
      %p321 = pneg %p144
      %p322 = pneg %p141
      %p323 = pneg %p165
      %p324 = pneg %p162
      %p325 = pneg %p193
      %p326 = pneg %p190
      %s327 = smul.u32 16, %s21
      %p328 = scmp.lt.s32.totalorder %s20, 1
      %s329 = scalar_select %p328, %s20, 1
      %p330 = scmp.lt.s32.totalorder %s327, 15
      %s331 = scalar_select %p330, %s327, 15
      %s332 = smul.addr %s331, 4
      %s333 = smul.addr %s329, 64
      %s334 = sadd.s32 %s332, %s333
      %s335 = smul.addr %s334, 8
      %s336 = scalar_lea.vmem %s5, %s335
      %s337 = smul.u32 16, %s21
      %p338 = scmp.lt.s32.totalorder %s20, 1
      %s339 = scalar_select %p338, %s20, 1
      %p340 = scmp.lt.s32.totalorder %s337, 15
      %s341 = scalar_select %p340, %s337, 15
      %s342 = smul.addr %s341, 2
      %s343 = smul.addr %s339, 32
      %s344 = sadd.s32 %s342, %s343
      %s345 = smul.addr %s344, 8
      %s346 = scalar_lea.vmem %s0, %s345
      %s347 = smul.u32 16, %s21
      %s348 = smul.u32 %s21, 16
      %s349 = ssub.s32 %s348, 1
      %p350 = scmp.gt.s32.totalorder %s349, 0
      %s351 = scalar_select %p350, %s349, 0
      %p352 = scmp.lt.s32.totalorder %s20, 1
      %s353 = scalar_select %p352, %s20, 1
      %p354 = scmp.lt.s32.totalorder %s351, 15
      %s355 = scalar_select %p354, %s351, 15
      %s356 = smul.addr %s355, 2
      %s357 = smul.addr %s353, 32
      %s358 = sadd.s32 %s356, %s357
      %s359 = smul.addr %s358, 8
      %s360 = scalar_lea.vmem %s1, %s359
      %s361 = smul.u32 %s21, 16
      %s362 = ssub.s32 %s361, 1
      %p363 = scmp.gt.s32.totalorder %s362, 0
      %s364 = scalar_select %p363, %s362, 0
      %s365 = sadd.s32 %s21, 1
      %s366 = smul.u32 %s365, 16
      %p367 = scmp.lt.s32.totalorder %s366, 15
      %s368 = scalar_select %p367, %s366, 15
      %p369 = scmp.lt.s32.totalorder %s20, 1
      %s370 = scalar_select %p369, %s20, 1
      %p371 = scmp.lt.s32.totalorder %s368, 15
      %s372 = scalar_select %p371, %s368, 15
      %s373 = smul.addr %s372, 2
      %s374 = smul.addr %s370, 32
      %s375 = sadd.s32 %s373, %s374
      %s376 = smul.addr %s375, 8
      %s377 = scalar_lea.vmem %s2, %s376
      %s378 = sadd.s32 %s21, 1
      %s379 = smul.u32 %s378, 16
      %p380 = scmp.lt.s32.totalorder %s379, 15
      %s381 = scalar_select %p380, %s379, 15
      %s382 = smul.u32 16, %s21
      %p383 = scmp.lt.s32.totalorder %s20, 1
      %s384 = scalar_select %p383, %s20, 1
      %p385 = scmp.lt.s32.totalorder %s382, 15
      %s386 = scalar_select %p385, %s382, 15
      %s387 = smul.addr %s386, 4
      %s388 = smul.addr %s384, 64
      %s389 = sadd.s32 %s387, %s388
      %s390 = smul.addr %s389, 8
      %s391 = scalar_lea.vmem %s5, %s390
      %s392 = smul.u32 16, %s21
      %vm393 = vcmask 24576
      %394 = vst.msk [vmem:[#allocation2] sm:$0x1] %vm393, 0.0
      %395 = vst.msk [vmem:[#allocation2 + $0x18] sm:$0x1] %vm393, 0.0
      %396 = vst.msk [vmem:[#allocation2 + $0x30] sm:$0x1] %vm393, 0.0
      %397 = vst.msk [vmem:[#allocation2 + $0x48] sm:$0x1] %vm393, 0.0
      %398 = vst.msk [vmem:[#allocation2 + $0x60] sm:$0x1] %vm393, 0.0
      %399 = vst.msk [vmem:[#allocation2 + $0x78] sm:$0x1] %vm393, 0.0
      %400 = vst.msk [vmem:[#allocation2 + $0x90] sm:$0x1] %vm393, 0.0
      %401 = vst.msk [vmem:[#allocation2 + $0xa8] sm:$0x1] %vm393, 0.0
      %402 = vst.msk [vmem:[#allocation2 + $0xc0] sm:$0x1] %vm393, 0.0
      %403 = vst.msk [vmem:[#allocation2 + $0xd8] sm:$0x1] %vm393, 0.0
      %404 = vst.msk [vmem:[#allocation2 + $0xf0] sm:$0x1] %vm393, 0.0
      %405 = vst.msk [vmem:[#allocation2 + $0x108] sm:$0x1] %vm393, 0.0
      %406 = vst.msk [vmem:[#allocation2 + $0x120] sm:$0x1] %vm393, 0.0
      %407 = vst.msk [vmem:[#allocation2 + $0x138] sm:$0x1] %vm393, 0.0
      %408 = vst.msk [vmem:[#allocation2 + $0x150] sm:$0x1] %vm393, 0.0
      %409 = vst.msk [vmem:[#allocation2 + $0x168] sm:$0x1] %vm393, 0.0
      %410 = vst.msk [vmem:[#allocation2 + $0x180] sm:$0x1] %vm393, 0.0
      %411 = vst.msk [vmem:[#allocation2 + $0x198] sm:$0x1] %vm393, 0.0
      %412 = vst.msk [vmem:[#allocation2 + $0x11] sm:$0x1] %vm393, 0.0
      %413 = vst.msk [vmem:[#allocation2 + $0x29] sm:$0x1] %vm393, 0.0
      %414 = vst.msk [vmem:[#allocation2 + $0x41] sm:$0x1] %vm393, 0.0
      %415 = vst.msk [vmem:[#allocation2 + $0x59] sm:$0x1] %vm393, 0.0
      %416 = vst.msk [vmem:[#allocation2 + $0x71] sm:$0x1] %vm393, 0.0
      %417 = vst.msk [vmem:[#allocation2 + $0x89] sm:$0x1] %vm393, 0.0
      %418 = vst.msk [vmem:[#allocation2 + $0xa1] sm:$0x1] %vm393, 0.0
      %419 = vst.msk [vmem:[#allocation2 + $0xb9] sm:$0x1] %vm393, 0.0
      %420 = vst.msk [vmem:[#allocation2 + $0xd1] sm:$0x1] %vm393, 0.0
      %421 = vst.msk [vmem:[#allocation2 + $0xe9] sm:$0x1] %vm393, 0.0
      %422 = vst.msk [vmem:[#allocation2 + $0x101] sm:$0x1] %vm393, 0.0
      %423 = vst.msk [vmem:[#allocation2 + $0x119] sm:$0x1] %vm393, 0.0
      %424 = vst.msk [vmem:[#allocation2 + $0x131] sm:$0x1] %vm393, 0.0
      %425 = vst.msk [vmem:[#allocation2 + $0x149] sm:$0x1] %vm393, 0.0
      %426 = vst.msk [vmem:[#allocation2 + $0x161] sm:$0x1] %vm393, 0.0
      %427 = vst.msk [vmem:[#allocation2 + $0x179] sm:$0x1] %vm393, 0.0
      %428 = vst.msk [vmem:[#allocation2 + $0x191] sm:$0x1] %vm393, 0.0
      %429 = vst.msk [vmem:[#allocation2 + $0x1a9] sm:$0x1] %vm393, 0.0
      %v430 = vld [vmem:[%s346] sm:$0xff]
      %v431 = vld [vmem:[%s346 + $0x8] sm:$0xff]
      %v432 = vld [vmem:[%s346 + $0x10] sm:$0xff]
      %v433 = vld [vmem:[%s346 + $0x18] sm:$0xff]
      %v434 = vld [vmem:[%s346 + $0x20] sm:$0xff]
      %v435 = vld [vmem:[%s346 + $0x28] sm:$0xff]
      %v436 = vld [vmem:[%s346 + $0x30] sm:$0xff]
      %v437 = vld [vmem:[%s346 + $0x38] sm:$0xff]
      %v438 = vld [vmem:[%s346 + $0x40] sm:$0xff]
      %v439 = vld [vmem:[%s346 + $0x48] sm:$0xff]
      %v440 = vld [vmem:[%s346 + $0x50] sm:$0xff]
      %v441 = vld [vmem:[%s346 + $0x58] sm:$0xff]
      %v442 = vld [vmem:[%s346 + $0x60] sm:$0xff]
      %v443 = vld [vmem:[%s346 + $0x68] sm:$0xff]
      %v444 = vld [vmem:[%s346 + $0x70] sm:$0xff]
      %v445 = vld [vmem:[%s346 + $0x78] sm:$0xff]
      %v446 = vld [vmem:[%s346 + $0x80] sm:$0xff]
      %v447 = vld [vmem:[%s346 + $0x88] sm:$0xff]
      %v448 = vld [vmem:[%s346 + $0x90] sm:$0xff]
      %v449 = vld [vmem:[%s346 + $0x98] sm:$0xff]
      %v450 = vld [vmem:[%s346 + $0xa0] sm:$0xff]
      %v451 = vld [vmem:[%s346 + $0xa8] sm:$0xff]
      %v452 = vld [vmem:[%s346 + $0xb0] sm:$0xff]
      %v453 = vld [vmem:[%s346 + $0xb8] sm:$0xff]
      %v454 = vld [vmem:[%s346 + $0xc0] sm:$0xff]
      %v455 = vld [vmem:[%s346 + $0xc8] sm:$0xff]
      %v456 = vld [vmem:[%s346 + $0xd0] sm:$0xff]
      %v457 = vld [vmem:[%s346 + $0xd8] sm:$0xff]
      %v458 = vld [vmem:[%s346 + $0xe0] sm:$0xff]
      %v459 = vld [vmem:[%s346 + $0xe8] sm:$0xff]
      %v460 = vld [vmem:[%s346 + $0xf0] sm:$0xff]
      %v461 = vld [vmem:[%s346 + $0xf8] sm:$0xff]
      %s462 = scalar_lea.vmem [#allocation2], 24
      %vm463 = vcmask 31744
      %464 = vst.msk [vmem:[%s462 + $0x1] sm:$0xff] %vm463, %v430
      %465 = vst.msk [vmem:[%s462 + $0x9] sm:$0xff] %vm463, %v431
      %466 = vst.msk [vmem:[%s462 + $0x19] sm:$0xff] %vm463, %v432
      %467 = vst.msk [vmem:[%s462 + $0x21] sm:$0xff] %vm463, %v433
      %468 = vst.msk [vmem:[%s462 + $0x31] sm:$0xff] %vm463, %v434
      %469 = vst.msk [vmem:[%s462 + $0x39] sm:$0xff] %vm463, %v435
      %470 = vst.msk [vmem:[%s462 + $0x49] sm:$0xff] %vm463, %v436
      %471 = vst.msk [vmem:[%s462 + $0x51] sm:$0xff] %vm463, %v437
      %472 = vst.msk [vmem:[%s462 + $0x61] sm:$0xff] %vm463, %v438
      %473 = vst.msk [vmem:[%s462 + $0x69] sm:$0xff] %vm463, %v439
      %474 = vst.msk [vmem:[%s462 + $0x79] sm:$0xff] %vm463, %v440
      %475 = vst.msk [vmem:[%s462 + $0x81] sm:$0xff] %vm463, %v441
      %476 = vst.msk [vmem:[%s462 + $0x91] sm:$0xff] %vm463, %v442
      %477 = vst.msk [vmem:[%s462 + $0x99] sm:$0xff] %vm463, %v443
      %478 = vst.msk [vmem:[%s462 + $0xa9] sm:$0xff] %vm463, %v444
      %479 = vst.msk [vmem:[%s462 + $0xb1] sm:$0xff] %vm463, %v445
      %480 = vst.msk [vmem:[%s462 + $0xc1] sm:$0xff] %vm463, %v446
      %481 = vst.msk [vmem:[%s462 + $0xc9] sm:$0xff] %vm463, %v447
      %482 = vst.msk [vmem:[%s462 + $0xd9] sm:$0xff] %vm463, %v448
      %483 = vst.msk [vmem:[%s462 + $0xe1] sm:$0xff] %vm463, %v449
      %484 = vst.msk [vmem:[%s462 + $0xf1] sm:$0xff] %vm463, %v450
      %485 = vst.msk [vmem:[%s462 + $0xf9] sm:$0xff] %vm463, %v451
      %486 = vst.msk [vmem:[%s462 + $0x109] sm:$0xff] %vm463, %v452
      %487 = vst.msk [vmem:[%s462 + $0x111] sm:$0xff] %vm463, %v453
      %488 = vst.msk [vmem:[%s462 + $0x121] sm:$0xff] %vm463, %v454
      %489 = vst.msk [vmem:[%s462 + $0x129] sm:$0xff] %vm463, %v455
      %490 = vst.msk [vmem:[%s462 + $0x139] sm:$0xff] %vm463, %v456
      %491 = vst.msk [vmem:[%s462 + $0x141] sm:$0xff] %vm463, %v457
      %492 = vst.msk [vmem:[%s462 + $0x151] sm:$0xff] %vm463, %v458
      %493 = vst.msk [vmem:[%s462 + $0x159] sm:$0xff] %vm463, %v459
      %494 = vst.msk [vmem:[%s462 + $0x169] sm:$0xff] %vm463, %v460
      %495 = vst.msk [vmem:[%s462 + $0x171] sm:$0xff] %vm463, %v461
      %p496 = scmp.eq.s32.totalorder %s21, 0
      // Predicated region
      $region41: #{tpu_custom_call.1} parent=39 // pred_check
        %p497 = pneg %p496
      $region42: #{tpu_custom_call.1} parent=39 // pred_check_branch
        %499 = sbr.rel (%p497) target = $region44
      $region43: #{tpu_custom_call.1} parent=39 // pred_region
        %500 = vst.msk [vmem:[#allocation2 + $0x1] sm:$0xff] %vm463, 0.0
        %501 = vst.msk [vmem:[#allocation2 + $0x9] sm:$0xff] %vm463, 0.0
      $region44: #{tpu_custom_call.1} parent=39 // pred_fallthru
        _
      %p502 = scmp.gt.s32.totalorder %s21, 0
      // Predicated region
      $region45: #{tpu_custom_call.1} parent=39 // pred_check
        %p503 = pneg %p502
      $region46: #{tpu_custom_call.1} parent=39 // pred_check_branch
        %505 = sbr.rel (%p503) target = $region48
      $region47: #{tpu_custom_call.1} parent=39 // pred_region
        %v506 = vld [vmem:[%s360] sm:$0xff]
        %v507 = vld [vmem:[%s360 + $0x8] sm:$0xff]
        %508 = vst.msk [vmem:[#allocation2 + $0x1] sm:$0xff] %vm463, %v506
        %509 = vst.msk [vmem:[#allocation2 + $0x9] sm:$0xff] %vm463, %v507
      $region48: #{tpu_custom_call.1} parent=39 // pred_fallthru
        _
      // Predicated region
      $region49: #{tpu_custom_call.1} parent=39 // pred_check
        %p510 = pneg %p496
      $region50: #{tpu_custom_call.1} parent=39 // pred_check_branch
        %512 = sbr.rel (%p510) target = $region52
      $region51: #{tpu_custom_call.1} parent=39 // pred_region
        %s513 = scalar_lea.vmem [#allocation2], 408
        %514 = vst.msk [vmem:[%s513 + $0x1] sm:$0xff] %vm463, 0.0
        %515 = vst.msk [vmem:[%s513 + $0x9] sm:$0xff] %vm463, 0.0
      $region52: #{tpu_custom_call.1} parent=39 // pred_fallthru
        _
      %p516 = scmp.lt.s32.totalorder %s21, 0
      // Predicated region
      $region53: #{tpu_custom_call.1} parent=39 // pred_check
        %p517 = pneg %p516
      $region54: #{tpu_custom_call.1} parent=39 // pred_check_branch
        %519 = sbr.rel (%p517) target = $region56
      $region55: #{tpu_custom_call.1} parent=39 // pred_region
        %v520 = vld [vmem:[%s377] sm:$0xff]
        %v521 = vld [vmem:[%s377 + $0x8] sm:$0xff]
        %s522 = scalar_lea.vmem [#allocation2], 408
        %523 = vst.msk [vmem:[%s522 + $0x1] sm:$0xff] %vm463, %v520
        %524 = vst.msk [vmem:[%s522 + $0x9] sm:$0xff] %vm463, %v521
      $region56: #{tpu_custom_call.1} parent=39 // pred_fallthru
        _
      %v525 = vld [vmem:[%s4] sm:$0x1]
      %v527 = vlaneseq
      %v528 = vshrl.u32 %v527, 7
      %v529 = vsub.s32 0, %v528
      %v530 = vrot.slane %v525, %v529
      %v532 = vld [vmem:[#allocation2] sm:$0xff]
      %v533 = vld [vmem:[#allocation2 + $0x8] sm:$0xff]
      %v534 = vld [vmem:[#allocation2 + $0x18] sm:$0xff]
      %v535 = vld [vmem:[#allocation2 + $0x20] sm:$0xff]
      %v536 = vld [vmem:[#allocation2 + $0x30] sm:$0xff]
      %v537 = vld [vmem:[#allocation2 + $0x38] sm:$0xff]
      %v538 = vld [vmem:[#allocation2 + $0x48] sm:$0xff]
      %v539 = vld [vmem:[#allocation2 + $0x50] sm:$0xff]
      %v540 = vld [vmem:[#allocation2 + $0x60] sm:$0xff]
      %v541 = vld [vmem:[#allocation2 + $0x68] sm:$0xff]
      %v542 = vld [vmem:[#allocation2 + $0x78] sm:$0xff]
      %v543 = vld [vmem:[#allocation2 + $0x80] sm:$0xff]
      %v544 = vld [vmem:[#allocation2 + $0x90] sm:$0xff]
      %v545 = vld [vmem:[#allocation2 + $0x98] sm:$0xff]
      %v546 = vld [vmem:[#allocation2 + $0xa8] sm:$0xff]
      %v547 = vld [vmem:[#allocation2 + $0xb0] sm:$0xff]
      %v548 = vld [vmem:[#allocation2 + $0xc0] sm:$0xff]
      %v549 = vld [vmem:[#allocation2 + $0xc8] sm:$0xff]
      %v550 = vld [vmem:[#allocation2 + $0xd8] sm:$0xff]
      %v551 = vld [vmem:[#allocation2 + $0xe0] sm:$0xff]
      %v552 = vld [vmem:[#allocation2 + $0xf0] sm:$0xff]
      %v553 = vld [vmem:[#allocation2 + $0xf8] sm:$0xff]
      %v554 = vld [vmem:[#allocation2 + $0x108] sm:$0xff]
      %v555 = vld [vmem:[#allocation2 + $0x110] sm:$0xff]
      %v556 = vld [vmem:[#allocation2 + $0x120] sm:$0xff]
      %v557 = vld [vmem:[#allocation2 + $0x128] sm:$0xff]
      %v558 = vld [vmem:[#allocation2 + $0x138] sm:$0xff]
      %v559 = vld [vmem:[#allocation2 + $0x140] sm:$0xff]
      %v560 = vld [vmem:[#allocation2 + $0x150] sm:$0xff]
      %v561 = vld [vmem:[#allocation2 + $0x158] sm:$0xff]
      %v562 = vld [vmem:[#allocation2 + $0x168] sm:$0xff]
      %v563 = vld [vmem:[#allocation2 + $0x170] sm:$0xff]
      %v564 = vld [vmem:[#allocation2 + $0x1] sm:$0xff]
      %v565 = vld [vmem:[#allocation2 + $0x9] sm:$0xff]
      %v566 = vld [vmem:[#allocation2 + $0x19] sm:$0xff]
      %v567 = vld [vmem:[#allocation2 + $0x21] sm:$0xff]
      %v568 = vld [vmem:[#allocation2 + $0x31] sm:$0xff]
      %v569 = vld [vmem:[#allocation2 + $0x39] sm:$0xff]
      %v570 = vld [vmem:[#allocation2 + $0x49] sm:$0xff]
      %v571 = vld [vmem:[#allocation2 + $0x51] sm:$0xff]
      %v572 = vld [vmem:[#allocation2 + $0x61] sm:$0xff]
      %v573 = vld [vmem:[#allocation2 + $0x69] sm:$0xff]
      %v574 = vld [vmem:[#allocation2 + $0x79] sm:$0xff]
      %v575 = vld [vmem:[#allocation2 + $0x81] sm:$0xff]
      %v576 = vld [vmem:[#allocation2 + $0x91] sm:$0xff]
      %v577 = vld [vmem:[#allocation2 + $0x99] sm:$0xff]
      %v578 = vld [vmem:[#allocation2 + $0xa9] sm:$0xff]
      %v579 = vld [vmem:[#allocation2 + $0xb1] sm:$0xff]
      %v580 = vld [vmem:[#allocation2 + $0xc1] sm:$0xff]
      %v581 = vld [vmem:[#allocation2 + $0xc9] sm:$0xff]
      %v582 = vld [vmem:[#allocation2 + $0xd9] sm:$0xff]
      %v583 = vld [vmem:[#allocation2 + $0xe1] sm:$0xff]
      %v584 = vld [vmem:[#allocation2 + $0xf1] sm:$0xff]
      %v585 = vld [vmem:[#allocation2 + $0xf9] sm:$0xff]
      %v586 = vld [vmem:[#allocation2 + $0x109] sm:$0xff]
      %v587 = vld [vmem:[#allocation2 + $0x111] sm:$0xff]
      %v588 = vld [vmem:[#allocation2 + $0x121] sm:$0xff]
      %v589 = vld [vmem:[#allocation2 + $0x129] sm:$0xff]
      %v590 = vld [vmem:[#allocation2 + $0x139] sm:$0xff]
      %v591 = vld [vmem:[#allocation2 + $0x141] sm:$0xff]
      %v592 = vld [vmem:[#allocation2 + $0x151] sm:$0xff]
      %v593 = vld [vmem:[#allocation2 + $0x159] sm:$0xff]
      %v594 = vld [vmem:[#allocation2 + $0x169] sm:$0xff]
      %v595 = vld [vmem:[#allocation2 + $0x171] sm:$0xff]
      %v596 = vld [vmem:[%s462] sm:$0xff]
      %v597 = vld [vmem:[%s462 + $0x8] sm:$0xff]
      %v598 = vld [vmem:[%s462 + $0x18] sm:$0xff]
      %v599 = vld [vmem:[%s462 + $0x20] sm:$0xff]
      %v600 = vld [vmem:[%s462 + $0x30] sm:$0xff]
      %v601 = vld [vmem:[%s462 + $0x38] sm:$0xff]
      %v602 = vld [vmem:[%s462 + $0x48] sm:$0xff]
      %v603 = vld [vmem:[%s462 + $0x50] sm:$0xff]
      %v604 = vld [vmem:[%s462 + $0x60] sm:$0xff]
      %v605 = vld [vmem:[%s462 + $0x68] sm:$0xff]
      %v606 = vld [vmem:[%s462 + $0x78] sm:$0xff]
      %v607 = vld [vmem:[%s462 + $0x80] sm:$0xff]
      %v608 = vld [vmem:[%s462 + $0x90] sm:$0xff]
      %v609 = vld [vmem:[%s462 + $0x98] sm:$0xff]
      %v610 = vld [vmem:[%s462 + $0xa8] sm:$0xff]
      %v611 = vld [vmem:[%s462 + $0xb0] sm:$0xff]
      %v612 = vld [vmem:[%s462 + $0xc0] sm:$0xff]
      %v613 = vld [vmem:[%s462 + $0xc8] sm:$0xff]
      %v614 = vld [vmem:[%s462 + $0xd8] sm:$0xff]
      %v615 = vld [vmem:[%s462 + $0xe0] sm:$0xff]
      %v616 = vld [vmem:[%s462 + $0xf0] sm:$0xff]
      %v617 = vld [vmem:[%s462 + $0xf8] sm:$0xff]
      %v618 = vld [vmem:[%s462 + $0x108] sm:$0xff]
      %v619 = vld [vmem:[%s462 + $0x110] sm:$0xff]
      %v620 = vld [vmem:[%s462 + $0x120] sm:$0xff]
      %v621 = vld [vmem:[%s462 + $0x128] sm:$0xff]
      %v622 = vld [vmem:[%s462 + $0x138] sm:$0xff]
      %v623 = vld [vmem:[%s462 + $0x140] sm:$0xff]
      %v624 = vld [vmem:[%s462 + $0x150] sm:$0xff]
      %v625 = vld [vmem:[%s462 + $0x158] sm:$0xff]
      %v626 = vld [vmem:[%s462 + $0x168] sm:$0xff]
      %v627 = vld [vmem:[%s462 + $0x170] sm:$0xff]
      %v628 = vld [vmem:[%s462 + $0x1] sm:$0xff]
      %v629 = vld [vmem:[%s462 + $0x9] sm:$0xff]
      %v630 = vld [vmem:[%s462 + $0x19] sm:$0xff]
      %v631 = vld [vmem:[%s462 + $0x21] sm:$0xff]
      %v632 = vld [vmem:[%s462 + $0x31] sm:$0xff]
      %v633 = vld [vmem:[%s462 + $0x39] sm:$0xff]
      %v634 = vld [vmem:[%s462 + $0x49] sm:$0xff]
      %v635 = vld [vmem:[%s462 + $0x51] sm:$0xff]
      %v636 = vld [vmem:[%s462 + $0x61] sm:$0xff]
      %v637 = vld [vmem:[%s462 + $0x69] sm:$0xff]
      %v638 = vld [vmem:[%s462 + $0x79] sm:$0xff]
      %v639 = vld [vmem:[%s462 + $0x81] sm:$0xff]
      %v640 = vld [vmem:[%s462 + $0x91] sm:$0xff]
      %v641 = vld [vmem:[%s462 + $0x99] sm:$0xff]
      %v642 = vld [vmem:[%s462 + $0xa9] sm:$0xff]
      %v643 = vld [vmem:[%s462 + $0xb1] sm:$0xff]
      %v644 = vld [vmem:[%s462 + $0xc1] sm:$0xff]
      %v645 = vld [vmem:[%s462 + $0xc9] sm:$0xff]
      %v646 = vld [vmem:[%s462 + $0xd9] sm:$0xff]
      %v647 = vld [vmem:[%s462 + $0xe1] sm:$0xff]
      %v648 = vld [vmem:[%s462 + $0xf1] sm:$0xff]
      %v649 = vld [vmem:[%s462 + $0xf9] sm:$0xff]
      %v650 = vld [vmem:[%s462 + $0x109] sm:$0xff]
      %v651 = vld [vmem:[%s462 + $0x111] sm:$0xff]
      %v652 = vld [vmem:[%s462 + $0x121] sm:$0xff]
      %v653 = vld [vmem:[%s462 + $0x129] sm:$0xff]
      %v654 = vld [vmem:[%s462 + $0x139] sm:$0xff]
      %v655 = vld [vmem:[%s462 + $0x141] sm:$0xff]
      %v656 = vld [vmem:[%s462 + $0x151] sm:$0xff]
      %v657 = vld [vmem:[%s462 + $0x159] sm:$0xff]
      %v658 = vld [vmem:[%s462 + $0x169] sm:$0xff]
      %v659 = vld [vmem:[%s462 + $0x171] sm:$0xff]
      %692 = vrot.lane.b32.xlu0 %v564, 4
      %v693 = vpop.permute.xlu0 %692
      %694 = vrot.lane.b32.xlu0 %v565, 4
      %v695 = vpop.permute.xlu0 %694
      %696 = vrot.lane.b32.xlu0 %v566, 4
      %v697 = vpop.permute.xlu0 %696
      %698 = vrot.lane.b32.xlu0 %v567, 4
      %v699 = vpop.permute.xlu0 %698
      %700 = vrot.lane.b32.xlu0 %v568, 4
      %v701 = vpop.permute.xlu0 %700
      %702 = vrot.lane.b32.xlu0 %v569, 4
      %v703 = vpop.permute.xlu0 %702
      %704 = vrot.lane.b32.xlu0 %v570, 4
      %v705 = vpop.permute.xlu0 %704
      %706 = vrot.lane.b32.xlu0 %v571, 4
      %v707 = vpop.permute.xlu0 %706
      %708 = vrot.lane.b32.xlu0 %v572, 4
      %v709 = vpop.permute.xlu0 %708
      %710 = vrot.lane.b32.xlu0 %v573, 4
      %v711 = vpop.permute.xlu0 %710
      %712 = vrot.lane.b32.xlu0 %v574, 4
      %v713 = vpop.permute.xlu0 %712
      %714 = vrot.lane.b32.xlu0 %v575, 4
      %v715 = vpop.permute.xlu0 %714
      %716 = vrot.lane.b32.xlu0 %v576, 4
      %v717 = vpop.permute.xlu0 %716
      %718 = vrot.lane.b32.xlu0 %v577, 4
      %v719 = vpop.permute.xlu0 %718
      %720 = vrot.lane.b32.xlu0 %v578, 4
      %v721 = vpop.permute.xlu0 %720
      %722 = vrot.lane.b32.xlu0 %v579, 4
      %v723 = vpop.permute.xlu0 %722
      %724 = vrot.lane.b32.xlu0 %v580, 4
      %v725 = vpop.permute.xlu0 %724
      %726 = vrot.lane.b32.xlu0 %v581, 4
      %v727 = vpop.permute.xlu0 %726
      %728 = vrot.lane.b32.xlu0 %v582, 4
      %v729 = vpop.permute.xlu0 %728
      %730 = vrot.lane.b32.xlu0 %v583, 4
      %v731 = vpop.permute.xlu0 %730
      %732 = vrot.lane.b32.xlu0 %v584, 4
      %v733 = vpop.permute.xlu0 %732
      %734 = vrot.lane.b32.xlu0 %v585, 4
      %v735 = vpop.permute.xlu0 %734
      %736 = vrot.lane.b32.xlu0 %v586, 4
      %v737 = vpop.permute.xlu0 %736
      %738 = vrot.lane.b32.xlu0 %v587, 4
      %v739 = vpop.permute.xlu0 %738
      %740 = vrot.lane.b32.xlu0 %v588, 4
      %v741 = vpop.permute.xlu0 %740
      %742 = vrot.lane.b32.xlu0 %v589, 4
      %v743 = vpop.permute.xlu0 %742
      %744 = vrot.lane.b32.xlu0 %v590, 4
      %v745 = vpop.permute.xlu0 %744
      %746 = vrot.lane.b32.xlu0 %v591, 4
      %v747 = vpop.permute.xlu0 %746
      %748 = vrot.lane.b32.xlu0 %v592, 4
      %v749 = vpop.permute.xlu0 %748
      %750 = vrot.lane.b32.xlu0 %v593, 4
      %v751 = vpop.permute.xlu0 %750
      %752 = vrot.lane.b32.xlu0 %v594, 4
      %v753 = vpop.permute.xlu0 %752
      %754 = vrot.lane.b32.xlu0 %v595, 4
      %v755 = vpop.permute.xlu0 %754
      %820 = vrot.lane.b32.xlu0 %v596, 8
      %v821 = vpop.permute.xlu0 %820
      %822 = vrot.lane.b32.xlu0 %v597, 8
      %v823 = vpop.permute.xlu0 %822
      %824 = vrot.lane.b32.xlu0 %v598, 8
      %v825 = vpop.permute.xlu0 %824
      %826 = vrot.lane.b32.xlu0 %v599, 8
      %v827 = vpop.permute.xlu0 %826
      %828 = vrot.lane.b32.xlu0 %v600, 8
      %v829 = vpop.permute.xlu0 %828
      %830 = vrot.lane.b32.xlu0 %v601, 8
      %v831 = vpop.permute.xlu0 %830
      %832 = vrot.lane.b32.xlu0 %v602, 8
      %v833 = vpop.permute.xlu0 %832
      %834 = vrot.lane.b32.xlu0 %v603, 8
      %v835 = vpop.permute.xlu0 %834
      %836 = vrot.lane.b32.xlu0 %v604, 8
      %v837 = vpop.permute.xlu0 %836
      %838 = vrot.lane.b32.xlu0 %v605, 8
      %v839 = vpop.permute.xlu0 %838
      %840 = vrot.lane.b32.xlu0 %v606, 8
      %v841 = vpop.permute.xlu0 %840
      %842 = vrot.lane.b32.xlu0 %v607, 8
      %v843 = vpop.permute.xlu0 %842
      %844 = vrot.lane.b32.xlu0 %v608, 8
      %v845 = vpop.permute.xlu0 %844
      %846 = vrot.lane.b32.xlu0 %v609, 8
      %v847 = vpop.permute.xlu0 %846
      %848 = vrot.lane.b32.xlu0 %v610, 8
      %v849 = vpop.permute.xlu0 %848
      %850 = vrot.lane.b32.xlu0 %v611, 8
      %v851 = vpop.permute.xlu0 %850
      %852 = vrot.lane.b32.xlu0 %v612, 8
      %v853 = vpop.permute.xlu0 %852
      %854 = vrot.lane.b32.xlu0 %v613, 8
      %v855 = vpop.permute.xlu0 %854
      %856 = vrot.lane.b32.xlu0 %v614, 8
      %v857 = vpop.permute.xlu0 %856
      %858 = vrot.lane.b32.xlu0 %v615, 8
      %v859 = vpop.permute.xlu0 %858
      %860 = vrot.lane.b32.xlu0 %v616, 8
      %v861 = vpop.permute.xlu0 %860
      %862 = vrot.lane.b32.xlu0 %v617, 8
      %v863 = vpop.permute.xlu0 %862
      %864 = vrot.lane.b32.xlu0 %v618, 8
      %v865 = vpop.permute.xlu0 %864
      %866 = vrot.lane.b32.xlu0 %v619, 8
      %v867 = vpop.permute.xlu0 %866
      %868 = vrot.lane.b32.xlu0 %v620, 8
      %v869 = vpop.permute.xlu0 %868
      %870 = vrot.lane.b32.xlu0 %v621, 8
      %v871 = vpop.permute.xlu0 %870
      %872 = vrot.lane.b32.xlu0 %v622, 8
      %v873 = vpop.permute.xlu0 %872
      %874 = vrot.lane.b32.xlu0 %v623, 8
      %v875 = vpop.permute.xlu0 %874
      %876 = vrot.lane.b32.xlu0 %v624, 8
      %v877 = vpop.permute.xlu0 %876
      %878 = vrot.lane.b32.xlu0 %v625, 8
      %v879 = vpop.permute.xlu0 %878
      %880 = vrot.lane.b32.xlu0 %v626, 8
      %v881 = vpop.permute.xlu0 %880
      %882 = vrot.lane.b32.xlu0 %v627, 8
      %v883 = vpop.permute.xlu0 %882
      %948 = vrot.lane.b32.xlu0 %v628, 12
      %v949 = vpop.permute.xlu0 %948
      %950 = vrot.lane.b32.xlu0 %v629, 12
      %v951 = vpop.permute.xlu0 %950
      %952 = vrot.lane.b32.xlu0 %v630, 12
      %v953 = vpop.permute.xlu0 %952
      %954 = vrot.lane.b32.xlu0 %v631, 12
      %v955 = vpop.permute.xlu0 %954
      %956 = vrot.lane.b32.xlu0 %v632, 12
      %v957 = vpop.permute.xlu0 %956
      %958 = vrot.lane.b32.xlu0 %v633, 12
      %v959 = vpop.permute.xlu0 %958
      %960 = vrot.lane.b32.xlu0 %v634, 12
      %v961 = vpop.permute.xlu0 %960
      %962 = vrot.lane.b32.xlu0 %v635, 12
      %v963 = vpop.permute.xlu0 %962
      %964 = vrot.lane.b32.xlu0 %v636, 12
      %v965 = vpop.permute.xlu0 %964
      %966 = vrot.lane.b32.xlu0 %v637, 12
      %v967 = vpop.permute.xlu0 %966
      %968 = vrot.lane.b32.xlu0 %v638, 12
      %v969 = vpop.permute.xlu0 %968
      %970 = vrot.lane.b32.xlu0 %v639, 12
      %v971 = vpop.permute.xlu0 %970
      %972 = vrot.lane.b32.xlu0 %v640, 12
      %v973 = vpop.permute.xlu0 %972
      %974 = vrot.lane.b32.xlu0 %v641, 12
      %v975 = vpop.permute.xlu0 %974
      %976 = vrot.lane.b32.xlu0 %v642, 12
      %v977 = vpop.permute.xlu0 %976
      %978 = vrot.lane.b32.xlu0 %v643, 12
      %v979 = vpop.permute.xlu0 %978
      %980 = vrot.lane.b32.xlu0 %v644, 12
      %v981 = vpop.permute.xlu0 %980
      %982 = vrot.lane.b32.xlu0 %v645, 12
      %v983 = vpop.permute.xlu0 %982
      %984 = vrot.lane.b32.xlu0 %v646, 12
      %v985 = vpop.permute.xlu0 %984
      %986 = vrot.lane.b32.xlu0 %v647, 12
      %v987 = vpop.permute.xlu0 %986
      %988 = vrot.lane.b32.xlu0 %v648, 12
      %v989 = vpop.permute.xlu0 %988
      %990 = vrot.lane.b32.xlu0 %v649, 12
      %v991 = vpop.permute.xlu0 %990
      %992 = vrot.lane.b32.xlu0 %v650, 12
      %v993 = vpop.permute.xlu0 %992
      %994 = vrot.lane.b32.xlu0 %v651, 12
      %v995 = vpop.permute.xlu0 %994
      %996 = vrot.lane.b32.xlu0 %v652, 12
      %v997 = vpop.permute.xlu0 %996
      %998 = vrot.lane.b32.xlu0 %v653, 12
      %v999 = vpop.permute.xlu0 %998
      %1000 = vrot.lane.b32.xlu0 %v654, 12
      %v1001 = vpop.permute.xlu0 %1000
      %1002 = vrot.lane.b32.xlu0 %v655, 12
      %v1003 = vpop.permute.xlu0 %1002
      %1004 = vrot.lane.b32.xlu0 %v656, 12
      %v1005 = vpop.permute.xlu0 %1004
      %1006 = vrot.lane.b32.xlu0 %v657, 12
      %v1007 = vpop.permute.xlu0 %1006
      %1008 = vrot.lane.b32.xlu0 %v658, 12
      %v1009 = vpop.permute.xlu0 %1008
      %1010 = vrot.lane.b32.xlu0 %v659, 12
      %v1011 = vpop.permute.xlu0 %1010
      %v1044 = vsel %vm463, %v532, %v693
      %v1045 = vsel %vm463, %v533, %v695
      %v1046 = vsel %vm463, %v534, %v697
      %v1047 = vsel %vm463, %v535, %v699
      %v1048 = vsel %vm463, %v536, %v701
      %v1049 = vsel %vm463, %v537, %v703
      %v1050 = vsel %vm463, %v538, %v705
      %v1051 = vsel %vm463, %v539, %v707
      %v1052 = vsel %vm463, %v540, %v709
      %v1053 = vsel %vm463, %v541, %v711
      %v1054 = vsel %vm463, %v542, %v713
      %v1055 = vsel %vm463, %v543, %v715
      %v1056 = vsel %vm463, %v544, %v717
      %v1057 = vsel %vm463, %v545, %v719
      %v1058 = vsel %vm463, %v546, %v721
      %v1059 = vsel %vm463, %v547, %v723
      %v1060 = vsel %vm463, %v548, %v725
      %v1061 = vsel %vm463, %v549, %v727
      %v1062 = vsel %vm463, %v550, %v729
      %v1063 = vsel %vm463, %v551, %v731
      %v1064 = vsel %vm463, %v552, %v733
      %v1065 = vsel %vm463, %v553, %v735
      %v1066 = vsel %vm463, %v554, %v737
      %v1067 = vsel %vm463, %v555, %v739
      %v1068 = vsel %vm463, %v556, %v741
      %v1069 = vsel %vm463, %v557, %v743
      %v1070 = vsel %vm463, %v558, %v745
      %v1071 = vsel %vm463, %v559, %v747
      %v1072 = vsel %vm463, %v560, %v749
      %v1073 = vsel %vm463, %v561, %v751
      %v1074 = vsel %vm463, %v562, %v753
      %v1075 = vsel %vm463, %v563, %v755
      %vm1076 = vcmask 64512
      %v1077 = vsel %vm1076, %v1044, %v821
      %v1078 = vsel %vm1076, %v1045, %v823
      %v1079 = vsel %vm1076, %v1046, %v825
      %v1080 = vsel %vm1076, %v1047, %v827
      %v1081 = vsel %vm1076, %v1048, %v829
      %v1082 = vsel %vm1076, %v1049, %v831
      %v1083 = vsel %vm1076, %v1050, %v833
      %v1084 = vsel %vm1076, %v1051, %v835
      %v1085 = vsel %vm1076, %v1052, %v837
      %v1086 = vsel %vm1076, %v1053, %v839
      %v1087 = vsel %vm1076, %v1054, %v841
      %v1088 = vsel %vm1076, %v1055, %v843
      %v1089 = vsel %vm1076, %v1056, %v845
      %v1090 = vsel %vm1076, %v1057, %v847
      %v1091 = vsel %vm1076, %v1058, %v849
      %v1092 = vsel %vm1076, %v1059, %v851
      %v1093 = vsel %vm1076, %v1060, %v853
      %v1094 = vsel %vm1076, %v1061, %v855
      %v1095 = vsel %vm1076, %v1062, %v857
      %v1096 = vsel %vm1076, %v1063, %v859
      %v1097 = vsel %vm1076, %v1064, %v861
      %v1098 = vsel %vm1076, %v1065, %v863
      %v1099 = vsel %vm1076, %v1066, %v865
      %v1100 = vsel %vm1076, %v1067, %v867
      %v1101 = vsel %vm1076, %v1068, %v869
      %v1102 = vsel %vm1076, %v1069, %v871
      %v1103 = vsel %vm1076, %v1070, %v873
      %v1104 = vsel %vm1076, %v1071, %v875
      %v1105 = vsel %vm1076, %v1072, %v877
      %v1106 = vsel %vm1076, %v1073, %v879
      %v1107 = vsel %vm1076, %v1074, %v881
      %v1108 = vsel %vm1076, %v1075, %v883
      %vm1109 = vcmask 97280
      %v1110 = vsel %vm1109, %v1077, %v949
      %v1111 = vsel %vm1109, %v1078, %v951
      %v1112 = vsel %vm1109, %v1079, %v953
      %v1113 = vsel %vm1109, %v1080, %v955
      %v1114 = vsel %vm1109, %v1081, %v957
      %v1115 = vsel %vm1109, %v1082, %v959
      %v1116 = vsel %vm1109, %v1083, %v961
      %v1117 = vsel %vm1109, %v1084, %v963
      %v1118 = vsel %vm1109, %v1085, %v965
      %v1119 = vsel %vm1109, %v1086, %v967
      %v1120 = vsel %vm1109, %v1087, %v969
      %v1121 = vsel %vm1109, %v1088, %v971
      %v1122 = vsel %vm1109, %v1089, %v973
      %v1123 = vsel %vm1109, %v1090, %v975
      %v1124 = vsel %vm1109, %v1091, %v977
      %v1125 = vsel %vm1109, %v1092, %v979
      %v1126 = vsel %vm1109, %v1093, %v981
      %v1127 = vsel %vm1109, %v1094, %v983
      %v1128 = vsel %vm1109, %v1095, %v985
      %v1129 = vsel %vm1109, %v1096, %v987
      %v1130 = vsel %vm1109, %v1097, %v989
      %v1131 = vsel %vm1109, %v1098, %v991
      %v1132 = vsel %vm1109, %v1099, %v993
      %v1133 = vsel %vm1109, %v1100, %v995
      %v1134 = vsel %vm1109, %v1101, %v997
      %v1135 = vsel %vm1109, %v1102, %v999
      %v1136 = vsel %vm1109, %v1103, %v1001
      %v1137 = vsel %vm1109, %v1104, %v1003
      %v1138 = vsel %vm1109, %v1105, %v1005
      %v1139 = vsel %vm1109, %v1106, %v1007
      %v1140 = vsel %vm1109, %v1107, %v1009
      %v1141 = vsel %vm1109, %v1108, %v1011
      %v1142 = vld [vmem:[%s3] sm:$0xff]
      %v1143 = vld [vmem:[%s3 + $0x8] sm:$0xff]
      %vm1144 = vcmask 130048
      %v1146 = vsel %vm1144, %v1110, 0
      %v1149 = vsel %vm1144, %v1111, 0
      %v1152 = vsel %vm1144, %v1112, 0
      %v1155 = vsel %vm1144, %v1113, 0
      %v1158 = vsel %vm1144, %v1114, 0
      %v1161 = vsel %vm1144, %v1115, 0
      %v1164 = vsel %vm1144, %v1116, 0
      %v1167 = vsel %vm1144, %v1117, 0
      %v1170 = vsel %vm1144, %v1118, 0
      %v1173 = vsel %vm1144, %v1119, 0
      %v1176 = vsel %vm1144, %v1120, 0
      %v1179 = vsel %vm1144, %v1121, 0
      %v1182 = vsel %vm1144, %v1122, 0
      %v1185 = vsel %vm1144, %v1123, 0
      %v1188 = vsel %vm1144, %v1124, 0
      %v1191 = vsel %vm1144, %v1125, 0
      %v1194 = vsel %vm1144, %v1126, 0
      %v1197 = vsel %vm1144, %v1127, 0
      %v1200 = vsel %vm1144, %v1128, 0
      %v1203 = vsel %vm1144, %v1129, 0
      %v1206 = vsel %vm1144, %v1130, 0
      %v1209 = vsel %vm1144, %v1131, 0
      %v1212 = vsel %vm1144, %v1132, 0
      %v1215 = vsel %vm1144, %v1133, 0
      %v1218 = vsel %vm1144, %v1134, 0
      %v1221 = vsel %vm1144, %v1135, 0
      %v1224 = vsel %vm1144, %v1136, 0
      %v1227 = vsel %vm1144, %v1137, 0
      %v1230 = vsel %vm1144, %v1138, 0
      %v1233 = vsel %vm1144, %v1139, 0
      %v1236 = vsel %vm1144, %v1140, 0
      %v1239 = vsel %vm1144, %v1141, 0
      %1241 = vmatprep.subr.mxu0 0.0
      %1242 = vmatpush1.msra.mxu0 %v1142
      %1243 = vmatprep.subr.mxu0 0.0
      %1244 = vmatpush1.msra.mxu0 %v1143
      %1245 = vmatprep.subr.mxu0 0.0
      %1246 = vmatpush1.msra.mxu0 0.0
      %1247 = vmatprep.subr.mxu0 0.0
      %1248 = vmatpush1.msra.mxu0 0.0
      %1249 = vmatprep.subr.mxu0 0.0
      %1250 = vmatpush1.msra.mxu0 0.0
      %1251 = vmatprep.subr.mxu0 0.0
      %1252 = vmatpush1.msra.mxu0 0.0
      %1253 = vmatprep.subr.mxu0 0.0
      %1254 = vmatpush1.msra.mxu0 0.0
      %1255 = vmatprep.subr.mxu0 0.0
      %1256 = vmatpush1.msra.mxu0 0.0
      %1257 = vmatprep.subr.mxu0 0.0
      %1258 = vmatpush1.msra.mxu0 0.0
      %1259 = vmatprep.subr.mxu0 0.0
      %1260 = vmatpush1.msra.mxu0 0.0
      %1261 = vmatprep.subr.mxu0 0.0
      %1262 = vmatpush1.msra.mxu0 0.0
      %1263 = vmatprep.subr.mxu0 0.0
      %1264 = vmatpush1.msra.mxu0 0.0
      %1265 = vmatprep.subr.mxu0 0.0
      %1266 = vmatpush1.msra.mxu0 0.0
      %1267 = vmatprep.subr.mxu0 0.0
      %1268 = vmatpush1.msra.mxu0 0.0
      %1269 = vmatprep.subr.mxu0 0.0
      %1270 = vmatpush1.msra.mxu0 0.0
      %1271 = vmatprep.subr.mxu0 0.0
      %1272 = vmatpush1.msra.mxu0 0.0
      %1273 = vmatprep.subr.mxu0 0.0
      %1274 = vmatpush1.msra.mxu0 0.0
      %1275 = vmatprep.subr.mxu0 0.0
      %1276 = vmatpush1.msra.mxu0 0.0
      %1277 = vmatprep.subr.mxu0 0.0
      %1278 = vmatpush1.msra.mxu0 0.0
      %1279 = vmatprep.subr.mxu0 0.0
      %1280 = vmatpush1.msra.mxu0 0.0
      %1281 = vmatprep.subr.mxu0 0.0
      %1282 = vmatpush1.msra.mxu0 0.0
      %1283 = vmatprep.subr.mxu0 0.0
      %1284 = vmatpush1.msra.mxu0 0.0
      %1285 = vmatprep.subr.mxu0 0.0
      %1286 = vmatpush1.msra.mxu0 0.0
      %1287 = vmatprep.subr.mxu0 0.0
      %1288 = vmatpush1.msra.mxu0 0.0
      %1289 = vmatprep.subr.mxu0 0.0
      %1290 = vmatpush1.msra.mxu0 0.0
      %1291 = vmatprep.subr.mxu0 0.0
      %1292 = vmatpush1.msra.mxu0 0.0
      %1293 = vmatprep.subr.mxu0 0.0
      %1294 = vmatpush1.msra.mxu0 0.0
      %1295 = vmatprep.subr.mxu0 0.0
      %1296 = vmatpush1.msra.mxu0 0.0
      %1297 = vmatprep.subr.mxu0 0.0
      %1298 = vmatpush1.msra.mxu0 0.0
      %1299 = vmatprep.subr.mxu0 0.0
      %1300 = vmatpush1.msra.mxu0 0.0
      %1301 = vmatprep.subr.mxu0 0.0
      %1302 = vmatpush1.msra.mxu0 0.0
      %1303 = vmatprep.subr.mxu0 0.0
      %1304 = vmatpush1.msra.mxu0 0.0
      %1305 = vmatprep.mubr.f32.mxu0 0.0
      %1306 = vmatmul.mubr.f32.gmra.mrb[0].mxu0 %v1146
      %v1307 = vpop.f32.mrb[0].mxu0
      %v1308 = vadd.f32 0.0, %v1307
      %v1309 = vpop.f32.mrb[0].mxu0
      %1310 = vmatprep.mubr.f32.mxu0 0.0
      %1311 = vmatmul.mubr.f32.gmra.mrb[0].mxu0 %v1149
      %v1312 = vpop.f32.mrb[0].mxu0
      %v1313 = vadd.f32 0.0, %v1312
      %v1314 = vpop.f32.mrb[0].mxu0
      %1315 = vmatprep.mubr.f32.mxu0 0.0
      %1316 = vmatmul.mubr.f32.gmra.mrb[0].mxu0 %v1152
      %v1317 = vpop.f32.mrb[0].mxu0
      %v1318 = vadd.f32 0.0, %v1317
      %v1319 = vpop.f32.mrb[0].mxu0
      %1320 = vmatprep.mubr.f32.mxu0 0.0
      %1321 = vmatmul.mubr.f32.gmra.mrb[0].mxu0 %v1155
      %v1322 = vpop.f32.mrb[0].mxu0
      %v1323 = vadd.f32 0.0, %v1322
      %v1324 = vpop.f32.mrb[0].mxu0
      %1325 = vmatprep.mubr.f32.mxu0 0.0
      %1326 = vmatmul.mubr.f32.gmra.mrb[0].mxu0 %v1158
      %v1327 = vpop.f32.mrb[0].mxu0
      %v1328 = vadd.f32 0.0, %v1327
      %v1329 = vpop.f32.mrb[0].mxu0
      %1330 = vmatprep.mubr.f32.mxu0 0.0
      %1331 = vmatmul.mubr.f32.gmra.mrb[0].mxu0 %v1161
      %v1332 = vpop.f32.mrb[0].mxu0
      %v1333 = vadd.f32 0.0, %v1332
      %v1334 = vpop.f32.mrb[0].mxu0
      %1335 = vmatprep.mubr.f32.mxu0 0.0
      %1336 = vmatmul.mubr.f32.gmra.mrb[0].mxu0 %v1164
      %v1337 = vpop.f32.mrb[0].mxu0
      %v1338 = vadd.f32 0.0, %v1337
      %v1339 = vpop.f32.mrb[0].mxu0
      %1340 = vmatprep.mubr.f32.mxu0 0.0
      %1341 = vmatmul.mubr.f32.gmra.mrb[0].mxu0 %v1167
      %v1342 = vpop.f32.mrb[0].mxu0
      %v1343 = vadd.f32 0.0, %v1342
      %v1344 = vpop.f32.mrb[0].mxu0
      %1345 = vmatprep.mubr.f32.mxu0 0.0
      %1346 = vmatmul.mubr.f32.gmra.mrb[0].mxu0 %v1170
      %v1347 = vpop.f32.mrb[0].mxu0
      %v1348 = vadd.f32 0.0, %v1347
      %v1349 = vpop.f32.mrb[0].mxu0
      %1350 = vmatprep.mubr.f32.mxu0 0.0
      %1351 = vmatmul.mubr.f32.gmra.mrb[0].mxu0 %v1173
      %v1352 = vpop.f32.mrb[0].mxu0
      %v1353 = vadd.f32 0.0, %v1352
      %v1354 = vpop.f32.mrb[0].mxu0
      %1355 = vmatprep.mubr.f32.mxu0 0.0
      %1356 = vmatmul.mubr.f32.gmra.mrb[0].mxu0 %v1176
      %v1357 = vpop.f32.mrb[0].mxu0
      %v1358 = vadd.f32 0.0, %v1357
      %v1359 = vpop.f32.mrb[0].mxu0
      %1360 = vmatprep.mubr.f32.mxu0 0.0
      %1361 = vmatmul.mubr.f32.gmra.mrb[0].mxu0 %v1179
      %v1362 = vpop.f32.mrb[0].mxu0
      %v1363 = vadd.f32 0.0, %v1362
      %v1364 = vpop.f32.mrb[0].mxu0
      %1365 = vmatprep.mubr.f32.mxu0 0.0
      %1366 = vmatmul.mubr.f32.gmra.mrb[0].mxu0 %v1182
      %v1367 = vpop.f32.mrb[0].mxu0
      %v1368 = vadd.f32 0.0, %v1367
      %v1369 = vpop.f32.mrb[0].mxu0
      %1370 = vmatprep.mubr.f32.mxu0 0.0
      %1371 = vmatmul.mubr.f32.gmra.mrb[0].mxu0 %v1185
      %v1372 = vpop.f32.mrb[0].mxu0
      %v1373 = vadd.f32 0.0, %v1372
      %v1374 = vpop.f32.mrb[0].mxu0
      %1375 = vmatprep.mubr.f32.mxu0 0.0
      %1376 = vmatmul.mubr.f32.gmra.mrb[0].mxu0 %v1188
      %v1377 = vpop.f32.mrb[0].mxu0
      %v1378 = vadd.f32 0.0, %v1377
      %v1379 = vpop.f32.mrb[0].mxu0
      %1380 = vmatprep.mubr.f32.mxu0 0.0
      %1381 = vmatmul.mubr.f32.gmra.mrb[0].mxu0 %v1191
      %v1382 = vpop.f32.mrb[0].mxu0
      %v1383 = vadd.f32 0.0, %v1382
      %v1384 = vpop.f32.mrb[0].mxu0
      %1385 = vmatprep.mubr.f32.mxu0 0.0
      %1386 = vmatmul.mubr.f32.gmra.mrb[0].mxu0 %v1194
      %v1387 = vpop.f32.mrb[0].mxu0
      %v1388 = vadd.f32 0.0, %v1387
      %v1389 = vpop.f32.mrb[0].mxu0
      %1390 = vmatprep.mubr.f32.mxu0 0.0
      %1391 = vmatmul.mubr.f32.gmra.mrb[0].mxu0 %v1197
      %v1392 = vpop.f32.mrb[0].mxu0
      %v1393 = vadd.f32 0.0, %v1392
      %v1394 = vpop.f32.mrb[0].mxu0
      %1395 = vmatprep.mubr.f32.mxu0 0.0
      %1396 = vmatmul.mubr.f32.gmra.mrb[0].mxu0 %v1200
      %v1397 = vpop.f32.mrb[0].mxu0
      %v1398 = vadd.f32 0.0, %v1397
      %v1399 = vpop.f32.mrb[0].mxu0
      %1400 = vmatprep.mubr.f32.mxu0 0.0
      %1401 = vmatmul.mubr.f32.gmra.mrb[0].mxu0 %v1203
      %v1402 = vpop.f32.mrb[0].mxu0
      %v1403 = vadd.f32 0.0, %v1402
      %v1404 = vpop.f32.mrb[0].mxu0
      %1405 = vmatprep.mubr.f32.mxu0 0.0
      %1406 = vmatmul.mubr.f32.gmra.mrb[0].mxu0 %v1206
      %v1407 = vpop.f32.mrb[0].mxu0
      %v1408 = vadd.f32 0.0, %v1407
      %v1409 = vpop.f32.mrb[0].mxu0
      %1410 = vmatprep.mubr.f32.mxu0 0.0
      %1411 = vmatmul.mubr.f32.gmra.mrb[0].mxu0 %v1209
      %v1412 = vpop.f32.mrb[0].mxu0
      %v1413 = vadd.f32 0.0, %v1412
      %v1414 = vpop.f32.mrb[0].mxu0
      %1415 = vmatprep.mubr.f32.mxu0 0.0
      %1416 = vmatmul.mubr.f32.gmra.mrb[0].mxu0 %v1212
      %v1417 = vpop.f32.mrb[0].mxu0
      %v1418 = vadd.f32 0.0, %v1417
      %v1419 = vpop.f32.mrb[0].mxu0
      %1420 = vmatprep.mubr.f32.mxu0 0.0
      %1421 = vmatmul.mubr.f32.gmra.mrb[0].mxu0 %v1215
      %v1422 = vpop.f32.mrb[0].mxu0
      %v1423 = vadd.f32 0.0, %v1422
      %v1424 = vpop.f32.mrb[0].mxu0
      %1425 = vmatprep.mubr.f32.mxu0 0.0
      %1426 = vmatmul.mubr.f32.gmra.mrb[0].mxu0 %v1218
      %v1427 = vpop.f32.mrb[0].mxu0
      %v1428 = vadd.f32 0.0, %v1427
      %v1429 = vpop.f32.mrb[0].mxu0
      %1430 = vmatprep.mubr.f32.mxu0 0.0
      %1431 = vmatmul.mubr.f32.gmra.mrb[0].mxu0 %v1221
      %v1432 = vpop.f32.mrb[0].mxu0
      %v1433 = vadd.f32 0.0, %v1432
      %v1434 = vpop.f32.mrb[0].mxu0
      %1435 = vmatprep.mubr.f32.mxu0 0.0
      %1436 = vmatmul.mubr.f32.gmra.mrb[0].mxu0 %v1224
      %v1437 = vpop.f32.mrb[0].mxu0
      %v1438 = vadd.f32 0.0, %v1437
      %v1439 = vpop.f32.mrb[0].mxu0
      %1440 = vmatprep.mubr.f32.mxu0 0.0
      %1441 = vmatmul.mubr.f32.gmra.mrb[0].mxu0 %v1227
      %v1442 = vpop.f32.mrb[0].mxu0
      %v1443 = vadd.f32 0.0, %v1442
      %v1444 = vpop.f32.mrb[0].mxu0
      %1445 = vmatprep.mubr.f32.mxu0 0.0
      %1446 = vmatmul.mubr.f32.gmra.mrb[0].mxu0 %v1230
      %v1447 = vpop.f32.mrb[0].mxu0
      %v1448 = vadd.f32 0.0, %v1447
      %v1449 = vpop.f32.mrb[0].mxu0
      %1450 = vmatprep.mubr.f32.mxu0 0.0
      %1451 = vmatmul.mubr.f32.gmra.mrb[0].mxu0 %v1233
      %v1452 = vpop.f32.mrb[0].mxu0
      %v1453 = vadd.f32 0.0, %v1452
      %v1454 = vpop.f32.mrb[0].mxu0
      %1455 = vmatprep.mubr.f32.mxu0 0.0
      %1456 = vmatmul.mubr.f32.gmra.mrb[0].mxu0 %v1236
      %v1457 = vpop.f32.mrb[0].mxu0
      %v1458 = vadd.f32 0.0, %v1457
      %v1459 = vpop.f32.mrb[0].mxu0
      %1460 = vmatprep.mubr.f32.mxu0 0.0
      %1461 = vmatmul.mubr.f32.gmra.mrb[0].mxu0 %v1239
      %v1462 = vpop.f32.mrb[0].mxu0
      %v1463 = vadd.f32 0.0, %v1462
      %v1464 = vpop.f32.mrb[0].mxu0
      %1465 = vdwg.mxu0
      %v1466 = vadd.f32 %v530, %v1308
      %v1467 = vadd.f32 %v530, %v1313
      %v1468 = vadd.f32 %v530, %v1318
      %v1469 = vadd.f32 %v530, %v1323
      %v1470 = vadd.f32 %v530, %v1328
      %v1471 = vadd.f32 %v530, %v1333
      %v1472 = vadd.f32 %v530, %v1338
      %v1473 = vadd.f32 %v530, %v1343
      %v1474 = vadd.f32 %v530, %v1348
      %v1475 = vadd.f32 %v530, %v1353
      %v1476 = vadd.f32 %v530, %v1358
      %v1477 = vadd.f32 %v530, %v1363
      %v1478 = vadd.f32 %v530, %v1368
      %v1479 = vadd.f32 %v530, %v1373
      %v1480 = vadd.f32 %v530, %v1378
      %v1481 = vadd.f32 %v530, %v1383
      %v1482 = vadd.f32 %v530, %v1388
      %v1483 = vadd.f32 %v530, %v1393
      %v1484 = vadd.f32 %v530, %v1398
      %v1485 = vadd.f32 %v530, %v1403
      %v1486 = vadd.f32 %v530, %v1408
      %v1487 = vadd.f32 %v530, %v1413
      %v1488 = vadd.f32 %v530, %v1418
      %v1489 = vadd.f32 %v530, %v1423
      %v1490 = vadd.f32 %v530, %v1428
      %v1491 = vadd.f32 %v530, %v1433
      %v1492 = vadd.f32 %v530, %v1438
      %v1493 = vadd.f32 %v530, %v1443
      %v1494 = vadd.f32 %v530, %v1448
      %v1495 = vadd.f32 %v530, %v1453
      %v1496 = vadd.f32 %v530, %v1458
      %v1497 = vadd.f32 %v530, %v1463
      %1498 = vst.msk [vmem:[%s391] sm:$0xff] %vm463, %v1466
      %1499 = vst.msk [vmem:[%s391 + $0x8] sm:$0xff] %vm463, %v1467
      %1500 = vst.msk [vmem:[%s391 + $0x20] sm:$0xff] %vm463, %v1468
      %1501 = vst.msk [vmem:[%s391 + $0x28] sm:$0xff] %vm463, %v1469
      %1502 = vst.msk [vmem:[%s391 + $0x40] sm:$0xff] %vm463, %v1470
      %1503 = vst.msk [vmem:[%s391 + $0x48] sm:$0xff] %vm463, %v1471
      %1504 = vst.msk [vmem:[%s391 + $0x60] sm:$0xff] %vm463, %v1472
      %1505 = vst.msk [vmem:[%s391 + $0x68] sm:$0xff] %vm463, %v1473
      %1506 = vst.msk [vmem:[%s391 + $0x80] sm:$0xff] %vm463, %v1474
      %1507 = vst.msk [vmem:[%s391 + $0x88] sm:$0xff] %vm463, %v1475
      %1508 = vst.msk [vmem:[%s391 + $0xa0] sm:$0xff] %vm463, %v1476
      %1509 = vst.msk [vmem:[%s391 + $0xa8] sm:$0xff] %vm463, %v1477
      %1510 = vst.msk [vmem:[%s391 + $0xc0] sm:$0xff] %vm463, %v1478
      %1511 = vst.msk [vmem:[%s391 + $0xc8] sm:$0xff] %vm463, %v1479
      %1512 = vst.msk [vmem:[%s391 + $0xe0] sm:$0xff] %vm463, %v1480
      %1513 = vst.msk [vmem:[%s391 + $0xe8] sm:$0xff] %vm463, %v1481
      %1514 = vst.msk [vmem:[%s391 + $0x100] sm:$0xff] %vm463, %v1482
      %1515 = vst.msk [vmem:[%s391 + $0x108] sm:$0xff] %vm463, %v1483
      %1516 = vst.msk [vmem:[%s391 + $0x120] sm:$0xff] %vm463, %v1484
      %1517 = vst.msk [vmem:[%s391 + $0x128] sm:$0xff] %vm463, %v1485
      %1518 = vst.msk [vmem:[%s391 + $0x140] sm:$0xff] %vm463, %v1486
      %1519 = vst.msk [vmem:[%s391 + $0x148] sm:$0xff] %vm463, %v1487
      %1520 = vst.msk [vmem:[%s391 + $0x160] sm:$0xff] %vm463, %v1488
      %1521 = vst.msk [vmem:[%s391 + $0x168] sm:$0xff] %vm463, %v1489
      %1522 = vst.msk [vmem:[%s391 + $0x180] sm:$0xff] %vm463, %v1490
      %1523 = vst.msk [vmem:[%s391 + $0x188] sm:$0xff] %vm463, %v1491
      %1524 = vst.msk [vmem:[%s391 + $0x1a0] sm:$0xff] %vm463, %v1492
      %1525 = vst.msk [vmem:[%s391 + $0x1a8] sm:$0xff] %vm463, %v1493
      %1526 = vst.msk [vmem:[%s391 + $0x1c0] sm:$0xff] %vm463, %v1494
      %1527 = vst.msk [vmem:[%s391 + $0x1c8] sm:$0xff] %vm463, %v1495
      %1528 = vst.msk [vmem:[%s391 + $0x1e0] sm:$0xff] %vm463, %v1496
      %1529 = vst.msk [vmem:[%s391 + $0x1e8] sm:$0xff] %vm463, %v1497
      %v1530 = vld [vmem:[#allocation2 + $0x1] sm:$0xff]
      %v1531 = vld [vmem:[#allocation2 + $0x9] sm:$0xff]
      %v1532 = vld [vmem:[#allocation2 + $0x19] sm:$0xff]
      %v1533 = vld [vmem:[#allocation2 + $0x21] sm:$0xff]
      %v1534 = vld [vmem:[#allocation2 + $0x31] sm:$0xff]
      %v1535 = vld [vmem:[#allocation2 + $0x39] sm:$0xff]
      %v1536 = vld [vmem:[#allocation2 + $0x49] sm:$0xff]
      %v1537 = vld [vmem:[#allocation2 + $0x51] sm:$0xff]
      %v1538 = vld [vmem:[#allocation2 + $0x61] sm:$0xff]
      %v1539 = vld [vmem:[#allocation2 + $0x69] sm:$0xff]
      %v1540 = vld [vmem:[#allocation2 + $0x79] sm:$0xff]
      %v1541 = vld [vmem:[#allocation2 + $0x81] sm:$0xff]
      %v1542 = vld [vmem:[#allocation2 + $0x91] sm:$0xff]
      %v1543 = vld [vmem:[#allocation2 + $0x99] sm:$0xff]
      %v1544 = vld [vmem:[#allocation2 + $0xa9] sm:$0xff]
      %v1545 = vld [vmem:[#allocation2 + $0xb1] sm:$0xff]
      %v1546 = vld [vmem:[#allocation2 + $0xc1] sm:$0xff]
      %v1547 = vld [vmem:[#allocation2 + $0xc9] sm:$0xff]
      %v1548 = vld [vmem:[#allocation2 + $0xd9] sm:$0xff]
      %v1549 = vld [vmem:[#allocation2 + $0xe1] sm:$0xff]
      %v1550 = vld [vmem:[#allocation2 + $0xf1] sm:$0xff]
      %v1551 = vld [vmem:[#allocation2 + $0xf9] sm:$0xff]
      %v1552 = vld [vmem:[#allocation2 + $0x109] sm:$0xff]
      %v1553 = vld [vmem:[#allocation2 + $0x111] sm:$0xff]
      %v1554 = vld [vmem:[#allocation2 + $0x121] sm:$0xff]
      %v1555 = vld [vmem:[#allocation2 + $0x129] sm:$0xff]
      %v1556 = vld [vmem:[#allocation2 + $0x139] sm:$0xff]
      %v1557 = vld [vmem:[#allocation2 + $0x141] sm:$0xff]
      %v1558 = vld [vmem:[#allocation2 + $0x151] sm:$0xff]
      %v1559 = vld [vmem:[#allocation2 + $0x159] sm:$0xff]
      %v1560 = vld [vmem:[#allocation2 + $0x169] sm:$0xff]
      %v1561 = vld [vmem:[#allocation2 + $0x171] sm:$0xff]
      %v1562 = vld [vmem:[#allocation2 + $0x2] sm:$0xff]
      %v1563 = vld [vmem:[#allocation2 + $0xa] sm:$0xff]
      %v1564 = vld [vmem:[#allocation2 + $0x1a] sm:$0xff]
      %v1565 = vld [vmem:[#allocation2 + $0x22] sm:$0xff]
      %v1566 = vld [vmem:[#allocation2 + $0x32] sm:$0xff]
      %v1567 = vld [vmem:[#allocation2 + $0x3a] sm:$0xff]
      %v1568 = vld [vmem:[#allocation2 + $0x4a] sm:$0xff]
      %v1569 = vld [vmem:[#allocation2 + $0x52] sm:$0xff]
      %v1570 = vld [vmem:[#allocation2 + $0x62] sm:$0xff]
      %v1571 = vld [vmem:[#allocation2 + $0x6a] sm:$0xff]
      %v1572 = vld [vmem:[#allocation2 + $0x7a] sm:$0xff]
      %v1573 = vld [vmem:[#allocation2 + $0x82] sm:$0xff]
      %v1574 = vld [vmem:[#allocation2 + $0x92] sm:$0xff]
      %v1575 = vld [vmem:[#allocation2 + $0x9a] sm:$0xff]
      %v1576 = vld [vmem:[#allocation2 + $0xaa] sm:$0xff]
      %v1577 = vld [vmem:[#allocation2 + $0xb2] sm:$0xff]
      %v1578 = vld [vmem:[#allocation2 + $0xc2] sm:$0xff]
      %v1579 = vld [vmem:[#allocation2 + $0xca] sm:$0xff]
      %v1580 = vld [vmem:[#allocation2 + $0xda] sm:$0xff]
      %v1581 = vld [vmem:[#allocation2 + $0xe2] sm:$0xff]
      %v1582 = vld [vmem:[#allocation2 + $0xf2] sm:$0xff]
      %v1583 = vld [vmem:[#allocation2 + $0xfa] sm:$0xff]
      %v1584 = vld [vmem:[#allocation2 + $0x10a] sm:$0xff]
      %v1585 = vld [vmem:[#allocation2 + $0x112] sm:$0xff]
      %v1586 = vld [vmem:[#allocation2 + $0x122] sm:$0xff]
      %v1587 = vld [vmem:[#allocation2 + $0x12a] sm:$0xff]
      %v1588 = vld [vmem:[#allocation2 + $0x13a] sm:$0xff]
      %v1589 = vld [vmem:[#allocation2 + $0x142] sm:$0xff]
      %v1590 = vld [vmem:[#allocation2 + $0x152] sm:$0xff]
      %v1591 = vld [vmem:[#allocation2 + $0x15a] sm:$0xff]
      %v1592 = vld [vmem:[#allocation2 + $0x16a] sm:$0xff]
      %v1593 = vld [vmem:[#allocation2 + $0x172] sm:$0xff]
      %v1594 = vld [vmem:[%s462 + $0x1] sm:$0xff]
      %v1595 = vld [vmem:[%s462 + $0x9] sm:$0xff]
      %v1596 = vld [vmem:[%s462 + $0x19] sm:$0xff]
      %v1597 = vld [vmem:[%s462 + $0x21] sm:$0xff]
      %v1598 = vld [vmem:[%s462 + $0x31] sm:$0xff]
      %v1599 = vld [vmem:[%s462 + $0x39] sm:$0xff]
      %v1600 = vld [vmem:[%s462 + $0x49] sm:$0xff]
      %v1601 = vld [vmem:[%s462 + $0x51] sm:$0xff]
      %v1602 = vld [vmem:[%s462 + $0x61] sm:$0xff]
      %v1603 = vld [vmem:[%s462 + $0x69] sm:$0xff]
      %v1604 = vld [vmem:[%s462 + $0x79] sm:$0xff]
      %v1605 = vld [vmem:[%s462 + $0x81] sm:$0xff]
      %v1606 = vld [vmem:[%s462 + $0x91] sm:$0xff]
      %v1607 = vld [vmem:[%s462 + $0x99] sm:$0xff]
      %v1608 = vld [vmem:[%s462 + $0xa9] sm:$0xff]
      %v1609 = vld [vmem:[%s462 + $0xb1] sm:$0xff]
      %v1610 = vld [vmem:[%s462 + $0xc1] sm:$0xff]
      %v1611 = vld [vmem:[%s462 + $0xc9] sm:$0xff]
      %v1612 = vld [vmem:[%s462 + $0xd9] sm:$0xff]
      %v1613 = vld [vmem:[%s462 + $0xe1] sm:$0xff]
      %v1614 = vld [vmem:[%s462 + $0xf1] sm:$0xff]
      %v1615 = vld [vmem:[%s462 + $0xf9] sm:$0xff]
      %v1616 = vld [vmem:[%s462 + $0x109] sm:$0xff]
      %v1617 = vld [vmem:[%s462 + $0x111] sm:$0xff]
      %v1618 = vld [vmem:[%s462 + $0x121] sm:$0xff]
      %v1619 = vld [vmem:[%s462 + $0x129] sm:$0xff]
      %v1620 = vld [vmem:[%s462 + $0x139] sm:$0xff]
      %v1621 = vld [vmem:[%s462 + $0x141] sm:$0xff]
      %v1622 = vld [vmem:[%s462 + $0x151] sm:$0xff]
      %v1623 = vld [vmem:[%s462 + $0x159] sm:$0xff]
      %v1624 = vld [vmem:[%s462 + $0x169] sm:$0xff]
      %v1625 = vld [vmem:[%s462 + $0x171] sm:$0xff]
      %v1626 = vld [vmem:[%s462 + $0x2] sm:$0xff]
      %v1627 = vld [vmem:[%s462 + $0xa] sm:$0xff]
      %v1628 = vld [vmem:[%s462 + $0x1a] sm:$0xff]
      %v1629 = vld [vmem:[%s462 + $0x22] sm:$0xff]
      %v1630 = vld [vmem:[%s462 + $0x32] sm:$0xff]
      %v1631 = vld [vmem:[%s462 + $0x3a] sm:$0xff]
      %v1632 = vld [vmem:[%s462 + $0x4a] sm:$0xff]
      %v1633 = vld [vmem:[%s462 + $0x52] sm:$0xff]
      %v1634 = vld [vmem:[%s462 + $0x62] sm:$0xff]
      %v1635 = vld [vmem:[%s462 + $0x6a] sm:$0xff]
      %v1636 = vld [vmem:[%s462 + $0x7a] sm:$0xff]
      %v1637 = vld [vmem:[%s462 + $0x82] sm:$0xff]
      %v1638 = vld [vmem:[%s462 + $0x92] sm:$0xff]
      %v1639 = vld [vmem:[%s462 + $0x9a] sm:$0xff]
      %v1640 = vld [vmem:[%s462 + $0xaa] sm:$0xff]
      %v1641 = vld [vmem:[%s462 + $0xb2] sm:$0xff]
      %v1642 = vld [vmem:[%s462 + $0xc2] sm:$0xff]
      %v1643 = vld [vmem:[%s462 + $0xca] sm:$0xff]
      %v1644 = vld [vmem:[%s462 + $0xda] sm:$0xff]
      %v1645 = vld [vmem:[%s462 + $0xe2] sm:$0xff]
      %v1646 = vld [vmem:[%s462 + $0xf2] sm:$0xff]
      %v1647 = vld [vmem:[%s462 + $0xfa] sm:$0xff]
      %v1648 = vld [vmem:[%s462 + $0x10a] sm:$0xff]
      %v1649 = vld [vmem:[%s462 + $0x112] sm:$0xff]
      %v1650 = vld [vmem:[%s462 + $0x122] sm:$0xff]
      %v1651 = vld [vmem:[%s462 + $0x12a] sm:$0xff]
      %v1652 = vld [vmem:[%s462 + $0x13a] sm:$0xff]
      %v1653 = vld [vmem:[%s462 + $0x142] sm:$0xff]
      %v1654 = vld [vmem:[%s462 + $0x152] sm:$0xff]
      %v1655 = vld [vmem:[%s462 + $0x15a] sm:$0xff]
      %v1656 = vld [vmem:[%s462 + $0x16a] sm:$0xff]
      %v1657 = vld [vmem:[%s462 + $0x172] sm:$0xff]
      %1690 = vrot.lane.b32.xlu0 %v1562, 4
      %v1691 = vpop.permute.xlu0 %1690
      %1692 = vrot.lane.b32.xlu0 %v1563, 4
      %v1693 = vpop.permute.xlu0 %1692
      %1694 = vrot.lane.b32.xlu0 %v1564, 4
      %v1695 = vpop.permute.xlu0 %1694
      %1696 = vrot.lane.b32.xlu0 %v1565, 4
      %v1697 = vpop.permute.xlu0 %1696
      %1698 = vrot.lane.b32.xlu0 %v1566, 4
      %v1699 = vpop.permute.xlu0 %1698
      %1700 = vrot.lane.b32.xlu0 %v1567, 4
      %v1701 = vpop.permute.xlu0 %1700
      %1702 = vrot.lane.b32.xlu0 %v1568, 4
      %v1703 = vpop.permute.xlu0 %1702
      %1704 = vrot.lane.b32.xlu0 %v1569, 4
      %v1705 = vpop.permute.xlu0 %1704
      %1706 = vrot.lane.b32.xlu0 %v1570, 4
      %v1707 = vpop.permute.xlu0 %1706
      %1708 = vrot.lane.b32.xlu0 %v1571, 4
      %v1709 = vpop.permute.xlu0 %1708
      %1710 = vrot.lane.b32.xlu0 %v1572, 4
      %v1711 = vpop.permute.xlu0 %1710
      %1712 = vrot.lane.b32.xlu0 %v1573, 4
      %v1713 = vpop.permute.xlu0 %1712
      %1714 = vrot.lane.b32.xlu0 %v1574, 4
      %v1715 = vpop.permute.xlu0 %1714
      %1716 = vrot.lane.b32.xlu0 %v1575, 4
      %v1717 = vpop.permute.xlu0 %1716
      %1718 = vrot.lane.b32.xlu0 %v1576, 4
      %v1719 = vpop.permute.xlu0 %1718
      %1720 = vrot.lane.b32.xlu0 %v1577, 4
      %v1721 = vpop.permute.xlu0 %1720
      %1722 = vrot.lane.b32.xlu0 %v1578, 4
      %v1723 = vpop.permute.xlu0 %1722
      %1724 = vrot.lane.b32.xlu0 %v1579, 4
      %v1725 = vpop.permute.xlu0 %1724
      %1726 = vrot.lane.b32.xlu0 %v1580, 4
      %v1727 = vpop.permute.xlu0 %1726
      %1728 = vrot.lane.b32.xlu0 %v1581, 4
      %v1729 = vpop.permute.xlu0 %1728
      %1730 = vrot.lane.b32.xlu0 %v1582, 4
      %v1731 = vpop.permute.xlu0 %1730
      %1732 = vrot.lane.b32.xlu0 %v1583, 4
      %v1733 = vpop.permute.xlu0 %1732
      %1734 = vrot.lane.b32.xlu0 %v1584, 4
      %v1735 = vpop.permute.xlu0 %1734
      %1736 = vrot.lane.b32.xlu0 %v1585, 4
      %v1737 = vpop.permute.xlu0 %1736
      %1738 = vrot.lane.b32.xlu0 %v1586, 4
      %v1739 = vpop.permute.xlu0 %1738
      %1740 = vrot.lane.b32.xlu0 %v1587, 4
      %v1741 = vpop.permute.xlu0 %1740
      %1742 = vrot.lane.b32.xlu0 %v1588, 4
      %v1743 = vpop.permute.xlu0 %1742
      %1744 = vrot.lane.b32.xlu0 %v1589, 4
      %v1745 = vpop.permute.xlu0 %1744
      %1746 = vrot.lane.b32.xlu0 %v1590, 4
      %v1747 = vpop.permute.xlu0 %1746
      %1748 = vrot.lane.b32.xlu0 %v1591, 4
      %v1749 = vpop.permute.xlu0 %1748
      %1750 = vrot.lane.b32.xlu0 %v1592, 4
      %v1751 = vpop.permute.xlu0 %1750
      %1752 = vrot.lane.b32.xlu0 %v1593, 4
      %v1753 = vpop.permute.xlu0 %1752
      %1818 = vrot.lane.b32.xlu0 %v1594, 8
      %v1819 = vpop.permute.xlu0 %1818
      %1820 = vrot.lane.b32.xlu0 %v1595, 8
      %v1821 = vpop.permute.xlu0 %1820
      %1822 = vrot.lane.b32.xlu0 %v1596, 8
      %v1823 = vpop.permute.xlu0 %1822
      %1824 = vrot.lane.b32.xlu0 %v1597, 8
      %v1825 = vpop.permute.xlu0 %1824
      %1826 = vrot.lane.b32.xlu0 %v1598, 8
      %v1827 = vpop.permute.xlu0 %1826
      %1828 = vrot.lane.b32.xlu0 %v1599, 8
      %v1829 = vpop.permute.xlu0 %1828
      %1830 = vrot.lane.b32.xlu0 %v1600, 8
      %v1831 = vpop.permute.xlu0 %1830
      %1832 = vrot.lane.b32.xlu0 %v1601, 8
      %v1833 = vpop.permute.xlu0 %1832
      %1834 = vrot.lane.b32.xlu0 %v1602, 8
      %v1835 = vpop.permute.xlu0 %1834
      %1836 = vrot.lane.b32.xlu0 %v1603, 8
      %v1837 = vpop.permute.xlu0 %1836
      %1838 = vrot.lane.b32.xlu0 %v1604, 8
      %v1839 = vpop.permute.xlu0 %1838
      %1840 = vrot.lane.b32.xlu0 %v1605, 8
      %v1841 = vpop.permute.xlu0 %1840
      %1842 = vrot.lane.b32.xlu0 %v1606, 8
      %v1843 = vpop.permute.xlu0 %1842
      %1844 = vrot.lane.b32.xlu0 %v1607, 8
      %v1845 = vpop.permute.xlu0 %1844
      %1846 = vrot.lane.b32.xlu0 %v1608, 8
      %v1847 = vpop.permute.xlu0 %1846
      %1848 = vrot.lane.b32.xlu0 %v1609, 8
      %v1849 = vpop.permute.xlu0 %1848
      %1850 = vrot.lane.b32.xlu0 %v1610, 8
      %v1851 = vpop.permute.xlu0 %1850
      %1852 = vrot.lane.b32.xlu0 %v1611, 8
      %v1853 = vpop.permute.xlu0 %1852
      %1854 = vrot.lane.b32.xlu0 %v1612, 8
      %v1855 = vpop.permute.xlu0 %1854
      %1856 = vrot.lane.b32.xlu0 %v1613, 8
      %v1857 = vpop.permute.xlu0 %1856
      %1858 = vrot.lane.b32.xlu0 %v1614, 8
      %v1859 = vpop.permute.xlu0 %1858
      %1860 = vrot.lane.b32.xlu0 %v1615, 8
      %v1861 = vpop.permute.xlu0 %1860
      %1862 = vrot.lane.b32.xlu0 %v1616, 8
      %v1863 = vpop.permute.xlu0 %1862
      %1864 = vrot.lane.b32.xlu0 %v1617, 8
      %v1865 = vpop.permute.xlu0 %1864
      %1866 = vrot.lane.b32.xlu0 %v1618, 8
      %v1867 = vpop.permute.xlu0 %1866
      %1868 = vrot.lane.b32.xlu0 %v1619, 8
      %v1869 = vpop.permute.xlu0 %1868
      %1870 = vrot.lane.b32.xlu0 %v1620, 8
      %v1871 = vpop.permute.xlu0 %1870
      %1872 = vrot.lane.b32.xlu0 %v1621, 8
      %v1873 = vpop.permute.xlu0 %1872
      %1874 = vrot.lane.b32.xlu0 %v1622, 8
      %v1875 = vpop.permute.xlu0 %1874
      %1876 = vrot.lane.b32.xlu0 %v1623, 8
      %v1877 = vpop.permute.xlu0 %1876
      %1878 = vrot.lane.b32.xlu0 %v1624, 8
      %v1879 = vpop.permute.xlu0 %1878
      %1880 = vrot.lane.b32.xlu0 %v1625, 8
      %v1881 = vpop.permute.xlu0 %1880
      %1946 = vrot.lane.b32.xlu0 %v1626, 12
      %v1947 = vpop.permute.xlu0 %1946
      %1948 = vrot.lane.b32.xlu0 %v1627, 12
      %v1949 = vpop.permute.xlu0 %1948
      %1950 = vrot.lane.b32.xlu0 %v1628, 12
      %v1951 = vpop.permute.xlu0 %1950
      %1952 = vrot.lane.b32.xlu0 %v1629, 12
      %v1953 = vpop.permute.xlu0 %1952
      %1954 = vrot.lane.b32.xlu0 %v1630, 12
      %v1955 = vpop.permute.xlu0 %1954
      %1956 = vrot.lane.b32.xlu0 %v1631, 12
      %v1957 = vpop.permute.xlu0 %1956
      %1958 = vrot.lane.b32.xlu0 %v1632, 12
      %v1959 = vpop.permute.xlu0 %1958
      %1960 = vrot.lane.b32.xlu0 %v1633, 12
      %v1961 = vpop.permute.xlu0 %1960
      %1962 = vrot.lane.b32.xlu0 %v1634, 12
      %v1963 = vpop.permute.xlu0 %1962
      %1964 = vrot.lane.b32.xlu0 %v1635, 12
      %v1965 = vpop.permute.xlu0 %1964
      %1966 = vrot.lane.b32.xlu0 %v1636, 12
      %v1967 = vpop.permute.xlu0 %1966
      %1968 = vrot.lane.b32.xlu0 %v1637, 12
      %v1969 = vpop.permute.xlu0 %1968
      %1970 = vrot.lane.b32.xlu0 %v1638, 12
      %v1971 = vpop.permute.xlu0 %1970
      %1972 = vrot.lane.b32.xlu0 %v1639, 12
      %v1973 = vpop.permute.xlu0 %1972
      %1974 = vrot.lane.b32.xlu0 %v1640, 12
      %v1975 = vpop.permute.xlu0 %1974
      %1976 = vrot.lane.b32.xlu0 %v1641, 12
      %v1977 = vpop.permute.xlu0 %1976
      %1978 = vrot.lane.b32.xlu0 %v1642, 12
      %v1979 = vpop.permute.xlu0 %1978
      %1980 = vrot.lane.b32.xlu0 %v1643, 12
      %v1981 = vpop.permute.xlu0 %1980
      %1982 = vrot.lane.b32.xlu0 %v1644, 12
      %v1983 = vpop.permute.xlu0 %1982
      %1984 = vrot.lane.b32.xlu0 %v1645, 12
      %v1985 = vpop.permute.xlu0 %1984
      %1986 = vrot.lane.b32.xlu0 %v1646, 12
      %v1987 = vpop.permute.xlu0 %1986
      %1988 = vrot.lane.b32.xlu0 %v1647, 12
      %v1989 = vpop.permute.xlu0 %1988
      %1990 = vrot.lane.b32.xlu0 %v1648, 12
      %v1991 = vpop.permute.xlu0 %1990
      %1992 = vrot.lane.b32.xlu0 %v1649, 12
      %v1993 = vpop.permute.xlu0 %1992
      %1994 = vrot.lane.b32.xlu0 %v1650, 12
      %v1995 = vpop.permute.xlu0 %1994
      %1996 = vrot.lane.b32.xlu0 %v1651, 12
      %v1997 = vpop.permute.xlu0 %1996
      %1998 = vrot.lane.b32.xlu0 %v1652, 12
      %v1999 = vpop.permute.xlu0 %1998
      %2000 = vrot.lane.b32.xlu0 %v1653, 12
      %v2001 = vpop.permute.xlu0 %2000
      %2002 = vrot.lane.b32.xlu0 %v1654, 12
      %v2003 = vpop.permute.xlu0 %2002
      %2004 = vrot.lane.b32.xlu0 %v1655, 12
      %v2005 = vpop.permute.xlu0 %2004
      %2006 = vrot.lane.b32.xlu0 %v1656, 12
      %v2007 = vpop.permute.xlu0 %2006
      %2008 = vrot.lane.b32.xlu0 %v1657, 12
      %v2009 = vpop.permute.xlu0 %2008
      %v2042 = vsel %vm463, %v1530, %v1691
      %v2043 = vsel %vm463, %v1531, %v1693
      %v2044 = vsel %vm463, %v1532, %v1695
      %v2045 = vsel %vm463, %v1533, %v1697
      %v2046 = vsel %vm463, %v1534, %v1699
      %v2047 = vsel %vm463, %v1535, %v1701
      %v2048 = vsel %vm463, %v1536, %v1703
      %v2049 = vsel %vm463, %v1537, %v1705
      %v2050 = vsel %vm463, %v1538, %v1707
      %v2051 = vsel %vm463, %v1539, %v1709
      %v2052 = vsel %vm463, %v1540, %v1711
      %v2053 = vsel %vm463, %v1541, %v1713
      %v2054 = vsel %vm463, %v1542, %v1715
      %v2055 = vsel %vm463, %v1543, %v1717
      %v2056 = vsel %vm463, %v1544, %v1719
      %v2057 = vsel %vm463, %v1545, %v1721
      %v2058 = vsel %vm463, %v1546, %v1723
      %v2059 = vsel %vm463, %v1547, %v1725
      %v2060 = vsel %vm463, %v1548, %v1727
      %v2061 = vsel %vm463, %v1549, %v1729
      %v2062 = vsel %vm463, %v1550, %v1731
      %v2063 = vsel %vm463, %v1551, %v1733
      %v2064 = vsel %vm463, %v1552, %v1735
      %v2065 = vsel %vm463, %v1553, %v1737
      %v2066 = vsel %vm463, %v1554, %v1739
      %v2067 = vsel %vm463, %v1555, %v1741
      %v2068 = vsel %vm463, %v1556, %v1743
      %v2069 = vsel %vm463, %v1557, %v1745
      %v2070 = vsel %vm463, %v1558, %v1747
      %v2071 = vsel %vm463, %v1559, %v1749
      %v2072 = vsel %vm463, %v1560, %v1751
      %v2073 = vsel %vm463, %v1561, %v1753
      %v2074 = vsel %vm1076, %v2042, %v1819
      %v2075 = vsel %vm1076, %v2043, %v1821
      %v2076 = vsel %vm1076, %v2044, %v1823
      %v2077 = vsel %vm1076, %v2045, %v1825
      %v2078 = vsel %vm1076, %v2046, %v1827
      %v2079 = vsel %vm1076, %v2047, %v1829
      %v2080 = vsel %vm1076, %v2048, %v1831
      %v2081 = vsel %vm1076, %v2049, %v1833
      %v2082 = vsel %vm1076, %v2050, %v1835
      %v2083 = vsel %vm1076, %v2051, %v1837
      %v2084 = vsel %vm1076, %v2052, %v1839
      %v2085 = vsel %vm1076, %v2053, %v1841
      %v2086 = vsel %vm1076, %v2054, %v1843
      %v2087 = vsel %vm1076, %v2055, %v1845
      %v2088 = vsel %vm1076, %v2056, %v1847
      %v2089 = vsel %vm1076, %v2057, %v1849
      %v2090 = vsel %vm1076, %v2058, %v1851
      %v2091 = vsel %vm1076, %v2059, %v1853
      %v2092 = vsel %vm1076, %v2060, %v1855
      %v2093 = vsel %vm1076, %v2061, %v1857
      %v2094 = vsel %vm1076, %v2062, %v1859
      %v2095 = vsel %vm1076, %v2063, %v1861
      %v2096 = vsel %vm1076, %v2064, %v1863
      %v2097 = vsel %vm1076, %v2065, %v1865
      %v2098 = vsel %vm1076, %v2066, %v1867
      %v2099 = vsel %vm1076, %v2067, %v1869
      %v2100 = vsel %vm1076, %v2068, %v1871
      %v2101 = vsel %vm1076, %v2069, %v1873
      %v2102 = vsel %vm1076, %v2070, %v1875
      %v2103 = vsel %vm1076, %v2071, %v1877
      %v2104 = vsel %vm1076, %v2072, %v1879
      %v2105 = vsel %vm1076, %v2073, %v1881
      %v2106 = vsel %vm1109, %v2074, %v1947
      %v2107 = vsel %vm1109, %v2075, %v1949
      %v2108 = vsel %vm1109, %v2076, %v1951
      %v2109 = vsel %vm1109, %v2077, %v1953
      %v2110 = vsel %vm1109, %v2078, %v1955
      %v2111 = vsel %vm1109, %v2079, %v1957
      %v2112 = vsel %vm1109, %v2080, %v1959
      %v2113 = vsel %vm1109, %v2081, %v1961
      %v2114 = vsel %vm1109, %v2082, %v1963
      %v2115 = vsel %vm1109, %v2083, %v1965
      %v2116 = vsel %vm1109, %v2084, %v1967
      %v2117 = vsel %vm1109, %v2085, %v1969
      %v2118 = vsel %vm1109, %v2086, %v1971
      %v2119 = vsel %vm1109, %v2087, %v1973
      %v2120 = vsel %vm1109, %v2088, %v1975
      %v2121 = vsel %vm1109, %v2089, %v1977
      %v2122 = vsel %vm1109, %v2090, %v1979
      %v2123 = vsel %vm1109, %v2091, %v1981
      %v2124 = vsel %vm1109, %v2092, %v1983
      %v2125 = vsel %vm1109, %v2093, %v1985
      %v2126 = vsel %vm1109, %v2094, %v1987
      %v2127 = vsel %vm1109, %v2095, %v1989
      %v2128 = vsel %vm1109, %v2096, %v1991
      %v2129 = vsel %vm1109, %v2097, %v1993
      %v2130 = vsel %vm1109, %v2098, %v1995
      %v2131 = vsel %vm1109, %v2099, %v1997
      %v2132 = vsel %vm1109, %v2100, %v1999
      %v2133 = vsel %vm1109, %v2101, %v2001
      %v2134 = vsel %vm1109, %v2102, %v2003
      %v2135 = vsel %vm1109, %v2103, %v2005
      %v2136 = vsel %vm1109, %v2104, %v2007
      %v2137 = vsel %vm1109, %v2105, %v2009
      %s2138 = scalar_lea.vmem %s3, 16
      %v2139 = vld [vmem:[%s2138] sm:$0xff]
      %v2140 = vld [vmem:[%s2138 + $0x8] sm:$0xff]
      %v2142 = vsel %vm1144, %v2106, 0
      %v2145 = vsel %vm1144, %v2107, 0
      %v2148 = vsel %vm1144, %v2108, 0
      %v2151 = vsel %vm1144, %v2109, 0
      %v2154 = vsel %vm1144, %v2110, 0
      %v2157 = vsel %vm1144, %v2111, 0
      %v2160 = vsel %vm1144, %v2112, 0
      %v2163 = vsel %vm1144, %v2113, 0
      %v2166 = vsel %vm1144, %v2114, 0
      %v2169 = vsel %vm1144, %v2115, 0
      %v2172 = vsel %vm1144, %v2116, 0
      %v2175 = vsel %vm1144, %v2117, 0
      %v2178 = vsel %vm1144, %v2118, 0
      %v2181 = vsel %vm1144, %v2119, 0
      %v2184 = vsel %vm1144, %v2120, 0
      %v2187 = vsel %vm1144, %v2121, 0
      %v2190 = vsel %vm1144, %v2122, 0
      %v2193 = vsel %vm1144, %v2123, 0
      %v2196 = vsel %vm1144, %v2124, 0
      %v2199 = vsel %vm1144, %v2125, 0
      %v2202 = vsel %vm1144, %v2126, 0
      %v2205 = vsel %vm1144, %v2127, 0
      %v2208 = vsel %vm1144, %v2128, 0
      %v2211 = vsel %vm1144, %v2129, 0
      %v2214 = vsel %vm1144, %v2130, 0
      %v2217 = vsel %vm1144, %v2131, 0
      %v2220 = vsel %vm1144, %v2132, 0
      %v2223 = vsel %vm1144, %v2133, 0
      %v2226 = vsel %vm1144, %v2134, 0
      %v2229 = vsel %vm1144, %v2135, 0
      %v2232 = vsel %vm1144, %v2136, 0
      %v2235 = vsel %vm1144, %v2137, 0
      %2237 = vmatprep.subr.mxu0 0.0
      %2238 = vmatpush1.msra.mxu0 %v2139
      %2239 = vmatprep.subr.mxu0 0.0
      %2240 = vmatpush1.msra.mxu0 %v2140
      %2241 = vmatprep.subr.mxu0 0.0
      %2242 = vmatpush1.msra.mxu0 0.0
      %2243 = vmatprep.subr.mxu0 0.0
      %2244 = vmatpush1.msra.mxu0 0.0
      %2245 = vmatprep.subr.mxu0 0.0
      %2246 = vmatpush1.msra.mxu0 0.0
      %2247 = vmatprep.subr.mxu0 0.0
      %2248 = vmatpush1.msra.mxu0 0.0
      %2249 = vmatprep.subr.mxu0 0.0
      %2250 = vmatpush1.msra.mxu0 0.0
      %2251 = vmatprep.subr.mxu0 0.0
      %2252 = vmatpush1.msra.mxu0 0.0
      %2253 = vmatprep.subr.mxu0 0.0
      %2254 = vmatpush1.msra.mxu0 0.0
      %2255 = vmatprep.subr.mxu0 0.0
      %2256 = vmatpush1.msra.mxu0 0.0
      %2257 = vmatprep.subr.mxu0 0.0
      %2258 = vmatpush1.msra.mxu0 0.0
      %2259 = vmatprep.subr.mxu0 0.0
      %2260 = vmatpush1.msra.mxu0 0.0
      %2261 = vmatprep.subr.mxu0 0.0
      %2262 = vmatpush1.msra.mxu0 0.0
      %2263 = vmatprep.subr.mxu0 0.0
      %2264 = vmatpush1.msra.mxu0 0.0
      %2265 = vmatprep.subr.mxu0 0.0
      %2266 = vmatpush1.msra.mxu0 0.0
      %2267 = vmatprep.subr.mxu0 0.0
      %2268 = vmatpush1.msra.mxu0 0.0
      %2269 = vmatprep.subr.mxu0 0.0
      %2270 = vmatpush1.msra.mxu0 0.0
      %2271 = vmatprep.subr.mxu0 0.0
      %2272 = vmatpush1.msra.mxu0 0.0
      %2273 = vmatprep.subr.mxu0 0.0
      %2274 = vmatpush1.msra.mxu0 0.0
      %2275 = vmatprep.subr.mxu0 0.0
      %2276 = vmatpush1.msra.mxu0 0.0
      %2277 = vmatprep.subr.mxu0 0.0
      %2278 = vmatpush1.msra.mxu0 0.0
      %2279 = vmatprep.subr.mxu0 0.0
      %2280 = vmatpush1.msra.mxu0 0.0
      %2281 = vmatprep.subr.mxu0 0.0
      %2282 = vmatpush1.msra.mxu0 0.0
      %2283 = vmatprep.subr.mxu0 0.0
      %2284 = vmatpush1.msra.mxu0 0.0
      %2285 = vmatprep.subr.mxu0 0.0
      %2286 = vmatpush1.msra.mxu0 0.0
      %2287 = vmatprep.subr.mxu0 0.0
      %2288 = vmatpush1.msra.mxu0 0.0
      %2289 = vmatprep.subr.mxu0 0.0
      %2290 = vmatpush1.msra.mxu0 0.0
      %2291 = vmatprep.subr.mxu0 0.0
      %2292 = vmatpush1.msra.mxu0 0.0
      %2293 = vmatprep.subr.mxu0 0.0
      %2294 = vmatpush1.msra.mxu0 0.0
      %2295 = vmatprep.subr.mxu0 0.0
      %2296 = vmatpush1.msra.mxu0 0.0
      %2297 = vmatprep.subr.mxu0 0.0
      %2298 = vmatpush1.msra.mxu0 0.0
      %2299 = vmatprep.subr.mxu0 0.0
      %2300 = vmatpush1.msra.mxu0 0.0
      %2301 = vmatprep.mubr.f32.mxu0 0.0
      %2302 = vmatmul.mubr.f32.gmra.mrb[0].mxu0 %v2142
      %v2303 = vpop.f32.mrb[0].mxu0
      %v2304 = vadd.f32 0.0, %v2303
      %v2305 = vpop.f32.mrb[0].mxu0
      %2306 = vmatprep.mubr.f32.mxu0 0.0
      %2307 = vmatmul.mubr.f32.gmra.mrb[0].mxu0 %v2145
      %v2308 = vpop.f32.mrb[0].mxu0
      %v2309 = vadd.f32 0.0, %v2308
      %v2310 = vpop.f32.mrb[0].mxu0
      %2311 = vmatprep.mubr.f32.mxu0 0.0
      %2312 = vmatmul.mubr.f32.gmra.mrb[0].mxu0 %v2148
      %v2313 = vpop.f32.mrb[0].mxu0
      %v2314 = vadd.f32 0.0, %v2313
      %v2315 = vpop.f32.mrb[0].mxu0
      %2316 = vmatprep.mubr.f32.mxu0 0.0
      %2317 = vmatmul.mubr.f32.gmra.mrb[0].mxu0 %v2151
      %v2318 = vpop.f32.mrb[0].mxu0
      %v2319 = vadd.f32 0.0, %v2318
      %v2320 = vpop.f32.mrb[0].mxu0
      %2321 = vmatprep.mubr.f32.mxu0 0.0
      %2322 = vmatmul.mubr.f32.gmra.mrb[0].mxu0 %v2154
      %v2323 = vpop.f32.mrb[0].mxu0
      %v2324 = vadd.f32 0.0, %v2323
      %v2325 = vpop.f32.mrb[0].mxu0
      %2326 = vmatprep.mubr.f32.mxu0 0.0
      %2327 = vmatmul.mubr.f32.gmra.mrb[0].mxu0 %v2157
      %v2328 = vpop.f32.mrb[0].mxu0
      %v2329 = vadd.f32 0.0, %v2328
      %v2330 = vpop.f32.mrb[0].mxu0
      %2331 = vmatprep.mubr.f32.mxu0 0.0
      %2332 = vmatmul.mubr.f32.gmra.mrb[0].mxu0 %v2160
      %v2333 = vpop.f32.mrb[0].mxu0
      %v2334 = vadd.f32 0.0, %v2333
      %v2335 = vpop.f32.mrb[0].mxu0
      %2336 = vmatprep.mubr.f32.mxu0 0.0
      %2337 = vmatmul.mubr.f32.gmra.mrb[0].mxu0 %v2163
      %v2338 = vpop.f32.mrb[0].mxu0
      %v2339 = vadd.f32 0.0, %v2338
      %v2340 = vpop.f32.mrb[0].mxu0
      %2341 = vmatprep.mubr.f32.mxu0 0.0
      %2342 = vmatmul.mubr.f32.gmra.mrb[0].mxu0 %v2166
      %v2343 = vpop.f32.mrb[0].mxu0
      %v2344 = vadd.f32 0.0, %v2343
      %v2345 = vpop.f32.mrb[0].mxu0
      %2346 = vmatprep.mubr.f32.mxu0 0.0
      %2347 = vmatmul.mubr.f32.gmra.mrb[0].mxu0 %v2169
      %v2348 = vpop.f32.mrb[0].mxu0
      %v2349 = vadd.f32 0.0, %v2348
      %v2350 = vpop.f32.mrb[0].mxu0
      %2351 = vmatprep.mubr.f32.mxu0 0.0
      %2352 = vmatmul.mubr.f32.gmra.mrb[0].mxu0 %v2172
      %v2353 = vpop.f32.mrb[0].mxu0
      %v2354 = vadd.f32 0.0, %v2353
      %v2355 = vpop.f32.mrb[0].mxu0
      %2356 = vmatprep.mubr.f32.mxu0 0.0
      %2357 = vmatmul.mubr.f32.gmra.mrb[0].mxu0 %v2175
      %v2358 = vpop.f32.mrb[0].mxu0
      %v2359 = vadd.f32 0.0, %v2358
      %v2360 = vpop.f32.mrb[0].mxu0
      %2361 = vmatprep.mubr.f32.mxu0 0.0
      %2362 = vmatmul.mubr.f32.gmra.mrb[0].mxu0 %v2178
      %v2363 = vpop.f32.mrb[0].mxu0
      %v2364 = vadd.f32 0.0, %v2363
      %v2365 = vpop.f32.mrb[0].mxu0
      %2366 = vmatprep.mubr.f32.mxu0 0.0
      %2367 = vmatmul.mubr.f32.gmra.mrb[0].mxu0 %v2181
      %v2368 = vpop.f32.mrb[0].mxu0
      %v2369 = vadd.f32 0.0, %v2368
      %v2370 = vpop.f32.mrb[0].mxu0
      %2371 = vmatprep.mubr.f32.mxu0 0.0
      %2372 = vmatmul.mubr.f32.gmra.mrb[0].mxu0 %v2184
      %v2373 = vpop.f32.mrb[0].mxu0
      %v2374 = vadd.f32 0.0, %v2373
      %v2375 = vpop.f32.mrb[0].mxu0
      %2376 = vmatprep.mubr.f32.mxu0 0.0
      %2377 = vmatmul.mubr.f32.gmra.mrb[0].mxu0 %v2187
      %v2378 = vpop.f32.mrb[0].mxu0
      %v2379 = vadd.f32 0.0, %v2378
      %v2380 = vpop.f32.mrb[0].mxu0
      %2381 = vmatprep.mubr.f32.mxu0 0.0
      %2382 = vmatmul.mubr.f32.gmra.mrb[0].mxu0 %v2190
      %v2383 = vpop.f32.mrb[0].mxu0
      %v2384 = vadd.f32 0.0, %v2383
      %v2385 = vpop.f32.mrb[0].mxu0
      %2386 = vmatprep.mubr.f32.mxu0 0.0
      %2387 = vmatmul.mubr.f32.gmra.mrb[0].mxu0 %v2193
      %v2388 = vpop.f32.mrb[0].mxu0
      %v2389 = vadd.f32 0.0, %v2388
      %v2390 = vpop.f32.mrb[0].mxu0
      %2391 = vmatprep.mubr.f32.mxu0 0.0
      %2392 = vmatmul.mubr.f32.gmra.mrb[0].mxu0 %v2196
      %v2393 = vpop.f32.mrb[0].mxu0
      %v2394 = vadd.f32 0.0, %v2393
      %v2395 = vpop.f32.mrb[0].mxu0
      %2396 = vmatprep.mubr.f32.mxu0 0.0
      %2397 = vmatmul.mubr.f32.gmra.mrb[0].mxu0 %v2199
      %v2398 = vpop.f32.mrb[0].mxu0
      %v2399 = vadd.f32 0.0, %v2398
      %v2400 = vpop.f32.mrb[0].mxu0
      %2401 = vmatprep.mubr.f32.mxu0 0.0
      %2402 = vmatmul.mubr.f32.gmra.mrb[0].mxu0 %v2202
      %v2403 = vpop.f32.mrb[0].mxu0
      %v2404 = vadd.f32 0.0, %v2403
      %v2405 = vpop.f32.mrb[0].mxu0
      %2406 = vmatprep.mubr.f32.mxu0 0.0
      %2407 = vmatmul.mubr.f32.gmra.mrb[0].mxu0 %v2205
      %v2408 = vpop.f32.mrb[0].mxu0
      %v2409 = vadd.f32 0.0, %v2408
      %v2410 = vpop.f32.mrb[0].mxu0
      %2411 = vmatprep.mubr.f32.mxu0 0.0
      %2412 = vmatmul.mubr.f32.gmra.mrb[0].mxu0 %v2208
      %v2413 = vpop.f32.mrb[0].mxu0
      %v2414 = vadd.f32 0.0, %v2413
      %v2415 = vpop.f32.mrb[0].mxu0
      %2416 = vmatprep.mubr.f32.mxu0 0.0
      %2417 = vmatmul.mubr.f32.gmra.mrb[0].mxu0 %v2211
      %v2418 = vpop.f32.mrb[0].mxu0
      %v2419 = vadd.f32 0.0, %v2418
      %v2420 = vpop.f32.mrb[0].mxu0
      %2421 = vmatprep.mubr.f32.mxu0 0.0
      %2422 = vmatmul.mubr.f32.gmra.mrb[0].mxu0 %v2214
      %v2423 = vpop.f32.mrb[0].mxu0
      %v2424 = vadd.f32 0.0, %v2423
      %v2425 = vpop.f32.mrb[0].mxu0
      %2426 = vmatprep.mubr.f32.mxu0 0.0
      %2427 = vmatmul.mubr.f32.gmra.mrb[0].mxu0 %v2217
      %v2428 = vpop.f32.mrb[0].mxu0
      %v2429 = vadd.f32 0.0, %v2428
      %v2430 = vpop.f32.mrb[0].mxu0
      %2431 = vmatprep.mubr.f32.mxu0 0.0
      %2432 = vmatmul.mubr.f32.gmra.mrb[0].mxu0 %v2220
      %v2433 = vpop.f32.mrb[0].mxu0
      %v2434 = vadd.f32 0.0, %v2433
      %v2435 = vpop.f32.mrb[0].mxu0
      %2436 = vmatprep.mubr.f32.mxu0 0.0
      %2437 = vmatmul.mubr.f32.gmra.mrb[0].mxu0 %v2223
      %v2438 = vpop.f32.mrb[0].mxu0
      %v2439 = vadd.f32 0.0, %v2438
      %v2440 = vpop.f32.mrb[0].mxu0
      %2441 = vmatprep.mubr.f32.mxu0 0.0
      %2442 = vmatmul.mubr.f32.gmra.mrb[0].mxu0 %v2226
      %v2443 = vpop.f32.mrb[0].mxu0
      %v2444 = vadd.f32 0.0, %v2443
      %v2445 = vpop.f32.mrb[0].mxu0
      %2446 = vmatprep.mubr.f32.mxu0 0.0
      %2447 = vmatmul.mubr.f32.gmra.mrb[0].mxu0 %v2229
      %v2448 = vpop.f32.mrb[0].mxu0
      %v2449 = vadd.f32 0.0, %v2448
      %v2450 = vpop.f32.mrb[0].mxu0
      %2451 = vmatprep.mubr.f32.mxu0 0.0
      %2452 = vmatmul.mubr.f32.gmra.mrb[0].mxu0 %v2232
      %v2453 = vpop.f32.mrb[0].mxu0
      %v2454 = vadd.f32 0.0, %v2453
      %v2455 = vpop.f32.mrb[0].mxu0
      %2456 = vmatprep.mubr.f32.mxu0 0.0
      %2457 = vmatmul.mubr.f32.gmra.mrb[0].mxu0 %v2235
      %v2458 = vpop.f32.mrb[0].mxu0
      %v2459 = vadd.f32 0.0, %v2458
      %v2460 = vpop.f32.mrb[0].mxu0
      %2461 = vdwg.mxu0
      %v2462 = vadd.f32 %v530, %v2304
      %v2463 = vadd.f32 %v530, %v2309
      %v2464 = vadd.f32 %v530, %v2314
      %v2465 = vadd.f32 %v530, %v2319
      %v2466 = vadd.f32 %v530, %v2324
      %v2467 = vadd.f32 %v530, %v2329
      %v2468 = vadd.f32 %v530, %v2334
      %v2469 = vadd.f32 %v530, %v2339
      %v2470 = vadd.f32 %v530, %v2344
      %v2471 = vadd.f32 %v530, %v2349
      %v2472 = vadd.f32 %v530, %v2354
      %v2473 = vadd.f32 %v530, %v2359
      %v2474 = vadd.f32 %v530, %v2364
      %v2475 = vadd.f32 %v530, %v2369
      %v2476 = vadd.f32 %v530, %v2374
      %v2477 = vadd.f32 %v530, %v2379
      %v2478 = vadd.f32 %v530, %v2384
      %v2479 = vadd.f32 %v530, %v2389
      %v2480 = vadd.f32 %v530, %v2394
      %v2481 = vadd.f32 %v530, %v2399
      %v2482 = vadd.f32 %v530, %v2404
      %v2483 = vadd.f32 %v530, %v2409
      %v2484 = vadd.f32 %v530, %v2414
      %v2485 = vadd.f32 %v530, %v2419
      %v2486 = vadd.f32 %v530, %v2424
      %v2487 = vadd.f32 %v530, %v2429
      %v2488 = vadd.f32 %v530, %v2434
      %v2489 = vadd.f32 %v530, %v2439
      %v2490 = vadd.f32 %v530, %v2444
      %v2491 = vadd.f32 %v530, %v2449
      %v2492 = vadd.f32 %v530, %v2454
      %v2493 = vadd.f32 %v530, %v2459
      %2526 = vrot.lane.b32.xlu0 %v2462, 4
      %v2527 = vpop.permute.xlu0 %2526
      %2528 = vrot.lane.b32.xlu0 %v2463, 4
      %v2529 = vpop.permute.xlu0 %2528
      %2530 = vrot.lane.b32.xlu0 %v2464, 4
      %v2531 = vpop.permute.xlu0 %2530
      %2532 = vrot.lane.b32.xlu0 %v2465, 4
      %v2533 = vpop.permute.xlu0 %2532
      %2534 = vrot.lane.b32.xlu0 %v2466, 4
      %v2535 = vpop.permute.xlu0 %2534
      %2536 = vrot.lane.b32.xlu0 %v2467, 4
      %v2537 = vpop.permute.xlu0 %2536
      %2538 = vrot.lane.b32.xlu0 %v2468, 4
      %v2539 = vpop.permute.xlu0 %2538
      %2540 = vrot.lane.b32.xlu0 %v2469, 4
      %v2541 = vpop.permute.xlu0 %2540
      %2542 = vrot.lane.b32.xlu0 %v2470, 4
      %v2543 = vpop.permute.xlu0 %2542
      %2544 = vrot.lane.b32.xlu0 %v2471, 4
      %v2545 = vpop.permute.xlu0 %2544
      %2546 = vrot.lane.b32.xlu0 %v2472, 4
      %v2547 = vpop.permute.xlu0 %2546
      %2548 = vrot.lane.b32.xlu0 %v2473, 4
      %v2549 = vpop.permute.xlu0 %2548
      %2550 = vrot.lane.b32.xlu0 %v2474, 4
      %v2551 = vpop.permute.xlu0 %2550
      %2552 = vrot.lane.b32.xlu0 %v2475, 4
      %v2553 = vpop.permute.xlu0 %2552
      %2554 = vrot.lane.b32.xlu0 %v2476, 4
      %v2555 = vpop.permute.xlu0 %2554
      %2556 = vrot.lane.b32.xlu0 %v2477, 4
      %v2557 = vpop.permute.xlu0 %2556
      %2558 = vrot.lane.b32.xlu0 %v2478, 4
      %v2559 = vpop.permute.xlu0 %2558
      %2560 = vrot.lane.b32.xlu0 %v2479, 4
      %v2561 = vpop.permute.xlu0 %2560
      %2562 = vrot.lane.b32.xlu0 %v2480, 4
      %v2563 = vpop.permute.xlu0 %2562
      %2564 = vrot.lane.b32.xlu0 %v2481, 4
      %v2565 = vpop.permute.xlu0 %2564
      %2566 = vrot.lane.b32.xlu0 %v2482, 4
      %v2567 = vpop.permute.xlu0 %2566
      %2568 = vrot.lane.b32.xlu0 %v2483, 4
      %v2569 = vpop.permute.xlu0 %2568
      %2570 = vrot.lane.b32.xlu0 %v2484, 4
      %v2571 = vpop.permute.xlu0 %2570
      %2572 = vrot.lane.b32.xlu0 %v2485, 4
      %v2573 = vpop.permute.xlu0 %2572
      %2574 = vrot.lane.b32.xlu0 %v2486, 4
      %v2575 = vpop.permute.xlu0 %2574
      %2576 = vrot.lane.b32.xlu0 %v2487, 4
      %v2577 = vpop.permute.xlu0 %2576
      %2578 = vrot.lane.b32.xlu0 %v2488, 4
      %v2579 = vpop.permute.xlu0 %2578
      %2580 = vrot.lane.b32.xlu0 %v2489, 4
      %v2581 = vpop.permute.xlu0 %2580
      %2582 = vrot.lane.b32.xlu0 %v2490, 4
      %v2583 = vpop.permute.xlu0 %2582
      %2584 = vrot.lane.b32.xlu0 %v2491, 4
      %v2585 = vpop.permute.xlu0 %2584
      %2586 = vrot.lane.b32.xlu0 %v2492, 4
      %v2587 = vpop.permute.xlu0 %2586
      %2588 = vrot.lane.b32.xlu0 %v2493, 4
      %v2589 = vpop.permute.xlu0 %2588
      %vm2622 = vcmask 64544
      %2623 = vst.msk [vmem:[%s391] sm:$0xff] %vm2622, %v2527
      %2624 = vst.msk [vmem:[%s391 + $0x8] sm:$0xff] %vm2622, %v2529
      %2625 = vst.msk [vmem:[%s391 + $0x20] sm:$0xff] %vm2622, %v2531
      %2626 = vst.msk [vmem:[%s391 + $0x28] sm:$0xff] %vm2622, %v2533
      %2627 = vst.msk [vmem:[%s391 + $0x40] sm:$0xff] %vm2622, %v2535
      %2628 = vst.msk [vmem:[%s391 + $0x48] sm:$0xff] %vm2622, %v2537
      %2629 = vst.msk [vmem:[%s391 + $0x60] sm:$0xff] %vm2622, %v2539
      %2630 = vst.msk [vmem:[%s391 + $0x68] sm:$0xff] %vm2622, %v2541
      %2631 = vst.msk [vmem:[%s391 + $0x80] sm:$0xff] %vm2622, %v2543
      %2632 = vst.msk [vmem:[%s391 + $0x88] sm:$0xff] %vm2622, %v2545
      %2633 = vst.msk [vmem:[%s391 + $0xa0] sm:$0xff] %vm2622, %v2547
      %2634 = vst.msk [vmem:[%s391 + $0xa8] sm:$0xff] %vm2622, %v2549
      %2635 = vst.msk [vmem:[%s391 + $0xc0] sm:$0xff] %vm2622, %v2551
      %2636 = vst.msk [vmem:[%s391 + $0xc8] sm:$0xff] %vm2622, %v2553
      %2637 = vst.msk [vmem:[%s391 + $0xe0] sm:$0xff] %vm2622, %v2555
      %2638 = vst.msk [vmem:[%s391 + $0xe8] sm:$0xff] %vm2622, %v2557
      %2639 = vst.msk [vmem:[%s391 + $0x100] sm:$0xff] %vm2622, %v2559
      %2640 = vst.msk [vmem:[%s391 + $0x108] sm:$0xff] %vm2622, %v2561
      %2641 = vst.msk [vmem:[%s391 + $0x120] sm:$0xff] %vm2622, %v2563
      %2642 = vst.msk [vmem:[%s391 + $0x128] sm:$0xff] %vm2622, %v2565
      %2643 = vst.msk [vmem:[%s391 + $0x140] sm:$0xff] %vm2622, %v2567
      %2644 = vst.msk [vmem:[%s391 + $0x148] sm:$0xff] %vm2622, %v2569
      %2645 = vst.msk [vmem:[%s391 + $0x160] sm:$0xff] %vm2622, %v2571
      %2646 = vst.msk [vmem:[%s391 + $0x168] sm:$0xff] %vm2622, %v2573
      %2647 = vst.msk [vmem:[%s391 + $0x180] sm:$0xff] %vm2622, %v2575
      %2648 = vst.msk [vmem:[%s391 + $0x188] sm:$0xff] %vm2622, %v2577
      %2649 = vst.msk [vmem:[%s391 + $0x1a0] sm:$0xff] %vm2622, %v2579
      %2650 = vst.msk [vmem:[%s391 + $0x1a8] sm:$0xff] %vm2622, %v2581
      %2651 = vst.msk [vmem:[%s391 + $0x1c0] sm:$0xff] %vm2622, %v2583
      %2652 = vst.msk [vmem:[%s391 + $0x1c8] sm:$0xff] %vm2622, %v2585
      %2653 = vst.msk [vmem:[%s391 + $0x1e0] sm:$0xff] %vm2622, %v2587
      %2654 = vst.msk [vmem:[%s391 + $0x1e8] sm:$0xff] %vm2622, %v2589
      %v2655 = vld [vmem:[%s462] sm:$0xff]
      %v2656 = vld [vmem:[%s462 + $0x8] sm:$0xff]
      %v2657 = vld [vmem:[%s462 + $0x18] sm:$0xff]
      %v2658 = vld [vmem:[%s462 + $0x20] sm:$0xff]
      %v2659 = vld [vmem:[%s462 + $0x30] sm:$0xff]
      %v2660 = vld [vmem:[%s462 + $0x38] sm:$0xff]
      %v2661 = vld [vmem:[%s462 + $0x48] sm:$0xff]
      %v2662 = vld [vmem:[%s462 + $0x50] sm:$0xff]
      %v2663 = vld [vmem:[%s462 + $0x60] sm:$0xff]
      %v2664 = vld [vmem:[%s462 + $0x68] sm:$0xff]
      %v2665 = vld [vmem:[%s462 + $0x78] sm:$0xff]
      %v2666 = vld [vmem:[%s462 + $0x80] sm:$0xff]
      %v2667 = vld [vmem:[%s462 + $0x90] sm:$0xff]
      %v2668 = vld [vmem:[%s462 + $0x98] sm:$0xff]
      %v2669 = vld [vmem:[%s462 + $0xa8] sm:$0xff]
      %v2670 = vld [vmem:[%s462 + $0xb0] sm:$0xff]
      %v2671 = vld [vmem:[%s462 + $0xc0] sm:$0xff]
      %v2672 = vld [vmem:[%s462 + $0xc8] sm:$0xff]
      %v2673 = vld [vmem:[%s462 + $0xd8] sm:$0xff]
      %v2674 = vld [vmem:[%s462 + $0xe0] sm:$0xff]
      %v2675 = vld [vmem:[%s462 + $0xf0] sm:$0xff]
      %v2676 = vld [vmem:[%s462 + $0xf8] sm:$0xff]
      %v2677 = vld [vmem:[%s462 + $0x108] sm:$0xff]
      %v2678 = vld [vmem:[%s462 + $0x110] sm:$0xff]
      %v2679 = vld [vmem:[%s462 + $0x120] sm:$0xff]
      %v2680 = vld [vmem:[%s462 + $0x128] sm:$0xff]
      %v2681 = vld [vmem:[%s462 + $0x138] sm:$0xff]
      %v2682 = vld [vmem:[%s462 + $0x140] sm:$0xff]
      %v2683 = vld [vmem:[%s462 + $0x150] sm:$0xff]
      %v2684 = vld [vmem:[%s462 + $0x158] sm:$0xff]
      %v2685 = vld [vmem:[%s462 + $0x168] sm:$0xff]
      %v2686 = vld [vmem:[%s462 + $0x170] sm:$0xff]
      %v2687 = vld [vmem:[%s462 + $0x1] sm:$0xff]
      %v2688 = vld [vmem:[%s462 + $0x9] sm:$0xff]
      %v2689 = vld [vmem:[%s462 + $0x19] sm:$0xff]
      %v2690 = vld [vmem:[%s462 + $0x21] sm:$0xff]
      %v2691 = vld [vmem:[%s462 + $0x31] sm:$0xff]
      %v2692 = vld [vmem:[%s462 + $0x39] sm:$0xff]
      %v2693 = vld [vmem:[%s462 + $0x49] sm:$0xff]
      %v2694 = vld [vmem:[%s462 + $0x51] sm:$0xff]
      %v2695 = vld [vmem:[%s462 + $0x61] sm:$0xff]
      %v2696 = vld [vmem:[%s462 + $0x69] sm:$0xff]
      %v2697 = vld [vmem:[%s462 + $0x79] sm:$0xff]
      %v2698 = vld [vmem:[%s462 + $0x81] sm:$0xff]
      %v2699 = vld [vmem:[%s462 + $0x91] sm:$0xff]
      %v2700 = vld [vmem:[%s462 + $0x99] sm:$0xff]
      %v2701 = vld [vmem:[%s462 + $0xa9] sm:$0xff]
      %v2702 = vld [vmem:[%s462 + $0xb1] sm:$0xff]
      %v2703 = vld [vmem:[%s462 + $0xc1] sm:$0xff]
      %v2704 = vld [vmem:[%s462 + $0xc9] sm:$0xff]
      %v2705 = vld [vmem:[%s462 + $0xd9] sm:$0xff]
      %v2706 = vld [vmem:[%s462 + $0xe1] sm:$0xff]
      %v2707 = vld [vmem:[%s462 + $0xf1] sm:$0xff]
      %v2708 = vld [vmem:[%s462 + $0xf9] sm:$0xff]
      %v2709 = vld [vmem:[%s462 + $0x109] sm:$0xff]
      %v2710 = vld [vmem:[%s462 + $0x111] sm:$0xff]
      %v2711 = vld [vmem:[%s462 + $0x121] sm:$0xff]
      %v2712 = vld [vmem:[%s462 + $0x129] sm:$0xff]
      %v2713 = vld [vmem:[%s462 + $0x139] sm:$0xff]
      %v2714 = vld [vmem:[%s462 + $0x141] sm:$0xff]
      %v2715 = vld [vmem:[%s462 + $0x151] sm:$0xff]
      %v2716 = vld [vmem:[%s462 + $0x159] sm:$0xff]
      %v2717 = vld [vmem:[%s462 + $0x169] sm:$0xff]
      %v2718 = vld [vmem:[%s462 + $0x171] sm:$0xff]
      %s2719 = scalar_lea.vmem [#allocation2], 48
      %v2720 = vld [vmem:[%s2719] sm:$0xff]
      %v2721 = vld [vmem:[%s2719 + $0x8] sm:$0xff]
      %v2722 = vld [vmem:[%s2719 + $0x18] sm:$0xff]
      %v2723 = vld [vmem:[%s2719 + $0x20] sm:$0xff]
      %v2724 = vld [vmem:[%s2719 + $0x30] sm:$0xff]
      %v2725 = vld [vmem:[%s2719 + $0x38] sm:$0xff]
      %v2726 = vld [vmem:[%s2719 + $0x48] sm:$0xff]
      %v2727 = vld [vmem:[%s2719 + $0x50] sm:$0xff]
      %v2728 = vld [vmem:[%s2719 + $0x60] sm:$0xff]
      %v2729 = vld [vmem:[%s2719 + $0x68] sm:$0xff]
      %v2730 = vld [vmem:[%s2719 + $0x78] sm:$0xff]
      %v2731 = vld [vmem:[%s2719 + $0x80] sm:$0xff]
      %v2732 = vld [vmem:[%s2719 + $0x90] sm:$0xff]
      %v2733 = vld [vmem:[%s2719 + $0x98] sm:$0xff]
      %v2734 = vld [vmem:[%s2719 + $0xa8] sm:$0xff]
      %v2735 = vld [vmem:[%s2719 + $0xb0] sm:$0xff]
      %v2736 = vld [vmem:[%s2719 + $0xc0] sm:$0xff]
      %v2737 = vld [vmem:[%s2719 + $0xc8] sm:$0xff]
      %v2738 = vld [vmem:[%s2719 + $0xd8] sm:$0xff]
      %v2739 = vld [vmem:[%s2719 + $0xe0] sm:$0xff]
      %v2740 = vld [vmem:[%s2719 + $0xf0] sm:$0xff]
      %v2741 = vld [vmem:[%s2719 + $0xf8] sm:$0xff]
      %v2742 = vld [vmem:[%s2719 + $0x108] sm:$0xff]
      %v2743 = vld [vmem:[%s2719 + $0x110] sm:$0xff]
      %v2744 = vld [vmem:[%s2719 + $0x120] sm:$0xff]
      %v2745 = vld [vmem:[%s2719 + $0x128] sm:$0xff]
      %v2746 = vld [vmem:[%s2719 + $0x138] sm:$0xff]
      %v2747 = vld [vmem:[%s2719 + $0x140] sm:$0xff]
      %v2748 = vld [vmem:[%s2719 + $0x150] sm:$0xff]
      %v2749 = vld [vmem:[%s2719 + $0x158] sm:$0xff]
      %v2750 = vld [vmem:[%s2719 + $0x168] sm:$0xff]
      %v2751 = vld [vmem:[%s2719 + $0x170] sm:$0xff]
      %v2752 = vld [vmem:[%s2719 + $0x1] sm:$0xff]
      %v2753 = vld [vmem:[%s2719 + $0x9] sm:$0xff]
      %v2754 = vld [vmem:[%s2719 + $0x19] sm:$0xff]
      %v2755 = vld [vmem:[%s2719 + $0x21] sm:$0xff]
      %v2756 = vld [vmem:[%s2719 + $0x31] sm:$0xff]
      %v2757 = vld [vmem:[%s2719 + $0x39] sm:$0xff]
      %v2758 = vld [vmem:[%s2719 + $0x49] sm:$0xff]
      %v2759 = vld [vmem:[%s2719 + $0x51] sm:$0xff]
      %v2760 = vld [vmem:[%s2719 + $0x61] sm:$0xff]
      %v2761 = vld [vmem:[%s2719 + $0x69] sm:$0xff]
      %v2762 = vld [vmem:[%s2719 + $0x79] sm:$0xff]
      %v2763 = vld [vmem:[%s2719 + $0x81] sm:$0xff]
      %v2764 = vld [vmem:[%s2719 + $0x91] sm:$0xff]
      %v2765 = vld [vmem:[%s2719 + $0x99] sm:$0xff]
      %v2766 = vld [vmem:[%s2719 + $0xa9] sm:$0xff]
      %v2767 = vld [vmem:[%s2719 + $0xb1] sm:$0xff]
      %v2768 = vld [vmem:[%s2719 + $0xc1] sm:$0xff]
      %v2769 = vld [vmem:[%s2719 + $0xc9] sm:$0xff]
      %v2770 = vld [vmem:[%s2719 + $0xd9] sm:$0xff]
      %v2771 = vld [vmem:[%s2719 + $0xe1] sm:$0xff]
      %v2772 = vld [vmem:[%s2719 + $0xf1] sm:$0xff]
      %v2773 = vld [vmem:[%s2719 + $0xf9] sm:$0xff]
      %v2774 = vld [vmem:[%s2719 + $0x109] sm:$0xff]
      %v2775 = vld [vmem:[%s2719 + $0x111] sm:$0xff]
      %v2776 = vld [vmem:[%s2719 + $0x121] sm:$0xff]
      %v2777 = vld [vmem:[%s2719 + $0x129] sm:$0xff]
      %v2778 = vld [vmem:[%s2719 + $0x139] sm:$0xff]
      %v2779 = vld [vmem:[%s2719 + $0x141] sm:$0xff]
      %v2780 = vld [vmem:[%s2719 + $0x151] sm:$0xff]
      %v2781 = vld [vmem:[%s2719 + $0x159] sm:$0xff]
      %v2782 = vld [vmem:[%s2719 + $0x169] sm:$0xff]
      %v2783 = vld [vmem:[%s2719 + $0x171] sm:$0xff]
      %2816 = vrot.lane.b32.xlu0 %v2687, 4
      %v2817 = vpop.permute.xlu0 %2816
      %2818 = vrot.lane.b32.xlu0 %v2688, 4
      %v2819 = vpop.permute.xlu0 %2818
      %2820 = vrot.lane.b32.xlu0 %v2689, 4
      %v2821 = vpop.permute.xlu0 %2820
      %2822 = vrot.lane.b32.xlu0 %v2690, 4
      %v2823 = vpop.permute.xlu0 %2822
      %2824 = vrot.lane.b32.xlu0 %v2691, 4
      %v2825 = vpop.permute.xlu0 %2824
      %2826 = vrot.lane.b32.xlu0 %v2692, 4
      %v2827 = vpop.permute.xlu0 %2826
      %2828 = vrot.lane.b32.xlu0 %v2693, 4
      %v2829 = vpop.permute.xlu0 %2828
      %2830 = vrot.lane.b32.xlu0 %v2694, 4
      %v2831 = vpop.permute.xlu0 %2830
      %2832 = vrot.lane.b32.xlu0 %v2695, 4
      %v2833 = vpop.permute.xlu0 %2832
      %2834 = vrot.lane.b32.xlu0 %v2696, 4
      %v2835 = vpop.permute.xlu0 %2834
      %2836 = vrot.lane.b32.xlu0 %v2697, 4
      %v2837 = vpop.permute.xlu0 %2836
      %2838 = vrot.lane.b32.xlu0 %v2698, 4
      %v2839 = vpop.permute.xlu0 %2838
      %2840 = vrot.lane.b32.xlu0 %v2699, 4
      %v2841 = vpop.permute.xlu0 %2840
      %2842 = vrot.lane.b32.xlu0 %v2700, 4
      %v2843 = vpop.permute.xlu0 %2842
      %2844 = vrot.lane.b32.xlu0 %v2701, 4
      %v2845 = vpop.permute.xlu0 %2844
      %2846 = vrot.lane.b32.xlu0 %v2702, 4
      %v2847 = vpop.permute.xlu0 %2846
      %2848 = vrot.lane.b32.xlu0 %v2703, 4
      %v2849 = vpop.permute.xlu0 %2848
      %2850 = vrot.lane.b32.xlu0 %v2704, 4
      %v2851 = vpop.permute.xlu0 %2850
      %2852 = vrot.lane.b32.xlu0 %v2705, 4
      %v2853 = vpop.permute.xlu0 %2852
      %2854 = vrot.lane.b32.xlu0 %v2706, 4
      %v2855 = vpop.permute.xlu0 %2854
      %2856 = vrot.lane.b32.xlu0 %v2707, 4
      %v2857 = vpop.permute.xlu0 %2856
      %2858 = vrot.lane.b32.xlu0 %v2708, 4
      %v2859 = vpop.permute.xlu0 %2858
      %2860 = vrot.lane.b32.xlu0 %v2709, 4
      %v2861 = vpop.permute.xlu0 %2860
      %2862 = vrot.lane.b32.xlu0 %v2710, 4
      %v2863 = vpop.permute.xlu0 %2862
      %2864 = vrot.lane.b32.xlu0 %v2711, 4
      %v2865 = vpop.permute.xlu0 %2864
      %2866 = vrot.lane.b32.xlu0 %v2712, 4
      %v2867 = vpop.permute.xlu0 %2866
      %2868 = vrot.lane.b32.xlu0 %v2713, 4
      %v2869 = vpop.permute.xlu0 %2868
      %2870 = vrot.lane.b32.xlu0 %v2714, 4
      %v2871 = vpop.permute.xlu0 %2870
      %2872 = vrot.lane.b32.xlu0 %v2715, 4
      %v2873 = vpop.permute.xlu0 %2872
      %2874 = vrot.lane.b32.xlu0 %v2716, 4
      %v2875 = vpop.permute.xlu0 %2874
      %2876 = vrot.lane.b32.xlu0 %v2717, 4
      %v2877 = vpop.permute.xlu0 %2876
      %2878 = vrot.lane.b32.xlu0 %v2718, 4
      %v2879 = vpop.permute.xlu0 %2878
      %2944 = vrot.lane.b32.xlu0 %v2720, 8
      %v2945 = vpop.permute.xlu0 %2944
      %2946 = vrot.lane.b32.xlu0 %v2721, 8
      %v2947 = vpop.permute.xlu0 %2946
      %2948 = vrot.lane.b32.xlu0 %v2722, 8
      %v2949 = vpop.permute.xlu0 %2948
      %2950 = vrot.lane.b32.xlu0 %v2723, 8
      %v2951 = vpop.permute.xlu0 %2950
      %2952 = vrot.lane.b32.xlu0 %v2724, 8
      %v2953 = vpop.permute.xlu0 %2952
      %2954 = vrot.lane.b32.xlu0 %v2725, 8
      %v2955 = vpop.permute.xlu0 %2954
      %2956 = vrot.lane.b32.xlu0 %v2726, 8
      %v2957 = vpop.permute.xlu0 %2956
      %2958 = vrot.lane.b32.xlu0 %v2727, 8
      %v2959 = vpop.permute.xlu0 %2958
      %2960 = vrot.lane.b32.xlu0 %v2728, 8
      %v2961 = vpop.permute.xlu0 %2960
      %2962 = vrot.lane.b32.xlu0 %v2729, 8
      %v2963 = vpop.permute.xlu0 %2962
      %2964 = vrot.lane.b32.xlu0 %v2730, 8
      %v2965 = vpop.permute.xlu0 %2964
      %2966 = vrot.lane.b32.xlu0 %v2731, 8
      %v2967 = vpop.permute.xlu0 %2966
      %2968 = vrot.lane.b32.xlu0 %v2732, 8
      %v2969 = vpop.permute.xlu0 %2968
      %2970 = vrot.lane.b32.xlu0 %v2733, 8
      %v2971 = vpop.permute.xlu0 %2970
      %2972 = vrot.lane.b32.xlu0 %v2734, 8
      %v2973 = vpop.permute.xlu0 %2972
      %2974 = vrot.lane.b32.xlu0 %v2735, 8
      %v2975 = vpop.permute.xlu0 %2974
      %2976 = vrot.lane.b32.xlu0 %v2736, 8
      %v2977 = vpop.permute.xlu0 %2976
      %2978 = vrot.lane.b32.xlu0 %v2737, 8
      %v2979 = vpop.permute.xlu0 %2978
      %2980 = vrot.lane.b32.xlu0 %v2738, 8
      %v2981 = vpop.permute.xlu0 %2980
      %2982 = vrot.lane.b32.xlu0 %v2739, 8
      %v2983 = vpop.permute.xlu0 %2982
      %2984 = vrot.lane.b32.xlu0 %v2740, 8
      %v2985 = vpop.permute.xlu0 %2984
      %2986 = vrot.lane.b32.xlu0 %v2741, 8
      %v2987 = vpop.permute.xlu0 %2986
      %2988 = vrot.lane.b32.xlu0 %v2742, 8
      %v2989 = vpop.permute.xlu0 %2988
      %2990 = vrot.lane.b32.xlu0 %v2743, 8
      %v2991 = vpop.permute.xlu0 %2990
      %2992 = vrot.lane.b32.xlu0 %v2744, 8
      %v2993 = vpop.permute.xlu0 %2992
      %2994 = vrot.lane.b32.xlu0 %v2745, 8
      %v2995 = vpop.permute.xlu0 %2994
      %2996 = vrot.lane.b32.xlu0 %v2746, 8
      %v2997 = vpop.permute.xlu0 %2996
      %2998 = vrot.lane.b32.xlu0 %v2747, 8
      %v2999 = vpop.permute.xlu0 %2998
      %3000 = vrot.lane.b32.xlu0 %v2748, 8
      %v3001 = vpop.permute.xlu0 %3000
      %3002 = vrot.lane.b32.xlu0 %v2749, 8
      %v3003 = vpop.permute.xlu0 %3002
      %3004 = vrot.lane.b32.xlu0 %v2750, 8
      %v3005 = vpop.permute.xlu0 %3004
      %3006 = vrot.lane.b32.xlu0 %v2751, 8
      %v3007 = vpop.permute.xlu0 %3006
      %3072 = vrot.lane.b32.xlu0 %v2752, 12
      %v3073 = vpop.permute.xlu0 %3072
      %3074 = vrot.lane.b32.xlu0 %v2753, 12
      %v3075 = vpop.permute.xlu0 %3074
      %3076 = vrot.lane.b32.xlu0 %v2754, 12
      %v3077 = vpop.permute.xlu0 %3076
      %3078 = vrot.lane.b32.xlu0 %v2755, 12
      %v3079 = vpop.permute.xlu0 %3078
      %3080 = vrot.lane.b32.xlu0 %v2756, 12
      %v3081 = vpop.permute.xlu0 %3080
      %3082 = vrot.lane.b32.xlu0 %v2757, 12
      %v3083 = vpop.permute.xlu0 %3082
      %3084 = vrot.lane.b32.xlu0 %v2758, 12
      %v3085 = vpop.permute.xlu0 %3084
      %3086 = vrot.lane.b32.xlu0 %v2759, 12
      %v3087 = vpop.permute.xlu0 %3086
      %3088 = vrot.lane.b32.xlu0 %v2760, 12
      %v3089 = vpop.permute.xlu0 %3088
      %3090 = vrot.lane.b32.xlu0 %v2761, 12
      %v3091 = vpop.permute.xlu0 %3090
      %3092 = vrot.lane.b32.xlu0 %v2762, 12
      %v3093 = vpop.permute.xlu0 %3092
      %3094 = vrot.lane.b32.xlu0 %v2763, 12
      %v3095 = vpop.permute.xlu0 %3094
      %3096 = vrot.lane.b32.xlu0 %v2764, 12
      %v3097 = vpop.permute.xlu0 %3096
      %3098 = vrot.lane.b32.xlu0 %v2765, 12
      %v3099 = vpop.permute.xlu0 %3098
      %3100 = vrot.lane.b32.xlu0 %v2766, 12
      %v3101 = vpop.permute.xlu0 %3100
      %3102 = vrot.lane.b32.xlu0 %v2767, 12
      %v3103 = vpop.permute.xlu0 %3102
      %3104 = vrot.lane.b32.xlu0 %v2768, 12
      %v3105 = vpop.permute.xlu0 %3104
      %3106 = vrot.lane.b32.xlu0 %v2769, 12
      %v3107 = vpop.permute.xlu0 %3106
      %3108 = vrot.lane.b32.xlu0 %v2770, 12
      %v3109 = vpop.permute.xlu0 %3108
      %3110 = vrot.lane.b32.xlu0 %v2771, 12
      %v3111 = vpop.permute.xlu0 %3110
      %3112 = vrot.lane.b32.xlu0 %v2772, 12
      %v3113 = vpop.permute.xlu0 %3112
      %3114 = vrot.lane.b32.xlu0 %v2773, 12
      %v3115 = vpop.permute.xlu0 %3114
      %3116 = vrot.lane.b32.xlu0 %v2774, 12
      %v3117 = vpop.permute.xlu0 %3116
      %3118 = vrot.lane.b32.xlu0 %v2775, 12
      %v3119 = vpop.permute.xlu0 %3118
      %3120 = vrot.lane.b32.xlu0 %v2776, 12
      %v3121 = vpop.permute.xlu0 %3120
      %3122 = vrot.lane.b32.xlu0 %v2777, 12
      %v3123 = vpop.permute.xlu0 %3122
      %3124 = vrot.lane.b32.xlu0 %v2778, 12
      %v3125 = vpop.permute.xlu0 %3124
      %3126 = vrot.lane.b32.xlu0 %v2779, 12
      %v3127 = vpop.permute.xlu0 %3126
      %3128 = vrot.lane.b32.xlu0 %v2780, 12
      %v3129 = vpop.permute.xlu0 %3128
      %3130 = vrot.lane.b32.xlu0 %v2781, 12
      %v3131 = vpop.permute.xlu0 %3130
      %3132 = vrot.lane.b32.xlu0 %v2782, 12
      %v3133 = vpop.permute.xlu0 %3132
      %3134 = vrot.lane.b32.xlu0 %v2783, 12
      %v3135 = vpop.permute.xlu0 %3134
      %v3168 = vsel %vm463, %v2655, %v2817
      %v3169 = vsel %vm463, %v2656, %v2819
      %v3170 = vsel %vm463, %v2657, %v2821
      %v3171 = vsel %vm463, %v2658, %v2823
      %v3172 = vsel %vm463, %v2659, %v2825
      %v3173 = vsel %vm463, %v2660, %v2827
      %v3174 = vsel %vm463, %v2661, %v2829
      %v3175 = vsel %vm463, %v2662, %v2831
      %v3176 = vsel %vm463, %v2663, %v2833
      %v3177 = vsel %vm463, %v2664, %v2835
      %v3178 = vsel %vm463, %v2665, %v2837
      %v3179 = vsel %vm463, %v2666, %v2839
      %v3180 = vsel %vm463, %v2667, %v2841
      %v3181 = vsel %vm463, %v2668, %v2843
      %v3182 = vsel %vm463, %v2669, %v2845
      %v3183 = vsel %vm463, %v2670, %v2847
      %v3184 = vsel %vm463, %v2671, %v2849
      %v3185 = vsel %vm463, %v2672, %v2851
      %v3186 = vsel %vm463, %v2673, %v2853
      %v3187 = vsel %vm463, %v2674, %v2855
      %v3188 = vsel %vm463, %v2675, %v2857
      %v3189 = vsel %vm463, %v2676, %v2859
      %v3190 = vsel %vm463, %v2677, %v2861
      %v3191 = vsel %vm463, %v2678, %v2863
      %v3192 = vsel %vm463, %v2679, %v2865
      %v3193 = vsel %vm463, %v2680, %v2867
      %v3194 = vsel %vm463, %v2681, %v2869
      %v3195 = vsel %vm463, %v2682, %v2871
      %v3196 = vsel %vm463, %v2683, %v2873
      %v3197 = vsel %vm463, %v2684, %v2875
      %v3198 = vsel %vm463, %v2685, %v2877
      %v3199 = vsel %vm463, %v2686, %v2879
      %v3200 = vsel %vm1076, %v3168, %v2945
      %v3201 = vsel %vm1076, %v3169, %v2947
      %v3202 = vsel %vm1076, %v3170, %v2949
      %v3203 = vsel %vm1076, %v3171, %v2951
      %v3204 = vsel %vm1076, %v3172, %v2953
      %v3205 = vsel %vm1076, %v3173, %v2955
      %v3206 = vsel %vm1076, %v3174, %v2957
      %v3207 = vsel %vm1076, %v3175, %v2959
      %v3208 = vsel %vm1076, %v3176, %v2961
      %v3209 = vsel %vm1076, %v3177, %v2963
      %v3210 = vsel %vm1076, %v3178, %v2965
      %v3211 = vsel %vm1076, %v3179, %v2967
      %v3212 = vsel %vm1076, %v3180, %v2969
      %v3213 = vsel %vm1076, %v3181, %v2971
      %v3214 = vsel %vm1076, %v3182, %v2973
      %v3215 = vsel %vm1076, %v3183, %v2975
      %v3216 = vsel %vm1076, %v3184, %v2977
      %v3217 = vsel %vm1076, %v3185, %v2979
      %v3218 = vsel %vm1076, %v3186, %v2981
      %v3219 = vsel %vm1076, %v3187, %v2983
      %v3220 = vsel %vm1076, %v3188, %v2985
      %v3221 = vsel %vm1076, %v3189, %v2987
      %v3222 = vsel %vm1076, %v3190, %v2989
      %v3223 = vsel %vm1076, %v3191, %v2991
      %v3224 = vsel %vm1076, %v3192, %v2993
      %v3225 = vsel %vm1076, %v3193, %v2995
      %v3226 = vsel %vm1076, %v3194, %v2997
      %v3227 = vsel %vm1076, %v3195, %v2999
      %v3228 = vsel %vm1076, %v3196, %v3001
      %v3229 = vsel %vm1076, %v3197, %v3003
      %v3230 = vsel %vm1076, %v3198, %v3005
      %v3231 = vsel %vm1076, %v3199, %v3007
      %v3232 = vsel %vm1109, %v3200, %v3073
      %v3233 = vsel %vm1109, %v3201, %v3075
      %v3234 = vsel %vm1109, %v3202, %v3077
      %v3235 = vsel %vm1109, %v3203, %v3079
      %v3236 = vsel %vm1109, %v3204, %v3081
      %v3237 = vsel %vm1109, %v3205, %v3083
      %v3238 = vsel %vm1109, %v3206, %v3085
      %v3239 = vsel %vm1109, %v3207, %v3087
      %v3240 = vsel %vm1109, %v3208, %v3089
      %v3241 = vsel %vm1109, %v3209, %v3091
      %v3242 = vsel %vm1109, %v3210, %v3093
      %v3243 = vsel %vm1109, %v3211, %v3095
      %v3244 = vsel %vm1109, %v3212, %v3097
      %v3245 = vsel %vm1109, %v3213, %v3099
      %v3246 = vsel %vm1109, %v3214, %v3101
      %v3247 = vsel %vm1109, %v3215, %v3103
      %v3248 = vsel %vm1109, %v3216, %v3105
      %v3249 = vsel %vm1109, %v3217, %v3107
      %v3250 = vsel %vm1109, %v3218, %v3109
      %v3251 = vsel %vm1109, %v3219, %v3111
      %v3252 = vsel %vm1109, %v3220, %v3113
      %v3253 = vsel %vm1109, %v3221, %v3115
      %v3254 = vsel %vm1109, %v3222, %v3117
      %v3255 = vsel %vm1109, %v3223, %v3119
      %v3256 = vsel %vm1109, %v3224, %v3121
      %v3257 = vsel %vm1109, %v3225, %v3123
      %v3258 = vsel %vm1109, %v3226, %v3125
      %v3259 = vsel %vm1109, %v3227, %v3127
      %v3260 = vsel %vm1109, %v3228, %v3129
      %v3261 = vsel %vm1109, %v3229, %v3131
      %v3262 = vsel %vm1109, %v3230, %v3133
      %v3263 = vsel %vm1109, %v3231, %v3135
      %s3264 = scalar_lea.vmem %s3, 32
      %v3265 = vld [vmem:[%s3264] sm:$0xff]
      %v3266 = vld [vmem:[%s3264 + $0x8] sm:$0xff]
      %v3268 = vsel %vm1144, %v3232, 0
      %v3271 = vsel %vm1144, %v3233, 0
      %v3274 = vsel %vm1144, %v3234, 0
      %v3277 = vsel %vm1144, %v3235, 0
      %v3280 = vsel %vm1144, %v3236, 0
      %v3283 = vsel %vm1144, %v3237, 0
      %v3286 = vsel %vm1144, %v3238, 0
      %v3289 = vsel %vm1144, %v3239, 0
      %v3292 = vsel %vm1144, %v3240, 0
      %v3295 = vsel %vm1144, %v3241, 0
      %v3298 = vsel %vm1144, %v3242, 0
      %v3301 = vsel %vm1144, %v3243, 0
      %v3304 = vsel %vm1144, %v3244, 0
      %v3307 = vsel %vm1144, %v3245, 0
      %v3310 = vsel %vm1144, %v3246, 0
      %v3313 = vsel %vm1144, %v3247, 0
      %v3316 = vsel %vm1144, %v3248, 0
      %v3319 = vsel %vm1144, %v3249, 0
      %v3322 = vsel %vm1144, %v3250, 0
      %v3325 = vsel %vm1144, %v3251, 0
      %v3328 = vsel %vm1144, %v3252, 0
      %v3331 = vsel %vm1144, %v3253, 0
      %v3334 = vsel %vm1144, %v3254, 0
      %v3337 = vsel %vm1144, %v3255, 0
      %v3340 = vsel %vm1144, %v3256, 0
      %v3343 = vsel %vm1144, %v3257, 0
      %v3346 = vsel %vm1144, %v3258, 0
      %v3349 = vsel %vm1144, %v3259, 0
      %v3352 = vsel %vm1144, %v3260, 0
      %v3355 = vsel %vm1144, %v3261, 0
      %v3358 = vsel %vm1144, %v3262, 0
      %v3361 = vsel %vm1144, %v3263, 0
      %3363 = vmatprep.subr.mxu0 0.0
      %3364 = vmatpush1.msra.mxu0 %v3265
      %3365 = vmatprep.subr.mxu0 0.0
      %3366 = vmatpush1.msra.mxu0 %v3266
      %3367 = vmatprep.subr.mxu0 0.0
      %3368 = vmatpush1.msra.mxu0 0.0
      %3369 = vmatprep.subr.mxu0 0.0
      %3370 = vmatpush1.msra.mxu0 0.0
      %3371 = vmatprep.subr.mxu0 0.0
      %3372 = vmatpush1.msra.mxu0 0.0
      %3373 = vmatprep.subr.mxu0 0.0
      %3374 = vmatpush1.msra.mxu0 0.0
      %3375 = vmatprep.subr.mxu0 0.0
      %3376 = vmatpush1.msra.mxu0 0.0
      %3377 = vmatprep.subr.mxu0 0.0
      %3378 = vmatpush1.msra.mxu0 0.0
      %3379 = vmatprep.subr.mxu0 0.0
      %3380 = vmatpush1.msra.mxu0 0.0
      %3381 = vmatprep.subr.mxu0 0.0
      %3382 = vmatpush1.msra.mxu0 0.0
      %3383 = vmatprep.subr.mxu0 0.0
      %3384 = vmatpush1.msra.mxu0 0.0
      %3385 = vmatprep.subr.mxu0 0.0
      %3386 = vmatpush1.msra.mxu0 0.0
      %3387 = vmatprep.subr.mxu0 0.0
      %3388 = vmatpush1.msra.mxu0 0.0
      %3389 = vmatprep.subr.mxu0 0.0
      %3390 = vmatpush1.msra.mxu0 0.0
      %3391 = vmatprep.subr.mxu0 0.0
      %3392 = vmatpush1.msra.mxu0 0.0
      %3393 = vmatprep.subr.mxu0 0.0
      %3394 = vmatpush1.msra.mxu0 0.0
      %3395 = vmatprep.subr.mxu0 0.0
      %3396 = vmatpush1.msra.mxu0 0.0
      %3397 = vmatprep.subr.mxu0 0.0
      %3398 = vmatpush1.msra.mxu0 0.0
      %3399 = vmatprep.subr.mxu0 0.0
      %3400 = vmatpush1.msra.mxu0 0.0
      %3401 = vmatprep.subr.mxu0 0.0
      %3402 = vmatpush1.msra.mxu0 0.0
      %3403 = vmatprep.subr.mxu0 0.0
      %3404 = vmatpush1.msra.mxu0 0.0
      %3405 = vmatprep.subr.mxu0 0.0
      %3406 = vmatpush1.msra.mxu0 0.0
      %3407 = vmatprep.subr.mxu0 0.0
      %3408 = vmatpush1.msra.mxu0 0.0
      %3409 = vmatprep.subr.mxu0 0.0
      %3410 = vmatpush1.msra.mxu0 0.0
      %3411 = vmatprep.subr.mxu0 0.0
      %3412 = vmatpush1.msra.mxu0 0.0
      %3413 = vmatprep.subr.mxu0 0.0
      %3414 = vmatpush1.msra.mxu0 0.0
      %3415 = vmatprep.subr.mxu0 0.0
      %3416 = vmatpush1.msra.mxu0 0.0
      %3417 = vmatprep.subr.mxu0 0.0
      %3418 = vmatpush1.msra.mxu0 0.0
      %3419 = vmatprep.subr.mxu0 0.0
      %3420 = vmatpush1.msra.mxu0 0.0
      %3421 = vmatprep.subr.mxu0 0.0
      %3422 = vmatpush1.msra.mxu0 0.0
      %3423 = vmatprep.subr.mxu0 0.0
      %3424 = vmatpush1.msra.mxu0 0.0
      %3425 = vmatprep.subr.mxu0 0.0
      %3426 = vmatpush1.msra.mxu0 0.0
      %3427 = vmatprep.mubr.f32.mxu0 0.0
      %3428 = vmatmul.mubr.f32.gmra.mrb[0].mxu0 %v3268
      %v3429 = vpop.f32.mrb[0].mxu0
      %v3430 = vadd.f32 0.0, %v3429
      %v3431 = vpop.f32.mrb[0].mxu0
      %3432 = vmatprep.mubr.f32.mxu0 0.0
      %3433 = vmatmul.mubr.f32.gmra.mrb[0].mxu0 %v3271
      %v3434 = vpop.f32.mrb[0].mxu0
      %v3435 = vadd.f32 0.0, %v3434
      %v3436 = vpop.f32.mrb[0].mxu0
      %3437 = vmatprep.mubr.f32.mxu0 0.0
      %3438 = vmatmul.mubr.f32.gmra.mrb[0].mxu0 %v3274
      %v3439 = vpop.f32.mrb[0].mxu0
      %v3440 = vadd.f32 0.0, %v3439
      %v3441 = vpop.f32.mrb[0].mxu0
      %3442 = vmatprep.mubr.f32.mxu0 0.0
      %3443 = vmatmul.mubr.f32.gmra.mrb[0].mxu0 %v3277
      %v3444 = vpop.f32.mrb[0].mxu0
      %v3445 = vadd.f32 0.0, %v3444
      %v3446 = vpop.f32.mrb[0].mxu0
      %3447 = vmatprep.mubr.f32.mxu0 0.0
      %3448 = vmatmul.mubr.f32.gmra.mrb[0].mxu0 %v3280
      %v3449 = vpop.f32.mrb[0].mxu0
      %v3450 = vadd.f32 0.0, %v3449
      %v3451 = vpop.f32.mrb[0].mxu0
      %3452 = vmatprep.mubr.f32.mxu0 0.0
      %3453 = vmatmul.mubr.f32.gmra.mrb[0].mxu0 %v3283
      %v3454 = vpop.f32.mrb[0].mxu0
      %v3455 = vadd.f32 0.0, %v3454
      %v3456 = vpop.f32.mrb[0].mxu0
      %3457 = vmatprep.mubr.f32.mxu0 0.0
      %3458 = vmatmul.mubr.f32.gmra.mrb[0].mxu0 %v3286
      %v3459 = vpop.f32.mrb[0].mxu0
      %v3460 = vadd.f32 0.0, %v3459
      %v3461 = vpop.f32.mrb[0].mxu0
      %3462 = vmatprep.mubr.f32.mxu0 0.0
      %3463 = vmatmul.mubr.f32.gmra.mrb[0].mxu0 %v3289
      %v3464 = vpop.f32.mrb[0].mxu0
      %v3465 = vadd.f32 0.0, %v3464
      %v3466 = vpop.f32.mrb[0].mxu0
      %3467 = vmatprep.mubr.f32.mxu0 0.0
      %3468 = vmatmul.mubr.f32.gmra.mrb[0].mxu0 %v3292
      %v3469 = vpop.f32.mrb[0].mxu0
      %v3470 = vadd.f32 0.0, %v3469
      %v3471 = vpop.f32.mrb[0].mxu0
      %3472 = vmatprep.mubr.f32.mxu0 0.0
      %3473 = vmatmul.mubr.f32.gmra.mrb[0].mxu0 %v3295
      %v3474 = vpop.f32.mrb[0].mxu0
      %v3475 = vadd.f32 0.0, %v3474
      %v3476 = vpop.f32.mrb[0].mxu0
      %3477 = vmatprep.mubr.f32.mxu0 0.0
      %3478 = vmatmul.mubr.f32.gmra.mrb[0].mxu0 %v3298
      %v3479 = vpop.f32.mrb[0].mxu0
      %v3480 = vadd.f32 0.0, %v3479
      %v3481 = vpop.f32.mrb[0].mxu0
      %3482 = vmatprep.mubr.f32.mxu0 0.0
      %3483 = vmatmul.mubr.f32.gmra.mrb[0].mxu0 %v3301
      %v3484 = vpop.f32.mrb[0].mxu0
      %v3485 = vadd.f32 0.0, %v3484
      %v3486 = vpop.f32.mrb[0].mxu0
      %3487 = vmatprep.mubr.f32.mxu0 0.0
      %3488 = vmatmul.mubr.f32.gmra.mrb[0].mxu0 %v3304
      %v3489 = vpop.f32.mrb[0].mxu0
      %v3490 = vadd.f32 0.0, %v3489
      %v3491 = vpop.f32.mrb[0].mxu0
      %3492 = vmatprep.mubr.f32.mxu0 0.0
      %3493 = vmatmul.mubr.f32.gmra.mrb[0].mxu0 %v3307
      %v3494 = vpop.f32.mrb[0].mxu0
      %v3495 = vadd.f32 0.0, %v3494
      %v3496 = vpop.f32.mrb[0].mxu0
      %3497 = vmatprep.mubr.f32.mxu0 0.0
      %3498 = vmatmul.mubr.f32.gmra.mrb[0].mxu0 %v3310
      %v3499 = vpop.f32.mrb[0].mxu0
      %v3500 = vadd.f32 0.0, %v3499
      %v3501 = vpop.f32.mrb[0].mxu0
      %3502 = vmatprep.mubr.f32.mxu0 0.0
      %3503 = vmatmul.mubr.f32.gmra.mrb[0].mxu0 %v3313
      %v3504 = vpop.f32.mrb[0].mxu0
      %v3505 = vadd.f32 0.0, %v3504
      %v3506 = vpop.f32.mrb[0].mxu0
      %3507 = vmatprep.mubr.f32.mxu0 0.0
      %3508 = vmatmul.mubr.f32.gmra.mrb[0].mxu0 %v3316
      %v3509 = vpop.f32.mrb[0].mxu0
      %v3510 = vadd.f32 0.0, %v3509
      %v3511 = vpop.f32.mrb[0].mxu0
      %3512 = vmatprep.mubr.f32.mxu0 0.0
      %3513 = vmatmul.mubr.f32.gmra.mrb[0].mxu0 %v3319
      %v3514 = vpop.f32.mrb[0].mxu0
      %v3515 = vadd.f32 0.0, %v3514
      %v3516 = vpop.f32.mrb[0].mxu0
      %3517 = vmatprep.mubr.f32.mxu0 0.0
      %3518 = vmatmul.mubr.f32.gmra.mrb[0].mxu0 %v3322
      %v3519 = vpop.f32.mrb[0].mxu0
      %v3520 = vadd.f32 0.0, %v3519
      %v3521 = vpop.f32.mrb[0].mxu0
      %3522 = vmatprep.mubr.f32.mxu0 0.0
      %3523 = vmatmul.mubr.f32.gmra.mrb[0].mxu0 %v3325
      %v3524 = vpop.f32.mrb[0].mxu0
      %v3525 = vadd.f32 0.0, %v3524
      %v3526 = vpop.f32.mrb[0].mxu0
      %3527 = vmatprep.mubr.f32.mxu0 0.0
      %3528 = vmatmul.mubr.f32.gmra.mrb[0].mxu0 %v3328
      %v3529 = vpop.f32.mrb[0].mxu0
      %v3530 = vadd.f32 0.0, %v3529
      %v3531 = vpop.f32.mrb[0].mxu0
      %3532 = vmatprep.mubr.f32.mxu0 0.0
      %3533 = vmatmul.mubr.f32.gmra.mrb[0].mxu0 %v3331
      %v3534 = vpop.f32.mrb[0].mxu0
      %v3535 = vadd.f32 0.0, %v3534
      %v3536 = vpop.f32.mrb[0].mxu0
      %3537 = vmatprep.mubr.f32.mxu0 0.0
      %3538 = vmatmul.mubr.f32.gmra.mrb[0].mxu0 %v3334
      %v3539 = vpop.f32.mrb[0].mxu0
      %v3540 = vadd.f32 0.0, %v3539
      %v3541 = vpop.f32.mrb[0].mxu0
      %3542 = vmatprep.mubr.f32.mxu0 0.0
      %3543 = vmatmul.mubr.f32.gmra.mrb[0].mxu0 %v3337
      %v3544 = vpop.f32.mrb[0].mxu0
      %v3545 = vadd.f32 0.0, %v3544
      %v3546 = vpop.f32.mrb[0].mxu0
      %3547 = vmatprep.mubr.f32.mxu0 0.0
      %3548 = vmatmul.mubr.f32.gmra.mrb[0].mxu0 %v3340
      %v3549 = vpop.f32.mrb[0].mxu0
      %v3550 = vadd.f32 0.0, %v3549
      %v3551 = vpop.f32.mrb[0].mxu0
      %3552 = vmatprep.mubr.f32.mxu0 0.0
      %3553 = vmatmul.mubr.f32.gmra.mrb[0].mxu0 %v3343
      %v3554 = vpop.f32.mrb[0].mxu0
      %v3555 = vadd.f32 0.0, %v3554
      %v3556 = vpop.f32.mrb[0].mxu0
      %3557 = vmatprep.mubr.f32.mxu0 0.0
      %3558 = vmatmul.mubr.f32.gmra.mrb[0].mxu0 %v3346
      %v3559 = vpop.f32.mrb[0].mxu0
      %v3560 = vadd.f32 0.0, %v3559
      %v3561 = vpop.f32.mrb[0].mxu0
      %3562 = vmatprep.mubr.f32.mxu0 0.0
      %3563 = vmatmul.mubr.f32.gmra.mrb[0].mxu0 %v3349
      %v3564 = vpop.f32.mrb[0].mxu0
      %v3565 = vadd.f32 0.0, %v3564
      %v3566 = vpop.f32.mrb[0].mxu0
      %3567 = vmatprep.mubr.f32.mxu0 0.0
      %3568 = vmatmul.mubr.f32.gmra.mrb[0].mxu0 %v3352
      %v3569 = vpop.f32.mrb[0].mxu0
      %v3570 = vadd.f32 0.0, %v3569
      %v3571 = vpop.f32.mrb[0].mxu0
      %3572 = vmatprep.mubr.f32.mxu0 0.0
      %3573 = vmatmul.mubr.f32.gmra.mrb[0].mxu0 %v3355
      %v3574 = vpop.f32.mrb[0].mxu0
      %v3575 = vadd.f32 0.0, %v3574
      %v3576 = vpop.f32.mrb[0].mxu0
      %3577 = vmatprep.mubr.f32.mxu0 0.0
      %3578 = vmatmul.mubr.f32.gmra.mrb[0].mxu0 %v3358
      %v3579 = vpop.f32.mrb[0].mxu0
      %v3580 = vadd.f32 0.0, %v3579
      %v3581 = vpop.f32.mrb[0].mxu0
      %3582 = vmatprep.mubr.f32.mxu0 0.0
      %3583 = vmatmul.mubr.f32.gmra.mrb[0].mxu0 %v3361
      %v3584 = vpop.f32.mrb[0].mxu0
      %v3585 = vadd.f32 0.0, %v3584
      %v3586 = vpop.f32.mrb[0].mxu0
      %3587 = vdwg.mxu0
      %v3588 = vadd.f32 %v530, %v3430
      %v3589 = vadd.f32 %v530, %v3435
      %v3590 = vadd.f32 %v530, %v3440
      %v3591 = vadd.f32 %v530, %v3445
      %v3592 = vadd.f32 %v530, %v3450
      %v3593 = vadd.f32 %v530, %v3455
      %v3594 = vadd.f32 %v530, %v3460
      %v3595 = vadd.f32 %v530, %v3465
      %v3596 = vadd.f32 %v530, %v3470
      %v3597 = vadd.f32 %v530, %v3475
      %v3598 = vadd.f32 %v530, %v3480
      %v3599 = vadd.f32 %v530, %v3485
      %v3600 = vadd.f32 %v530, %v3490
      %v3601 = vadd.f32 %v530, %v3495
      %v3602 = vadd.f32 %v530, %v3500
      %v3603 = vadd.f32 %v530, %v3505
      %v3604 = vadd.f32 %v530, %v3510
      %v3605 = vadd.f32 %v530, %v3515
      %v3606 = vadd.f32 %v530, %v3520
      %v3607 = vadd.f32 %v530, %v3525
      %v3608 = vadd.f32 %v530, %v3530
      %v3609 = vadd.f32 %v530, %v3535
      %v3610 = vadd.f32 %v530, %v3540
      %v3611 = vadd.f32 %v530, %v3545
      %v3612 = vadd.f32 %v530, %v3550
      %v3613 = vadd.f32 %v530, %v3555
      %v3614 = vadd.f32 %v530, %v3560
      %v3615 = vadd.f32 %v530, %v3565
      %v3616 = vadd.f32 %v530, %v3570
      %v3617 = vadd.f32 %v530, %v3575
      %v3618 = vadd.f32 %v530, %v3580
      %v3619 = vadd.f32 %v530, %v3585
      %s3620 = scalar_lea.vmem %s391, 16
      %3621 = vst.msk [vmem:[%s3620] sm:$0xff] %vm463, %v3588
      %3622 = vst.msk [vmem:[%s3620 + $0x8] sm:$0xff] %vm463, %v3589
      %3623 = vst.msk [vmem:[%s3620 + $0x20] sm:$0xff] %vm463, %v3590
      %3624 = vst.msk [vmem:[%s3620 + $0x28] sm:$0xff] %vm463, %v3591
      %3625 = vst.msk [vmem:[%s3620 + $0x40] sm:$0xff] %vm463, %v3592
      %3626 = vst.msk [vmem:[%s3620 + $0x48] sm:$0xff] %vm463, %v3593
      %3627 = vst.msk [vmem:[%s3620 + $0x60] sm:$0xff] %vm463, %v3594
      %3628 = vst.msk [vmem:[%s3620 + $0x68] sm:$0xff] %vm463, %v3595
      %3629 = vst.msk [vmem:[%s3620 + $0x80] sm:$0xff] %vm463, %v3596
      %3630 = vst.msk [vmem:[%s3620 + $0x88] sm:$0xff] %vm463, %v3597
      %3631 = vst.msk [vmem:[%s3620 + $0xa0] sm:$0xff] %vm463, %v3598
      %3632 = vst.msk [vmem:[%s3620 + $0xa8] sm:$0xff] %vm463, %v3599
      %3633 = vst.msk [vmem:[%s3620 + $0xc0] sm:$0xff] %vm463, %v3600
      %3634 = vst.msk [vmem:[%s3620 + $0xc8] sm:$0xff] %vm463, %v3601
      %3635 = vst.msk [vmem:[%s3620 + $0xe0] sm:$0xff] %vm463, %v3602
      %3636 = vst.msk [vmem:[%s3620 + $0xe8] sm:$0xff] %vm463, %v3603
      %3637 = vst.msk [vmem:[%s3620 + $0x100] sm:$0xff] %vm463, %v3604
      %3638 = vst.msk [vmem:[%s3620 + $0x108] sm:$0xff] %vm463, %v3605
      %3639 = vst.msk [vmem:[%s3620 + $0x120] sm:$0xff] %vm463, %v3606
      %3640 = vst.msk [vmem:[%s3620 + $0x128] sm:$0xff] %vm463, %v3607
      %3641 = vst.msk [vmem:[%s3620 + $0x140] sm:$0xff] %vm463, %v3608
      %3642 = vst.msk [vmem:[%s3620 + $0x148] sm:$0xff] %vm463, %v3609
      %3643 = vst.msk [vmem:[%s3620 + $0x160] sm:$0xff] %vm463, %v3610
      %3644 = vst.msk [vmem:[%s3620 + $0x168] sm:$0xff] %vm463, %v3611
      %3645 = vst.msk [vmem:[%s3620 + $0x180] sm:$0xff] %vm463, %v3612
      %3646 = vst.msk [vmem:[%s3620 + $0x188] sm:$0xff] %vm463, %v3613
      %3647 = vst.msk [vmem:[%s3620 + $0x1a0] sm:$0xff] %vm463, %v3614
      %3648 = vst.msk [vmem:[%s3620 + $0x1a8] sm:$0xff] %vm463, %v3615
      %3649 = vst.msk [vmem:[%s3620 + $0x1c0] sm:$0xff] %vm463, %v3616
      %3650 = vst.msk [vmem:[%s3620 + $0x1c8] sm:$0xff] %vm463, %v3617
      %3651 = vst.msk [vmem:[%s3620 + $0x1e0] sm:$0xff] %vm463, %v3618
      %3652 = vst.msk [vmem:[%s3620 + $0x1e8] sm:$0xff] %vm463, %v3619
      %v3653 = vld [vmem:[%s462 + $0x1] sm:$0xff]
      %v3654 = vld [vmem:[%s462 + $0x9] sm:$0xff]
      %v3655 = vld [vmem:[%s462 + $0x19] sm:$0xff]
      %v3656 = vld [vmem:[%s462 + $0x21] sm:$0xff]
      %v3657 = vld [vmem:[%s462 + $0x31] sm:$0xff]
      %v3658 = vld [vmem:[%s462 + $0x39] sm:$0xff]
      %v3659 = vld [vmem:[%s462 + $0x49] sm:$0xff]
      %v3660 = vld [vmem:[%s462 + $0x51] sm:$0xff]
      %v3661 = vld [vmem:[%s462 + $0x61] sm:$0xff]
      %v3662 = vld [vmem:[%s462 + $0x69] sm:$0xff]
      %v3663 = vld [vmem:[%s462 + $0x79] sm:$0xff]
      %v3664 = vld [vmem:[%s462 + $0x81] sm:$0xff]
      %v3665 = vld [vmem:[%s462 + $0x91] sm:$0xff]
      %v3666 = vld [vmem:[%s462 + $0x99] sm:$0xff]
      %v3667 = vld [vmem:[%s462 + $0xa9] sm:$0xff]
      %v3668 = vld [vmem:[%s462 + $0xb1] sm:$0xff]
      %v3669 = vld [vmem:[%s462 + $0xc1] sm:$0xff]
      %v3670 = vld [vmem:[%s462 + $0xc9] sm:$0xff]
      %v3671 = vld [vmem:[%s462 + $0xd9] sm:$0xff]
      %v3672 = vld [vmem:[%s462 + $0xe1] sm:$0xff]
      %v3673 = vld [vmem:[%s462 + $0xf1] sm:$0xff]
      %v3674 = vld [vmem:[%s462 + $0xf9] sm:$0xff]
      %v3675 = vld [vmem:[%s462 + $0x109] sm:$0xff]
      %v3676 = vld [vmem:[%s462 + $0x111] sm:$0xff]
      %v3677 = vld [vmem:[%s462 + $0x121] sm:$0xff]
      %v3678 = vld [vmem:[%s462 + $0x129] sm:$0xff]
      %v3679 = vld [vmem:[%s462 + $0x139] sm:$0xff]
      %v3680 = vld [vmem:[%s462 + $0x141] sm:$0xff]
      %v3681 = vld [vmem:[%s462 + $0x151] sm:$0xff]
      %v3682 = vld [vmem:[%s462 + $0x159] sm:$0xff]
      %v3683 = vld [vmem:[%s462 + $0x169] sm:$0xff]
      %v3684 = vld [vmem:[%s462 + $0x171] sm:$0xff]
      %v3685 = vld [vmem:[%s462 + $0x2] sm:$0xff]
      %v3686 = vld [vmem:[%s462 + $0xa] sm:$0xff]
      %v3687 = vld [vmem:[%s462 + $0x1a] sm:$0xff]
      %v3688 = vld [vmem:[%s462 + $0x22] sm:$0xff]
      %v3689 = vld [vmem:[%s462 + $0x32] sm:$0xff]
      %v3690 = vld [vmem:[%s462 + $0x3a] sm:$0xff]
      %v3691 = vld [vmem:[%s462 + $0x4a] sm:$0xff]
      %v3692 = vld [vmem:[%s462 + $0x52] sm:$0xff]
      %v3693 = vld [vmem:[%s462 + $0x62] sm:$0xff]
      %v3694 = vld [vmem:[%s462 + $0x6a] sm:$0xff]
      %v3695 = vld [vmem:[%s462 + $0x7a] sm:$0xff]
      %v3696 = vld [vmem:[%s462 + $0x82] sm:$0xff]
      %v3697 = vld [vmem:[%s462 + $0x92] sm:$0xff]
      %v3698 = vld [vmem:[%s462 + $0x9a] sm:$0xff]
      %v3699 = vld [vmem:[%s462 + $0xaa] sm:$0xff]
      %v3700 = vld [vmem:[%s462 + $0xb2] sm:$0xff]
      %v3701 = vld [vmem:[%s462 + $0xc2] sm:$0xff]
      %v3702 = vld [vmem:[%s462 + $0xca] sm:$0xff]
      %v3703 = vld [vmem:[%s462 + $0xda] sm:$0xff]
      %v3704 = vld [vmem:[%s462 + $0xe2] sm:$0xff]
      %v3705 = vld [vmem:[%s462 + $0xf2] sm:$0xff]
      %v3706 = vld [vmem:[%s462 + $0xfa] sm:$0xff]
      %v3707 = vld [vmem:[%s462 + $0x10a] sm:$0xff]
      %v3708 = vld [vmem:[%s462 + $0x112] sm:$0xff]
      %v3709 = vld [vmem:[%s462 + $0x122] sm:$0xff]
      %v3710 = vld [vmem:[%s462 + $0x12a] sm:$0xff]
      %v3711 = vld [vmem:[%s462 + $0x13a] sm:$0xff]
      %v3712 = vld [vmem:[%s462 + $0x142] sm:$0xff]
      %v3713 = vld [vmem:[%s462 + $0x152] sm:$0xff]
      %v3714 = vld [vmem:[%s462 + $0x15a] sm:$0xff]
      %v3715 = vld [vmem:[%s462 + $0x16a] sm:$0xff]
      %v3716 = vld [vmem:[%s462 + $0x172] sm:$0xff]
      %v3717 = vld [vmem:[%s2719 + $0x1] sm:$0xff]
      %v3718 = vld [vmem:[%s2719 + $0x9] sm:$0xff]
      %v3719 = vld [vmem:[%s2719 + $0x19] sm:$0xff]
      %v3720 = vld [vmem:[%s2719 + $0x21] sm:$0xff]
      %v3721 = vld [vmem:[%s2719 + $0x31] sm:$0xff]
      %v3722 = vld [vmem:[%s2719 + $0x39] sm:$0xff]
      %v3723 = vld [vmem:[%s2719 + $0x49] sm:$0xff]
      %v3724 = vld [vmem:[%s2719 + $0x51] sm:$0xff]
      %v3725 = vld [vmem:[%s2719 + $0x61] sm:$0xff]
      %v3726 = vld [vmem:[%s2719 + $0x69] sm:$0xff]
      %v3727 = vld [vmem:[%s2719 + $0x79] sm:$0xff]
      %v3728 = vld [vmem:[%s2719 + $0x81] sm:$0xff]
      %v3729 = vld [vmem:[%s2719 + $0x91] sm:$0xff]
      %v3730 = vld [vmem:[%s2719 + $0x99] sm:$0xff]
      %v3731 = vld [vmem:[%s2719 + $0xa9] sm:$0xff]
      %v3732 = vld [vmem:[%s2719 + $0xb1] sm:$0xff]
      %v3733 = vld [vmem:[%s2719 + $0xc1] sm:$0xff]
      %v3734 = vld [vmem:[%s2719 + $0xc9] sm:$0xff]
      %v3735 = vld [vmem:[%s2719 + $0xd9] sm:$0xff]
      %v3736 = vld [vmem:[%s2719 + $0xe1] sm:$0xff]
      %v3737 = vld [vmem:[%s2719 + $0xf1] sm:$0xff]
      %v3738 = vld [vmem:[%s2719 + $0xf9] sm:$0xff]
      %v3739 = vld [vmem:[%s2719 + $0x109] sm:$0xff]
      %v3740 = vld [vmem:[%s2719 + $0x111] sm:$0xff]
      %v3741 = vld [vmem:[%s2719 + $0x121] sm:$0xff]
      %v3742 = vld [vmem:[%s2719 + $0x129] sm:$0xff]
      %v3743 = vld [vmem:[%s2719 + $0x139] sm:$0xff]
      %v3744 = vld [vmem:[%s2719 + $0x141] sm:$0xff]
      %v3745 = vld [vmem:[%s2719 + $0x151] sm:$0xff]
      %v3746 = vld [vmem:[%s2719 + $0x159] sm:$0xff]
      %v3747 = vld [vmem:[%s2719 + $0x169] sm:$0xff]
      %v3748 = vld [vmem:[%s2719 + $0x171] sm:$0xff]
      %v3749 = vld [vmem:[%s2719 + $0x2] sm:$0xff]
      %v3750 = vld [vmem:[%s2719 + $0xa] sm:$0xff]
      %v3751 = vld [vmem:[%s2719 + $0x1a] sm:$0xff]
      %v3752 = vld [vmem:[%s2719 + $0x22] sm:$0xff]
      %v3753 = vld [vmem:[%s2719 + $0x32] sm:$0xff]
      %v3754 = vld [vmem:[%s2719 + $0x3a] sm:$0xff]
      %v3755 = vld [vmem:[%s2719 + $0x4a] sm:$0xff]
      %v3756 = vld [vmem:[%s2719 + $0x52] sm:$0xff]
      %v3757 = vld [vmem:[%s2719 + $0x62] sm:$0xff]
      %v3758 = vld [vmem:[%s2719 + $0x6a] sm:$0xff]
      %v3759 = vld [vmem:[%s2719 + $0x7a] sm:$0xff]
      %v3760 = vld [vmem:[%s2719 + $0x82] sm:$0xff]
      %v3761 = vld [vmem:[%s2719 + $0x92] sm:$0xff]
      %v3762 = vld [vmem:[%s2719 + $0x9a] sm:$0xff]
      %v3763 = vld [vmem:[%s2719 + $0xaa] sm:$0xff]
      %v3764 = vld [vmem:[%s2719 + $0xb2] sm:$0xff]
      %v3765 = vld [vmem:[%s2719 + $0xc2] sm:$0xff]
      %v3766 = vld [vmem:[%s2719 + $0xca] sm:$0xff]
      %v3767 = vld [vmem:[%s2719 + $0xda] sm:$0xff]
      %v3768 = vld [vmem:[%s2719 + $0xe2] sm:$0xff]
      %v3769 = vld [vmem:[%s2719 + $0xf2] sm:$0xff]
      %v3770 = vld [vmem:[%s2719 + $0xfa] sm:$0xff]
      %v3771 = vld [vmem:[%s2719 + $0x10a] sm:$0xff]
      %v3772 = vld [vmem:[%s2719 + $0x112] sm:$0xff]
      %v3773 = vld [vmem:[%s2719 + $0x122] sm:$0xff]
      %v3774 = vld [vmem:[%s2719 + $0x12a] sm:$0xff]
      %v3775 = vld [vmem:[%s2719 + $0x13a] sm:$0xff]
      %v3776 = vld [vmem:[%s2719 + $0x142] sm:$0xff]
      %v3777 = vld [vmem:[%s2719 + $0x152] sm:$0xff]
      %v3778 = vld [vmem:[%s2719 + $0x15a] sm:$0xff]
      %v3779 = vld [vmem:[%s2719 + $0x16a] sm:$0xff]
      %v3780 = vld [vmem:[%s2719 + $0x172] sm:$0xff]
      %3813 = vrot.lane.b32.xlu0 %v3685, 4
      %v3814 = vpop.permute.xlu0 %3813
      %3815 = vrot.lane.b32.xlu0 %v3686, 4
      %v3816 = vpop.permute.xlu0 %3815
      %3817 = vrot.lane.b32.xlu0 %v3687, 4
      %v3818 = vpop.permute.xlu0 %3817
      %3819 = vrot.lane.b32.xlu0 %v3688, 4
      %v3820 = vpop.permute.xlu0 %3819
      %3821 = vrot.lane.b32.xlu0 %v3689, 4
      %v3822 = vpop.permute.xlu0 %3821
      %3823 = vrot.lane.b32.xlu0 %v3690, 4
      %v3824 = vpop.permute.xlu0 %3823
      %3825 = vrot.lane.b32.xlu0 %v3691, 4
      %v3826 = vpop.permute.xlu0 %3825
      %3827 = vrot.lane.b32.xlu0 %v3692, 4
      %v3828 = vpop.permute.xlu0 %3827
      %3829 = vrot.lane.b32.xlu0 %v3693, 4
      %v3830 = vpop.permute.xlu0 %3829
      %3831 = vrot.lane.b32.xlu0 %v3694, 4
      %v3832 = vpop.permute.xlu0 %3831
      %3833 = vrot.lane.b32.xlu0 %v3695, 4
      %v3834 = vpop.permute.xlu0 %3833
      %3835 = vrot.lane.b32.xlu0 %v3696, 4
      %v3836 = vpop.permute.xlu0 %3835
      %3837 = vrot.lane.b32.xlu0 %v3697, 4
      %v3838 = vpop.permute.xlu0 %3837
      %3839 = vrot.lane.b32.xlu0 %v3698, 4
      %v3840 = vpop.permute.xlu0 %3839
      %3841 = vrot.lane.b32.xlu0 %v3699, 4
      %v3842 = vpop.permute.xlu0 %3841
      %3843 = vrot.lane.b32.xlu0 %v3700, 4
      %v3844 = vpop.permute.xlu0 %3843
      %3845 = vrot.lane.b32.xlu0 %v3701, 4
      %v3846 = vpop.permute.xlu0 %3845
      %3847 = vrot.lane.b32.xlu0 %v3702, 4
      %v3848 = vpop.permute.xlu0 %3847
      %3849 = vrot.lane.b32.xlu0 %v3703, 4
      %v3850 = vpop.permute.xlu0 %3849
      %3851 = vrot.lane.b32.xlu0 %v3704, 4
      %v3852 = vpop.permute.xlu0 %3851
      %3853 = vrot.lane.b32.xlu0 %v3705, 4
      %v3854 = vpop.permute.xlu0 %3853
      %3855 = vrot.lane.b32.xlu0 %v3706, 4
      %v3856 = vpop.permute.xlu0 %3855
      %3857 = vrot.lane.b32.xlu0 %v3707, 4
      %v3858 = vpop.permute.xlu0 %3857
      %3859 = vrot.lane.b32.xlu0 %v3708, 4
      %v3860 = vpop.permute.xlu0 %3859
      %3861 = vrot.lane.b32.xlu0 %v3709, 4
      %v3862 = vpop.permute.xlu0 %3861
      %3863 = vrot.lane.b32.xlu0 %v3710, 4
      %v3864 = vpop.permute.xlu0 %3863
      %3865 = vrot.lane.b32.xlu0 %v3711, 4
      %v3866 = vpop.permute.xlu0 %3865
      %3867 = vrot.lane.b32.xlu0 %v3712, 4
      %v3868 = vpop.permute.xlu0 %3867
      %3869 = vrot.lane.b32.xlu0 %v3713, 4
      %v3870 = vpop.permute.xlu0 %3869
      %3871 = vrot.lane.b32.xlu0 %v3714, 4
      %v3872 = vpop.permute.xlu0 %3871
      %3873 = vrot.lane.b32.xlu0 %v3715, 4
      %v3874 = vpop.permute.xlu0 %3873
      %3875 = vrot.lane.b32.xlu0 %v3716, 4
      %v3876 = vpop.permute.xlu0 %3875
      %3941 = vrot.lane.b32.xlu0 %v3717, 8
      %v3942 = vpop.permute.xlu0 %3941
      %3943 = vrot.lane.b32.xlu0 %v3718, 8
      %v3944 = vpop.permute.xlu0 %3943
      %3945 = vrot.lane.b32.xlu0 %v3719, 8
      %v3946 = vpop.permute.xlu0 %3945
      %3947 = vrot.lane.b32.xlu0 %v3720, 8
      %v3948 = vpop.permute.xlu0 %3947
      %3949 = vrot.lane.b32.xlu0 %v3721, 8
      %v3950 = vpop.permute.xlu0 %3949
      %3951 = vrot.lane.b32.xlu0 %v3722, 8
      %v3952 = vpop.permute.xlu0 %3951
      %3953 = vrot.lane.b32.xlu0 %v3723, 8
      %v3954 = vpop.permute.xlu0 %3953
      %3955 = vrot.lane.b32.xlu0 %v3724, 8
      %v3956 = vpop.permute.xlu0 %3955
      %3957 = vrot.lane.b32.xlu0 %v3725, 8
      %v3958 = vpop.permute.xlu0 %3957
      %3959 = vrot.lane.b32.xlu0 %v3726, 8
      %v3960 = vpop.permute.xlu0 %3959
      %3961 = vrot.lane.b32.xlu0 %v3727, 8
      %v3962 = vpop.permute.xlu0 %3961
      %3963 = vrot.lane.b32.xlu0 %v3728, 8
      %v3964 = vpop.permute.xlu0 %3963
      %3965 = vrot.lane.b32.xlu0 %v3729, 8
      %v3966 = vpop.permute.xlu0 %3965
      %3967 = vrot.lane.b32.xlu0 %v3730, 8
      %v3968 = vpop.permute.xlu0 %3967
      %3969 = vrot.lane.b32.xlu0 %v3731, 8
      %v3970 = vpop.permute.xlu0 %3969
      %3971 = vrot.lane.b32.xlu0 %v3732, 8
      %v3972 = vpop.permute.xlu0 %3971
      %3973 = vrot.lane.b32.xlu0 %v3733, 8
      %v3974 = vpop.permute.xlu0 %3973
      %3975 = vrot.lane.b32.xlu0 %v3734, 8
      %v3976 = vpop.permute.xlu0 %3975
      %3977 = vrot.lane.b32.xlu0 %v3735, 8
      %v3978 = vpop.permute.xlu0 %3977
      %3979 = vrot.lane.b32.xlu0 %v3736, 8
      %v3980 = vpop.permute.xlu0 %3979
      %3981 = vrot.lane.b32.xlu0 %v3737, 8
      %v3982 = vpop.permute.xlu0 %3981
      %3983 = vrot.lane.b32.xlu0 %v3738, 8
      %v3984 = vpop.permute.xlu0 %3983
      %3985 = vrot.lane.b32.xlu0 %v3739, 8
      %v3986 = vpop.permute.xlu0 %3985
      %3987 = vrot.lane.b32.xlu0 %v3740, 8
      %v3988 = vpop.permute.xlu0 %3987
      %3989 = vrot.lane.b32.xlu0 %v3741, 8
      %v3990 = vpop.permute.xlu0 %3989
      %3991 = vrot.lane.b32.xlu0 %v3742, 8
      %v3992 = vpop.permute.xlu0 %3991
      %3993 = vrot.lane.b32.xlu0 %v3743, 8
      %v3994 = vpop.permute.xlu0 %3993
      %3995 = vrot.lane.b32.xlu0 %v3744, 8
      %v3996 = vpop.permute.xlu0 %3995
      %3997 = vrot.lane.b32.xlu0 %v3745, 8
      %v3998 = vpop.permute.xlu0 %3997
      %3999 = vrot.lane.b32.xlu0 %v3746, 8
      %v4000 = vpop.permute.xlu0 %3999
      %4001 = vrot.lane.b32.xlu0 %v3747, 8
      %v4002 = vpop.permute.xlu0 %4001
      %4003 = vrot.lane.b32.xlu0 %v3748, 8
      %v4004 = vpop.permute.xlu0 %4003
      %4069 = vrot.lane.b32.xlu0 %v3749, 12
      %v4070 = vpop.permute.xlu0 %4069
      %4071 = vrot.lane.b32.xlu0 %v3750, 12
      %v4072 = vpop.permute.xlu0 %4071
      %4073 = vrot.lane.b32.xlu0 %v3751, 12
      %v4074 = vpop.permute.xlu0 %4073
      %4075 = vrot.lane.b32.xlu0 %v3752, 12
      %v4076 = vpop.permute.xlu0 %4075
      %4077 = vrot.lane.b32.xlu0 %v3753, 12
      %v4078 = vpop.permute.xlu0 %4077
      %4079 = vrot.lane.b32.xlu0 %v3754, 12
      %v4080 = vpop.permute.xlu0 %4079
      %4081 = vrot.lane.b32.xlu0 %v3755, 12
      %v4082 = vpop.permute.xlu0 %4081
      %4083 = vrot.lane.b32.xlu0 %v3756, 12
      %v4084 = vpop.permute.xlu0 %4083
      %4085 = vrot.lane.b32.xlu0 %v3757, 12
      %v4086 = vpop.permute.xlu0 %4085
      %4087 = vrot.lane.b32.xlu0 %v3758, 12
      %v4088 = vpop.permute.xlu0 %4087
      %4089 = vrot.lane.b32.xlu0 %v3759, 12
      %v4090 = vpop.permute.xlu0 %4089
      %4091 = vrot.lane.b32.xlu0 %v3760, 12
      %v4092 = vpop.permute.xlu0 %4091
      %4093 = vrot.lane.b32.xlu0 %v3761, 12
      %v4094 = vpop.permute.xlu0 %4093
      %4095 = vrot.lane.b32.xlu0 %v3762, 12
      %v4096 = vpop.permute.xlu0 %4095
      %4097 = vrot.lane.b32.xlu0 %v3763, 12
      %v4098 = vpop.permute.xlu0 %4097
      %4099 = vrot.lane.b32.xlu0 %v3764, 12
      %v4100 = vpop.permute.xlu0 %4099
      %4101 = vrot.lane.b32.xlu0 %v3765, 12
      %v4102 = vpop.permute.xlu0 %4101
      %4103 = vrot.lane.b32.xlu0 %v3766, 12
      %v4104 = vpop.permute.xlu0 %4103
      %4105 = vrot.lane.b32.xlu0 %v3767, 12
      %v4106 = vpop.permute.xlu0 %4105
      %4107 = vrot.lane.b32.xlu0 %v3768, 12
      %v4108 = vpop.permute.xlu0 %4107
      %4109 = vrot.lane.b32.xlu0 %v3769, 12
      %v4110 = vpop.permute.xlu0 %4109
      %4111 = vrot.lane.b32.xlu0 %v3770, 12
      %v4112 = vpop.permute.xlu0 %4111
      %4113 = vrot.lane.b32.xlu0 %v3771, 12
      %v4114 = vpop.permute.xlu0 %4113
      %4115 = vrot.lane.b32.xlu0 %v3772, 12
      %v4116 = vpop.permute.xlu0 %4115
      %4117 = vrot.lane.b32.xlu0 %v3773, 12
      %v4118 = vpop.permute.xlu0 %4117
      %4119 = vrot.lane.b32.xlu0 %v3774, 12
      %v4120 = vpop.permute.xlu0 %4119
      %4121 = vrot.lane.b32.xlu0 %v3775, 12
      %v4122 = vpop.permute.xlu0 %4121
      %4123 = vrot.lane.b32.xlu0 %v3776, 12
      %v4124 = vpop.permute.xlu0 %4123
      %4125 = vrot.lane.b32.xlu0 %v3777, 12
      %v4126 = vpop.permute.xlu0 %4125
      %4127 = vrot.lane.b32.xlu0 %v3778, 12
      %v4128 = vpop.permute.xlu0 %4127
      %4129 = vrot.lane.b32.xlu0 %v3779, 12
      %v4130 = vpop.permute.xlu0 %4129
      %4131 = vrot.lane.b32.xlu0 %v3780, 12
      %v4132 = vpop.permute.xlu0 %4131
      %v4165 = vsel %vm463, %v3653, %v3814
      %v4166 = vsel %vm463, %v3654, %v3816
      %v4167 = vsel %vm463, %v3655, %v3818
      %v4168 = vsel %vm463, %v3656, %v3820
      %v4169 = vsel %vm463, %v3657, %v3822
      %v4170 = vsel %vm463, %v3658, %v3824
      %v4171 = vsel %vm463, %v3659, %v3826
      %v4172 = vsel %vm463, %v3660, %v3828
      %v4173 = vsel %vm463, %v3661, %v3830
      %v4174 = vsel %vm463, %v3662, %v3832
      %v4175 = vsel %vm463, %v3663, %v3834
      %v4176 = vsel %vm463, %v3664, %v3836
      %v4177 = vsel %vm463, %v3665, %v3838
      %v4178 = vsel %vm463, %v3666, %v3840
      %v4179 = vsel %vm463, %v3667, %v3842
      %v4180 = vsel %vm463, %v3668, %v3844
      %v4181 = vsel %vm463, %v3669, %v3846
      %v4182 = vsel %vm463, %v3670, %v3848
      %v4183 = vsel %vm463, %v3671, %v3850
      %v4184 = vsel %vm463, %v3672, %v3852
      %v4185 = vsel %vm463, %v3673, %v3854
      %v4186 = vsel %vm463, %v3674, %v3856
      %v4187 = vsel %vm463, %v3675, %v3858
      %v4188 = vsel %vm463, %v3676, %v3860
      %v4189 = vsel %vm463, %v3677, %v3862
      %v4190 = vsel %vm463, %v3678, %v3864
      %v4191 = vsel %vm463, %v3679, %v3866
      %v4192 = vsel %vm463, %v3680, %v3868
      %v4193 = vsel %vm463, %v3681, %v3870
      %v4194 = vsel %vm463, %v3682, %v3872
      %v4195 = vsel %vm463, %v3683, %v3874
      %v4196 = vsel %vm463, %v3684, %v3876
      %v4197 = vsel %vm1076, %v4165, %v3942
      %v4198 = vsel %vm1076, %v4166, %v3944
      %v4199 = vsel %vm1076, %v4167, %v3946
      %v4200 = vsel %vm1076, %v4168, %v3948
      %v4201 = vsel %vm1076, %v4169, %v3950
      %v4202 = vsel %vm1076, %v4170, %v3952
      %v4203 = vsel %vm1076, %v4171, %v3954
      %v4204 = vsel %vm1076, %v4172, %v3956
      %v4205 = vsel %vm1076, %v4173, %v3958
      %v4206 = vsel %vm1076, %v4174, %v3960
      %v4207 = vsel %vm1076, %v4175, %v3962
      %v4208 = vsel %vm1076, %v4176, %v3964
      %v4209 = vsel %vm1076, %v4177, %v3966
      %v4210 = vsel %vm1076, %v4178, %v3968
      %v4211 = vsel %vm1076, %v4179, %v3970
      %v4212 = vsel %vm1076, %v4180, %v3972
      %v4213 = vsel %vm1076, %v4181, %v3974
      %v4214 = vsel %vm1076, %v4182, %v3976
      %v4215 = vsel %vm1076, %v4183, %v3978
      %v4216 = vsel %vm1076, %v4184, %v3980
      %v4217 = vsel %vm1076, %v4185, %v3982
      %v4218 = vsel %vm1076, %v4186, %v3984
      %v4219 = vsel %vm1076, %v4187, %v3986
      %v4220 = vsel %vm1076, %v4188, %v3988
      %v4221 = vsel %vm1076, %v4189, %v3990
      %v4222 = vsel %vm1076, %v4190, %v3992
      %v4223 = vsel %vm1076, %v4191, %v3994
      %v4224 = vsel %vm1076, %v4192, %v3996
      %v4225 = vsel %vm1076, %v4193, %v3998
      %v4226 = vsel %vm1076, %v4194, %v4000
      %v4227 = vsel %vm1076, %v4195, %v4002
      %v4228 = vsel %vm1076, %v4196, %v4004
      %v4229 = vsel %vm1109, %v4197, %v4070
      %v4230 = vsel %vm1109, %v4198, %v4072
      %v4231 = vsel %vm1109, %v4199, %v4074
      %v4232 = vsel %vm1109, %v4200, %v4076
      %v4233 = vsel %vm1109, %v4201, %v4078
      %v4234 = vsel %vm1109, %v4202, %v4080
      %v4235 = vsel %vm1109, %v4203, %v4082
      %v4236 = vsel %vm1109, %v4204, %v4084
      %v4237 = vsel %vm1109, %v4205, %v4086
      %v4238 = vsel %vm1109, %v4206, %v4088
      %v4239 = vsel %vm1109, %v4207, %v4090
      %v4240 = vsel %vm1109, %v4208, %v4092
      %v4241 = vsel %vm1109, %v4209, %v4094
      %v4242 = vsel %vm1109, %v4210, %v4096
      %v4243 = vsel %vm1109, %v4211, %v4098
      %v4244 = vsel %vm1109, %v4212, %v4100
      %v4245 = vsel %vm1109, %v4213, %v4102
      %v4246 = vsel %vm1109, %v4214, %v4104
      %v4247 = vsel %vm1109, %v4215, %v4106
      %v4248 = vsel %vm1109, %v4216, %v4108
      %v4249 = vsel %vm1109, %v4217, %v4110
      %v4250 = vsel %vm1109, %v4218, %v4112
      %v4251 = vsel %vm1109, %v4219, %v4114
      %v4252 = vsel %vm1109, %v4220, %v4116
      %v4253 = vsel %vm1109, %v4221, %v4118
      %v4254 = vsel %vm1109, %v4222, %v4120
      %v4255 = vsel %vm1109, %v4223, %v4122
      %v4256 = vsel %vm1109, %v4224, %v4124
      %v4257 = vsel %vm1109, %v4225, %v4126
      %v4258 = vsel %vm1109, %v4226, %v4128
      %v4259 = vsel %vm1109, %v4227, %v4130
      %v4260 = vsel %vm1109, %v4228, %v4132
      %s4261 = scalar_lea.vmem %s3, 48
      %v4262 = vld [vmem:[%s4261] sm:$0xff]
      %v4263 = vld [vmem:[%s4261 + $0x8] sm:$0xff]
      %v4265 = vsel %vm1144, %v4229, 0
      %v4268 = vsel %vm1144, %v4230, 0
      %v4271 = vsel %vm1144, %v4231, 0
      %v4274 = vsel %vm1144, %v4232, 0
      %v4277 = vsel %vm1144, %v4233, 0
      %v4280 = vsel %vm1144, %v4234, 0
      %v4283 = vsel %vm1144, %v4235, 0
      %v4286 = vsel %vm1144, %v4236, 0
      %v4289 = vsel %vm1144, %v4237, 0
      %v4292 = vsel %vm1144, %v4238, 0
      %v4295 = vsel %vm1144, %v4239, 0
      %v4298 = vsel %vm1144, %v4240, 0
      %v4301 = vsel %vm1144, %v4241, 0
      %v4304 = vsel %vm1144, %v4242, 0
      %v4307 = vsel %vm1144, %v4243, 0
      %v4310 = vsel %vm1144, %v4244, 0
      %v4313 = vsel %vm1144, %v4245, 0
      %v4316 = vsel %vm1144, %v4246, 0
      %v4319 = vsel %vm1144, %v4247, 0
      %v4322 = vsel %vm1144, %v4248, 0
      %v4325 = vsel %vm1144, %v4249, 0
      %v4328 = vsel %vm1144, %v4250, 0
      %v4331 = vsel %vm1144, %v4251, 0
      %v4334 = vsel %vm1144, %v4252, 0
      %v4337 = vsel %vm1144, %v4253, 0
      %v4340 = vsel %vm1144, %v4254, 0
      %v4343 = vsel %vm1144, %v4255, 0
      %v4346 = vsel %vm1144, %v4256, 0
      %v4349 = vsel %vm1144, %v4257, 0
      %v4352 = vsel %vm1144, %v4258, 0
      %v4355 = vsel %vm1144, %v4259, 0
      %v4358 = vsel %vm1144, %v4260, 0
      %4360 = vmatprep.subr.mxu0 0.0
      %4361 = vmatpush1.msra.mxu0 %v4262
      %4362 = vmatprep.subr.mxu0 0.0
      %4363 = vmatpush1.msra.mxu0 %v4263
      %4364 = vmatprep.subr.mxu0 0.0
      %4365 = vmatpush1.msra.mxu0 0.0
      %4366 = vmatprep.subr.mxu0 0.0
      %4367 = vmatpush1.msra.mxu0 0.0
      %4368 = vmatprep.subr.mxu0 0.0
      %4369 = vmatpush1.msra.mxu0 0.0
      %4370 = vmatprep.subr.mxu0 0.0
      %4371 = vmatpush1.msra.mxu0 0.0
      %4372 = vmatprep.subr.mxu0 0.0
      %4373 = vmatpush1.msra.mxu0 0.0
      %4374 = vmatprep.subr.mxu0 0.0
      %4375 = vmatpush1.msra.mxu0 0.0
      %4376 = vmatprep.subr.mxu0 0.0
      %4377 = vmatpush1.msra.mxu0 0.0
      %4378 = vmatprep.subr.mxu0 0.0
      %4379 = vmatpush1.msra.mxu0 0.0
      %4380 = vmatprep.subr.mxu0 0.0
      %4381 = vmatpush1.msra.mxu0 0.0
      %4382 = vmatprep.subr.mxu0 0.0
      %4383 = vmatpush1.msra.mxu0 0.0
      %4384 = vmatprep.subr.mxu0 0.0
      %4385 = vmatpush1.msra.mxu0 0.0
      %4386 = vmatprep.subr.mxu0 0.0
      %4387 = vmatpush1.msra.mxu0 0.0
      %4388 = vmatprep.subr.mxu0 0.0
      %4389 = vmatpush1.msra.mxu0 0.0
      %4390 = vmatprep.subr.mxu0 0.0
      %4391 = vmatpush1.msra.mxu0 0.0
      %4392 = vmatprep.subr.mxu0 0.0
      %4393 = vmatpush1.msra.mxu0 0.0
      %4394 = vmatprep.subr.mxu0 0.0
      %4395 = vmatpush1.msra.mxu0 0.0
      %4396 = vmatprep.subr.mxu0 0.0
      %4397 = vmatpush1.msra.mxu0 0.0
      %4398 = vmatprep.subr.mxu0 0.0
      %4399 = vmatpush1.msra.mxu0 0.0
      %4400 = vmatprep.subr.mxu0 0.0
      %4401 = vmatpush1.msra.mxu0 0.0
      %4402 = vmatprep.subr.mxu0 0.0
      %4403 = vmatpush1.msra.mxu0 0.0
      %4404 = vmatprep.subr.mxu0 0.0
      %4405 = vmatpush1.msra.mxu0 0.0
      %4406 = vmatprep.subr.mxu0 0.0
      %4407 = vmatpush1.msra.mxu0 0.0
      %4408 = vmatprep.subr.mxu0 0.0
      %4409 = vmatpush1.msra.mxu0 0.0
      %4410 = vmatprep.subr.mxu0 0.0
      %4411 = vmatpush1.msra.mxu0 0.0
      %4412 = vmatprep.subr.mxu0 0.0
      %4413 = vmatpush1.msra.mxu0 0.0
      %4414 = vmatprep.subr.mxu0 0.0
      %4415 = vmatpush1.msra.mxu0 0.0
      %4416 = vmatprep.subr.mxu0 0.0
      %4417 = vmatpush1.msra.mxu0 0.0
      %4418 = vmatprep.subr.mxu0 0.0
      %4419 = vmatpush1.msra.mxu0 0.0
      %4420 = vmatprep.subr.mxu0 0.0
      %4421 = vmatpush1.msra.mxu0 0.0
      %4422 = vmatprep.subr.mxu0 0.0
      %4423 = vmatpush1.msra.mxu0 0.0
      %4424 = vmatprep.mubr.f32.mxu0 0.0
      %4425 = vmatmul.mubr.f32.gmra.mrb[0].mxu0 %v4265
      %v4426 = vpop.f32.mrb[0].mxu0
      %v4427 = vadd.f32 0.0, %v4426
      %v4428 = vpop.f32.mrb[0].mxu0
      %4429 = vmatprep.mubr.f32.mxu0 0.0
      %4430 = vmatmul.mubr.f32.gmra.mrb[0].mxu0 %v4268
      %v4431 = vpop.f32.mrb[0].mxu0
      %v4432 = vadd.f32 0.0, %v4431
      %v4433 = vpop.f32.mrb[0].mxu0
      %4434 = vmatprep.mubr.f32.mxu0 0.0
      %4435 = vmatmul.mubr.f32.gmra.mrb[0].mxu0 %v4271
      %v4436 = vpop.f32.mrb[0].mxu0
      %v4437 = vadd.f32 0.0, %v4436
      %v4438 = vpop.f32.mrb[0].mxu0
      %4439 = vmatprep.mubr.f32.mxu0 0.0
      %4440 = vmatmul.mubr.f32.gmra.mrb[0].mxu0 %v4274
      %v4441 = vpop.f32.mrb[0].mxu0
      %v4442 = vadd.f32 0.0, %v4441
      %v4443 = vpop.f32.mrb[0].mxu0
      %4444 = vmatprep.mubr.f32.mxu0 0.0
      %4445 = vmatmul.mubr.f32.gmra.mrb[0].mxu0 %v4277
      %v4446 = vpop.f32.mrb[0].mxu0
      %v4447 = vadd.f32 0.0, %v4446
      %v4448 = vpop.f32.mrb[0].mxu0
      %4449 = vmatprep.mubr.f32.mxu0 0.0
      %4450 = vmatmul.mubr.f32.gmra.mrb[0].mxu0 %v4280
      %v4451 = vpop.f32.mrb[0].mxu0
      %v4452 = vadd.f32 0.0, %v4451
      %v4453 = vpop.f32.mrb[0].mxu0
      %4454 = vmatprep.mubr.f32.mxu0 0.0
      %4455 = vmatmul.mubr.f32.gmra.mrb[0].mxu0 %v4283
      %v4456 = vpop.f32.mrb[0].mxu0
      %v4457 = vadd.f32 0.0, %v4456
      %v4458 = vpop.f32.mrb[0].mxu0
      %4459 = vmatprep.mubr.f32.mxu0 0.0
      %4460 = vmatmul.mubr.f32.gmra.mrb[0].mxu0 %v4286
      %v4461 = vpop.f32.mrb[0].mxu0
      %v4462 = vadd.f32 0.0, %v4461
      %v4463 = vpop.f32.mrb[0].mxu0
      %4464 = vmatprep.mubr.f32.mxu0 0.0
      %4465 = vmatmul.mubr.f32.gmra.mrb[0].mxu0 %v4289
      %v4466 = vpop.f32.mrb[0].mxu0
      %v4467 = vadd.f32 0.0, %v4466
      %v4468 = vpop.f32.mrb[0].mxu0
      %4469 = vmatprep.mubr.f32.mxu0 0.0
      %4470 = vmatmul.mubr.f32.gmra.mrb[0].mxu0 %v4292
      %v4471 = vpop.f32.mrb[0].mxu0
      %v4472 = vadd.f32 0.0, %v4471
      %v4473 = vpop.f32.mrb[0].mxu0
      %4474 = vmatprep.mubr.f32.mxu0 0.0
      %4475 = vmatmul.mubr.f32.gmra.mrb[0].mxu0 %v4295
      %v4476 = vpop.f32.mrb[0].mxu0
      %v4477 = vadd.f32 0.0, %v4476
      %v4478 = vpop.f32.mrb[0].mxu0
      %4479 = vmatprep.mubr.f32.mxu0 0.0
      %4480 = vmatmul.mubr.f32.gmra.mrb[0].mxu0 %v4298
      %v4481 = vpop.f32.mrb[0].mxu0
      %v4482 = vadd.f32 0.0, %v4481
      %v4483 = vpop.f32.mrb[0].mxu0
      %4484 = vmatprep.mubr.f32.mxu0 0.0
      %4485 = vmatmul.mubr.f32.gmra.mrb[0].mxu0 %v4301
      %v4486 = vpop.f32.mrb[0].mxu0
      %v4487 = vadd.f32 0.0, %v4486
      %v4488 = vpop.f32.mrb[0].mxu0
      %4489 = vmatprep.mubr.f32.mxu0 0.0
      %4490 = vmatmul.mubr.f32.gmra.mrb[0].mxu0 %v4304
      %v4491 = vpop.f32.mrb[0].mxu0
      %v4492 = vadd.f32 0.0, %v4491
      %v4493 = vpop.f32.mrb[0].mxu0
      %4494 = vmatprep.mubr.f32.mxu0 0.0
      %4495 = vmatmul.mubr.f32.gmra.mrb[0].mxu0 %v4307
      %v4496 = vpop.f32.mrb[0].mxu0
      %v4497 = vadd.f32 0.0, %v4496
      %v4498 = vpop.f32.mrb[0].mxu0
      %4499 = vmatprep.mubr.f32.mxu0 0.0
      %4500 = vmatmul.mubr.f32.gmra.mrb[0].mxu0 %v4310
      %v4501 = vpop.f32.mrb[0].mxu0
      %v4502 = vadd.f32 0.0, %v4501
      %v4503 = vpop.f32.mrb[0].mxu0
      %4504 = vmatprep.mubr.f32.mxu0 0.0
      %4505 = vmatmul.mubr.f32.gmra.mrb[0].mxu0 %v4313
      %v4506 = vpop.f32.mrb[0].mxu0
      %v4507 = vadd.f32 0.0, %v4506
      %v4508 = vpop.f32.mrb[0].mxu0
      %4509 = vmatprep.mubr.f32.mxu0 0.0
      %4510 = vmatmul.mubr.f32.gmra.mrb[0].mxu0 %v4316
      %v4511 = vpop.f32.mrb[0].mxu0
      %v4512 = vadd.f32 0.0, %v4511
      %v4513 = vpop.f32.mrb[0].mxu0
      %4514 = vmatprep.mubr.f32.mxu0 0.0
      %4515 = vmatmul.mubr.f32.gmra.mrb[0].mxu0 %v4319
      %v4516 = vpop.f32.mrb[0].mxu0
      %v4517 = vadd.f32 0.0, %v4516
      %v4518 = vpop.f32.mrb[0].mxu0
      %4519 = vmatprep.mubr.f32.mxu0 0.0
      %4520 = vmatmul.mubr.f32.gmra.mrb[0].mxu0 %v4322
      %v4521 = vpop.f32.mrb[0].mxu0
      %v4522 = vadd.f32 0.0, %v4521
      %v4523 = vpop.f32.mrb[0].mxu0
      %4524 = vmatprep.mubr.f32.mxu0 0.0
      %4525 = vmatmul.mubr.f32.gmra.mrb[0].mxu0 %v4325
      %v4526 = vpop.f32.mrb[0].mxu0
      %v4527 = vadd.f32 0.0, %v4526
      %v4528 = vpop.f32.mrb[0].mxu0
      %4529 = vmatprep.mubr.f32.mxu0 0.0
      %4530 = vmatmul.mubr.f32.gmra.mrb[0].mxu0 %v4328
      %v4531 = vpop.f32.mrb[0].mxu0
      %v4532 = vadd.f32 0.0, %v4531
      %v4533 = vpop.f32.mrb[0].mxu0
      %4534 = vmatprep.mubr.f32.mxu0 0.0
      %4535 = vmatmul.mubr.f32.gmra.mrb[0].mxu0 %v4331
      %v4536 = vpop.f32.mrb[0].mxu0
      %v4537 = vadd.f32 0.0, %v4536
      %v4538 = vpop.f32.mrb[0].mxu0
      %4539 = vmatprep.mubr.f32.mxu0 0.0
      %4540 = vmatmul.mubr.f32.gmra.mrb[0].mxu0 %v4334
      %v4541 = vpop.f32.mrb[0].mxu0
      %v4542 = vadd.f32 0.0, %v4541
      %v4543 = vpop.f32.mrb[0].mxu0
      %4544 = vmatprep.mubr.f32.mxu0 0.0
      %4545 = vmatmul.mubr.f32.gmra.mrb[0].mxu0 %v4337
      %v4546 = vpop.f32.mrb[0].mxu0
      %v4547 = vadd.f32 0.0, %v4546
      %v4548 = vpop.f32.mrb[0].mxu0
      %4549 = vmatprep.mubr.f32.mxu0 0.0
      %4550 = vmatmul.mubr.f32.gmra.mrb[0].mxu0 %v4340
      %v4551 = vpop.f32.mrb[0].mxu0
      %v4552 = vadd.f32 0.0, %v4551
      %v4553 = vpop.f32.mrb[0].mxu0
      %4554 = vmatprep.mubr.f32.mxu0 0.0
      %4555 = vmatmul.mubr.f32.gmra.mrb[0].mxu0 %v4343
      %v4556 = vpop.f32.mrb[0].mxu0
      %v4557 = vadd.f32 0.0, %v4556
      %v4558 = vpop.f32.mrb[0].mxu0
      %4559 = vmatprep.mubr.f32.mxu0 0.0
      %4560 = vmatmul.mubr.f32.gmra.mrb[0].mxu0 %v4346
      %v4561 = vpop.f32.mrb[0].mxu0
      %v4562 = vadd.f32 0.0, %v4561
      %v4563 = vpop.f32.mrb[0].mxu0
      %4564 = vmatprep.mubr.f32.mxu0 0.0
      %4565 = vmatmul.mubr.f32.gmra.mrb[0].mxu0 %v4349
      %v4566 = vpop.f32.mrb[0].mxu0
      %v4567 = vadd.f32 0.0, %v4566
      %v4568 = vpop.f32.mrb[0].mxu0
      %4569 = vmatprep.mubr.f32.mxu0 0.0
      %4570 = vmatmul.mubr.f32.gmra.mrb[0].mxu0 %v4352
      %v4571 = vpop.f32.mrb[0].mxu0
      %v4572 = vadd.f32 0.0, %v4571
      %v4573 = vpop.f32.mrb[0].mxu0
      %4574 = vmatprep.mubr.f32.mxu0 0.0
      %4575 = vmatmul.mubr.f32.gmra.mrb[0].mxu0 %v4355
      %v4576 = vpop.f32.mrb[0].mxu0
      %v4577 = vadd.f32 0.0, %v4576
      %v4578 = vpop.f32.mrb[0].mxu0
      %4579 = vmatprep.mubr.f32.mxu0 0.0
      %4580 = vmatmul.mubr.f32.gmra.mrb[0].mxu0 %v4358
      %v4581 = vpop.f32.mrb[0].mxu0
      %v4582 = vadd.f32 0.0, %v4581
      %v4583 = vpop.f32.mrb[0].mxu0
      %4584 = vdwg.mxu0
      %v4585 = vadd.f32 %v530, %v4427
      %v4586 = vadd.f32 %v530, %v4432
      %v4587 = vadd.f32 %v530, %v4437
      %v4588 = vadd.f32 %v530, %v4442
      %v4589 = vadd.f32 %v530, %v4447
      %v4590 = vadd.f32 %v530, %v4452
      %v4591 = vadd.f32 %v530, %v4457
      %v4592 = vadd.f32 %v530, %v4462
      %v4593 = vadd.f32 %v530, %v4467
      %v4594 = vadd.f32 %v530, %v4472
      %v4595 = vadd.f32 %v530, %v4477
      %v4596 = vadd.f32 %v530, %v4482
      %v4597 = vadd.f32 %v530, %v4487
      %v4598 = vadd.f32 %v530, %v4492
      %v4599 = vadd.f32 %v530, %v4497
      %v4600 = vadd.f32 %v530, %v4502
      %v4601 = vadd.f32 %v530, %v4507
      %v4602 = vadd.f32 %v530, %v4512
      %v4603 = vadd.f32 %v530, %v4517
      %v4604 = vadd.f32 %v530, %v4522
      %v4605 = vadd.f32 %v530, %v4527
      %v4606 = vadd.f32 %v530, %v4532
      %v4607 = vadd.f32 %v530, %v4537
      %v4608 = vadd.f32 %v530, %v4542
      %v4609 = vadd.f32 %v530, %v4547
      %v4610 = vadd.f32 %v530, %v4552
      %v4611 = vadd.f32 %v530, %v4557
      %v4612 = vadd.f32 %v530, %v4562
      %v4613 = vadd.f32 %v530, %v4567
      %v4614 = vadd.f32 %v530, %v4572
      %v4615 = vadd.f32 %v530, %v4577
      %v4616 = vadd.f32 %v530, %v4582
      %4649 = vrot.lane.b32.xlu0 %v4585, 4
      %v4650 = vpop.permute.xlu0 %4649
      %4651 = vrot.lane.b32.xlu0 %v4586, 4
      %v4652 = vpop.permute.xlu0 %4651
      %4653 = vrot.lane.b32.xlu0 %v4587, 4
      %v4654 = vpop.permute.xlu0 %4653
      %4655 = vrot.lane.b32.xlu0 %v4588, 4
      %v4656 = vpop.permute.xlu0 %4655
      %4657 = vrot.lane.b32.xlu0 %v4589, 4
      %v4658 = vpop.permute.xlu0 %4657
      %4659 = vrot.lane.b32.xlu0 %v4590, 4
      %v4660 = vpop.permute.xlu0 %4659
      %4661 = vrot.lane.b32.xlu0 %v4591, 4
      %v4662 = vpop.permute.xlu0 %4661
      %4663 = vrot.lane.b32.xlu0 %v4592, 4
      %v4664 = vpop.permute.xlu0 %4663
      %4665 = vrot.lane.b32.xlu0 %v4593, 4
      %v4666 = vpop.permute.xlu0 %4665
      %4667 = vrot.lane.b32.xlu0 %v4594, 4
      %v4668 = vpop.permute.xlu0 %4667
      %4669 = vrot.lane.b32.xlu0 %v4595, 4
      %v4670 = vpop.permute.xlu0 %4669
      %4671 = vrot.lane.b32.xlu0 %v4596, 4
      %v4672 = vpop.permute.xlu0 %4671
      %4673 = vrot.lane.b32.xlu0 %v4597, 4
      %v4674 = vpop.permute.xlu0 %4673
      %4675 = vrot.lane.b32.xlu0 %v4598, 4
      %v4676 = vpop.permute.xlu0 %4675
      %4677 = vrot.lane.b32.xlu0 %v4599, 4
      %v4678 = vpop.permute.xlu0 %4677
      %4679 = vrot.lane.b32.xlu0 %v4600, 4
      %v4680 = vpop.permute.xlu0 %4679
      %4681 = vrot.lane.b32.xlu0 %v4601, 4
      %v4682 = vpop.permute.xlu0 %4681
      %4683 = vrot.lane.b32.xlu0 %v4602, 4
      %v4684 = vpop.permute.xlu0 %4683
      %4685 = vrot.lane.b32.xlu0 %v4603, 4
      %v4686 = vpop.permute.xlu0 %4685
      %4687 = vrot.lane.b32.xlu0 %v4604, 4
      %v4688 = vpop.permute.xlu0 %4687
      %4689 = vrot.lane.b32.xlu0 %v4605, 4
      %v4690 = vpop.permute.xlu0 %4689
      %4691 = vrot.lane.b32.xlu0 %v4606, 4
      %v4692 = vpop.permute.xlu0 %4691
      %4693 = vrot.lane.b32.xlu0 %v4607, 4
      %v4694 = vpop.permute.xlu0 %4693
      %4695 = vrot.lane.b32.xlu0 %v4608, 4
      %v4696 = vpop.permute.xlu0 %4695
      %4697 = vrot.lane.b32.xlu0 %v4609, 4
      %v4698 = vpop.permute.xlu0 %4697
      %4699 = vrot.lane.b32.xlu0 %v4610, 4
      %v4700 = vpop.permute.xlu0 %4699
      %4701 = vrot.lane.b32.xlu0 %v4611, 4
      %v4702 = vpop.permute.xlu0 %4701
      %4703 = vrot.lane.b32.xlu0 %v4612, 4
      %v4704 = vpop.permute.xlu0 %4703
      %4705 = vrot.lane.b32.xlu0 %v4613, 4
      %v4706 = vpop.permute.xlu0 %4705
      %4707 = vrot.lane.b32.xlu0 %v4614, 4
      %v4708 = vpop.permute.xlu0 %4707
      %4709 = vrot.lane.b32.xlu0 %v4615, 4
      %v4710 = vpop.permute.xlu0 %4709
      %4711 = vrot.lane.b32.xlu0 %v4616, 4
      %v4712 = vpop.permute.xlu0 %4711
      %4745 = vst.msk [vmem:[%s3620] sm:$0xff] %vm2622, %v4650
      %4746 = vst.msk [vmem:[%s3620 + $0x8] sm:$0xff] %vm2622, %v4652
      %4747 = vst.msk [vmem:[%s3620 + $0x20] sm:$0xff] %vm2622, %v4654
      %4748 = vst.msk [vmem:[%s3620 + $0x28] sm:$0xff] %vm2622, %v4656
      %4749 = vst.msk [vmem:[%s3620 + $0x40] sm:$0xff] %vm2622, %v4658
      %4750 = vst.msk [vmem:[%s3620 + $0x48] sm:$0xff] %vm2622, %v4660
      %4751 = vst.msk [vmem:[%s3620 + $0x60] sm:$0xff] %vm2622, %v4662
      %4752 = vst.msk [vmem:[%s3620 + $0x68] sm:$0xff] %vm2622, %v4664
      %4753 = vst.msk [vmem:[%s3620 + $0x80] sm:$0xff] %vm2622, %v4666
      %4754 = vst.msk [vmem:[%s3620 + $0x88] sm:$0xff] %vm2622, %v4668
      %4755 = vst.msk [vmem:[%s3620 + $0xa0] sm:$0xff] %vm2622, %v4670
      %4756 = vst.msk [vmem:[%s3620 + $0xa8] sm:$0xff] %vm2622, %v4672
      %4757 = vst.msk [vmem:[%s3620 + $0xc0] sm:$0xff] %vm2622, %v4674
      %4758 = vst.msk [vmem:[%s3620 + $0xc8] sm:$0xff] %vm2622, %v4676
      %4759 = vst.msk [vmem:[%s3620 + $0xe0] sm:$0xff] %vm2622, %v4678
      %4760 = vst.msk [vmem:[%s3620 + $0xe8] sm:$0xff] %vm2622, %v4680
      %4761 = vst.msk [vmem:[%s3620 + $0x100] sm:$0xff] %vm2622, %v4682
      %4762 = vst.msk [vmem:[%s3620 + $0x108] sm:$0xff] %vm2622, %v4684
      %4763 = vst.msk [vmem:[%s3620 + $0x120] sm:$0xff] %vm2622, %v4686
      %4764 = vst.msk [vmem:[%s3620 + $0x128] sm:$0xff] %vm2622, %v4688
      %4765 = vst.msk [vmem:[%s3620 + $0x140] sm:$0xff] %vm2622, %v4690
      %4766 = vst.msk [vmem:[%s3620 + $0x148] sm:$0xff] %vm2622, %v4692
      %4767 = vst.msk [vmem:[%s3620 + $0x160] sm:$0xff] %vm2622, %v4694
      %4768 = vst.msk [vmem:[%s3620 + $0x168] sm:$0xff] %vm2622, %v4696
      %4769 = vst.msk [vmem:[%s3620 + $0x180] sm:$0xff] %vm2622, %v4698
      %4770 = vst.msk [vmem:[%s3620 + $0x188] sm:$0xff] %vm2622, %v4700
      %4771 = vst.msk [vmem:[%s3620 + $0x1a0] sm:$0xff] %vm2622, %v4702
      %4772 = vst.msk [vmem:[%s3620 + $0x1a8] sm:$0xff] %vm2622, %v4704
      %4773 = vst.msk [vmem:[%s3620 + $0x1c0] sm:$0xff] %vm2622, %v4706
      %4774 = vst.msk [vmem:[%s3620 + $0x1c8] sm:$0xff] %vm2622, %v4708
      %4775 = vst.msk [vmem:[%s3620 + $0x1e0] sm:$0xff] %vm2622, %v4710
      %4776 = vst.msk [vmem:[%s3620 + $0x1e8] sm:$0xff] %vm2622, %v4712
      %s4777 = smul.u32 16, %s21
      %p4778 = scmp.lt.s32.totalorder %s20, 1
      %s4779 = scalar_select %p4778, %s20, 1
      %p4780 = scmp.lt.s32.totalorder %s4777, 15
      %s4781 = scalar_select %p4780, %s4777, 15
      %s4782 = smul.addr %s4781, 4
      %s4783 = smul.addr %s4779, 64
      %s4784 = sadd.s32 %s4782, %s4783
      %s4785 = smul.addr %s4784, 8
      %s4786 = scalar_lea.vmem %s5, %s4785
      // Predicated region
      $region57: #{tpu_custom_call.1} parent=39 // pred_check
        %p4787 = pneg %p190
      $region58: #{tpu_custom_call.1} parent=39 // pred_check_branch
        %4789 = sbr.rel (%p4787) target = $region60
      $region59: #{tpu_custom_call.1} parent=39 // pred_region
        %s4790 = smul.u32 16, %s21
      $region60: #{tpu_custom_call.1} parent=39 // pred_fallthru
        _
    $region40: #{tpu_custom_call.1} parent=5 // pred_fallthru
      _
    %p4791 = scmp.le.s32.totalorder 2, %s11
    // Predicated region
    $region61: #{tpu_custom_call.1} parent=5 // pred_check
      %p4792 = pneg %p4791
    $region62: #{tpu_custom_call.1} parent=5 // pred_check_branch
      %4794 = sbr.rel (%p4792) target = $region64
    $region63: #{tpu_custom_call.1} parent=5 // pred_region
      %s4795 = ssub.s32 %s11, 2
      // Predicated region
      $region65: #{tpu_custom_call.1} parent=63 // pred_check
        %p4796 = pneg %p196
      $region66: #{tpu_custom_call.1} parent=63 // pred_check_branch
        %4798 = sbr.rel (%p4796) target = $region68
      $region67: #{tpu_custom_call.1} parent=63 // pred_region
        %s4799 = smul.u32 16, %s23
        %p4800 = scmp.lt.s32.totalorder %s22, 1
        %s4801 = scalar_select %p4800, %s22, 1
        %p4802 = scmp.lt.s32.totalorder %s4799, 15
        %s4803 = scalar_select %p4802, %s4799, 15
        %s4804 = smul.addr %s4803, 4
        %s4805 = smul.addr %s4801, 64
        %s4806 = sadd.s32 %s4804, %s4805
        %s4807 = smul.addr %s4806, 8
        %s4808 = scalar_lea.vmem %s5, %s4807
      $region68: #{tpu_custom_call.1} parent=63 // pred_fallthru
        _
    $region64: #{tpu_custom_call.1} parent=5 // pred_fallthru
      _
  $region6: #{tpu_custom_call.1} parent=0 // loop_footer
    %s15 = sadd.s32 1, %s11
  $region7: #{tpu_custom_call.1} parent=0 // loop_footer_branch
    %10 = sbr.rel target = $region3
  $region8: #{tpu_custom_call.1} parent=0 // loop_exit
    _

</llo_original>
